<compile_context>
chip_gen: v6e
topology: v6e:2x2x1
jax: 0.10.0
libtpu: 0.0.40
codegen_flags: <defaults>
</compile_context>

<pallas_src>
import jax
import jax.numpy as jnp
from jax import lax
from jax.experimental import pallas as pl
from jax.experimental.pallas import tpu as pltpu

# Problem sizes (small, consistent with the module: dim divisible by heads)
B = 2        # batch
N = 16       # sequence length
DIM = 64     # model dim
HEADS = 8    # number of heads
DH = DIM // HEADS           # per-head dim
SCALE = DIM ** (-0.5)       # NOTE: full-dim scaling, exactly as in the PyTorch module


def attention_kernel(x_ref, wqkv_ref, wout_ref, bout_ref, o_ref):
    b, n, d = x_ref.shape            # (B, N, D) block = whole batch
    h, dh = HEADS, DH
    m = b * n

    x = x_ref[...].reshape(m, d)                        # (B*N, D), bf16

    # ---- QKV projection, head-batched (one batched MXU contraction, f32 accumulate) ----
    xb = jnp.broadcast_to(x, (3 * h, m, d))             # (3H, B*N, D)
    qkv = lax.dot_general(
        xb, wqkv_ref[...],
        dimension_numbers=(((2,), (1,)), ((0,), (0,))),
        preferred_element_type=jnp.float32)             # (3H, B*N, DH) f32

    # Split q/k/v along the major batch axis -- free, no cross-lane extracts.
    q = qkv[0 * h:1 * h]                                # (H, B*N, DH), scale pre-folded
    k = qkv[1 * h:2 * h]
    v = qkv[2 * h:3 * h]

    # (H, B*N, DH) -> (H*B, N, DH): order-preserving reshape (N is a multiple of 8).
    q = q.reshape(h * b, n, dh)
    k = k.reshape(h * b, n, dh)
    v = v.reshape(h * b, n, dh)

    # ---- attention scores: contract last dims of both operands (no explicit k.T) ----
    scores = lax.dot_general(
        q, k, (((2,), (2,)), ((0,), (0,))),
        preferred_element_type=jnp.float32)             # (H*B, N, N) f32

    # numerically-stable softmax along the last axis, in f32
    scores = scores - jnp.max(scores, axis=-1, keepdims=True)
    e = jnp.exp(scores)
    attn = e * pl.reciprocal(jnp.sum(e, axis=-1, keepdims=True), approx=True)

    # ---- attn @ v (head-batched) ----
    out = lax.dot_general(
        attn.astype(jnp.bfloat16), v.astype(jnp.bfloat16),
        (((2,), (1,)), ((0,), (0,))),
        preferred_element_type=jnp.float32)             # (H*B, N, DH) f32

    # ---- output projection, head-batched: y = sum_h out_h @ W_out[h*DH:(h+1)*DH, :] ----
    out = out.reshape(h, m, dh).astype(jnp.bfloat16)    # (H, B*N, DH)
    y_h = lax.dot_general(
        out, wout_ref[...],
        (((2,), (1,)), ((0,), (0,))),
        preferred_element_type=jnp.float32)             # (H, B*N, D) f32
    y = jnp.sum(y_h, axis=0) + bout_ref[...]            # (B*N, D) + (1, D)

    o_ref[...] = y.reshape(b, n, d).astype(o_ref.dtype)


def _prepare_weights(w_qkv_t, w_out_t):
    """Host-side (plain JAX) weight rearrangement into head-batched bf16 tiles."""
    # w_qkv_t: (D, 3D), columns ordered (qkv, head, dh) as in the PyTorch to_qkv Linear.
    w3 = w_qkv_t.reshape(DIM, 3, HEADS, DH)
    w3 = jnp.transpose(w3, (1, 2, 0, 3)).reshape(3 * HEADS, DIM, DH)   # (3H, D, DH)
    # Fold the attention scale into the Q projection (exact: SCALE = 0.125 is a power of 2).
    scale = jnp.concatenate(
        [jnp.full((HEADS, 1, 1), SCALE, w3.dtype),
         jnp.ones((2 * HEADS, 1, 1), w3.dtype)], axis=0)
    w3 = w3 * scale
    w_out_h = w_out_t.reshape(HEADS, DH, DIM)                          # (H, DH, D)
    return w3.astype(jnp.bfloat16), w_out_h.astype(jnp.bfloat16)


def attention_pallas(x, w_qkv_t, w_out_t, b_out):
    b, n, d = x.shape
    w3, w_out_h = _prepare_weights(w_qkv_t, w_out_t)
    x_bf16 = x.astype(jnp.bfloat16)
    b_out_f32 = b_out.astype(jnp.float32)

    return pl.pallas_call(
        attention_kernel,
        out_shape=jax.ShapeDtypeStruct((b, n, d), jnp.float32),
        grid_spec=pltpu.PrefetchScalarGridSpec(
            num_scalar_prefetch=0,
            grid=(1,),                                   # single step: overhead-bound kernel
            in_specs=[
                pl.BlockSpec((b, n, d), lambda i: (0, 0, 0)),          # x, whole batch
                pl.BlockSpec((3 * HEADS, d, DH), lambda i: (0, 0, 0)), # qkv weight (head-batched)
                pl.BlockSpec((HEADS, DH, d), lambda i: (0, 0, 0)),     # out weight (head-batched)
                pl.BlockSpec((1, d), lambda i: (0, 0)),                # out bias
            ],
            out_specs=pl.BlockSpec((b, n, d), lambda i: (0, 0, 0)),
        ),
        compiler_params=pltpu.CompilerParams(
            dimension_semantics=("arbitrary",),
        ),
    )(x_bf16, w3, w_out_h, b_out_f32)


def attention_reference(x, w_qkv_t, w_out_t, b_out):
    # Pure-JAX f32 reference reproducing the PyTorch forward (mask=None path).
    b, n, d = x.shape
    qkv = x @ w_qkv_t                                    # (b, n, 3*d)
    qkv = qkv.reshape(b, n, 3, HEADS, DH)                # 'b n (qkv h d)'
    qkv = jnp.transpose(qkv, (2, 0, 3, 1, 4))            # (3, b, h, n, dh)
    q, k, v = qkv[0], qkv[1], qkv[2]
    dots = jnp.einsum('bhid,bhjd->bhij', q, k) * SCALE
    attn = jax.nn.softmax(dots, axis=-1)
    out = jnp.einsum('bhij,bhjd->bhid', attn, v)         # (b, h, n, dh)
    out = jnp.transpose(out, (0, 2, 1, 3)).reshape(b, n, d)
    return out @ w_out_t + b_out


if __name__ == "__main__":
    key = jax.random.PRNGKey(0)
    kx, kw1, kw2, kb = jax.random.split(key, 4)

    x = jax.random.normal(kx, (B, N, DIM), dtype=jnp.float32)

    # Deterministic parameter init (shapes implied by the nn.Linear definitions):
    # to_qkv: Linear(dim, 3*dim, bias=False) -> weight (3*dim, dim); we store its transpose.
    w_qkv_t = (jax.random.normal(kw1, (DIM, 3 * DIM), dtype=jnp.float32)
               * (1.0 / jnp.sqrt(DIM)))
    # to_out: Linear(dim, dim) -> weight (dim, dim) + bias (dim,); transpose stored.
    w_out_t = (jax.random.normal(kw2, (DIM, DIM), dtype=jnp.float32)
               * (1.0 / jnp.sqrt(DIM)))
    b_out = jax.random.normal(kb, (1, DIM), dtype=jnp.float32) * 0.01

    y = attention_pallas(x, w_qkv_t, w_out_t, b_out)
    y = jax.block_until_ready(y)

    y_ref = attention_reference(x, w_qkv_t, w_out_t, b_out[0])
    assert y.shape == (B, N, DIM)
    # Tolerance accounts for bf16 MXU operands (f32 accumulation) and the EUP
    # approximate reciprocal in the softmax; the reference is pure f32.
    assert jnp.allclose(y, y_ref, atol=5e-2, rtol=5e-2), "mismatch vs JAX reference"

    print("KERNEL_OK")
</pallas_src>

<mosaic_0001>
module attributes {stable_mosaic.version = 11 : i64} {
  func.func @attention_kernel(%arg0: i32, %arg1: memref<2x16x64xbf16, #tpu.memory_space<vmem>>, %arg2: memref<24x64x8xbf16, #tpu.memory_space<vmem>>, %arg3: memref<8x8x64xbf16, #tpu.memory_space<vmem>>, %arg4: memref<1x64xf32, #tpu.memory_space<vmem>>, %arg5: memref<2x16x64xf32, #tpu.memory_space<vmem>>) attributes {dimension_semantics = [#tpu.dimension_semantics<arbitrary>], iteration_bounds = array<i64: 1>, scalar_prefetch = 0 : i64, scratch_operands = 0 : i64, tpu.core_type = #tpu.core_type<tc>, window_params = [{pipeline_mode = #tpu.pipeline_mode<synchronous>, transform_indices = @transform_0, window_bounds = array<i64: 2, 16, 64>}, {pipeline_mode = #tpu.pipeline_mode<synchronous>, transform_indices = @transform_1, window_bounds = array<i64: 24, 64, 8>}, {pipeline_mode = #tpu.pipeline_mode<synchronous>, transform_indices = @transform_2, window_bounds = array<i64: 8, 8, 64>}, {pipeline_mode = #tpu.pipeline_mode<synchronous>, transform_indices = @transform_3, window_bounds = array<i64: 1, 64>}, {pipeline_mode = #tpu.pipeline_mode<synchronous>, transform_indices = @transform_4, window_bounds = array<i64: 2, 16, 64>}]} {
    %c0 = arith.constant 0 : index
    %c0_0 = arith.constant 0 : index
    %c0_1 = arith.constant 0 : index
    %0 = vector.load %arg1[%c0, %c0_0, %c0_1] : memref<2x16x64xbf16, #tpu.memory_space<vmem>>, vector<2x16x64xbf16>
    %1 = vector.shape_cast %0 : vector<2x16x64xbf16> to vector<32x64xbf16>
    %2 = vector.shape_cast %1 : vector<32x64xbf16> to vector<1x32x64xbf16>
    %3 = vector.broadcast %2 : vector<1x32x64xbf16> to vector<24x32x64xbf16>
    %c0_2 = arith.constant 0 : index
    %c0_3 = arith.constant 0 : index
    %c0_4 = arith.constant 0 : index
    %4 = vector.load %arg2[%c0_2, %c0_3, %c0_4] : memref<24x64x8xbf16, #tpu.memory_space<vmem>>, vector<24x64x8xbf16>
    %cst = arith.constant dense<0.000000e+00> : vector<24x32x8xf32>
    %5 = tpu.matmul %3, %4, %cst {dimension_numbers = #tpu.dot_dimension_numbers<[2], [1], [1], [2], [0, 0, 0, 1, 1, 2], [0], [0]>} : vector<24x32x64xbf16>, vector<24x64x8xbf16>, vector<24x32x8xf32> -> vector<24x32x8xf32>
    %6 = vector.extract_strided_slice %5 {offsets = [0, 0, 0], sizes = [8, 32, 8], strides = [1, 1, 1]} : vector<24x32x8xf32> to vector<8x32x8xf32>
    %7 = vector.extract_strided_slice %5 {offsets = [8, 0, 0], sizes = [8, 32, 8], strides = [1, 1, 1]} : vector<24x32x8xf32> to vector<8x32x8xf32>
    %8 = vector.extract_strided_slice %5 {offsets = [16, 0, 0], sizes = [8, 32, 8], strides = [1, 1, 1]} : vector<24x32x8xf32> to vector<8x32x8xf32>
    %9 = vector.shape_cast %6 : vector<8x32x8xf32> to vector<16x16x8xf32>
    %10 = vector.shape_cast %7 : vector<8x32x8xf32> to vector<16x16x8xf32>
    %11 = vector.shape_cast %8 : vector<8x32x8xf32> to vector<16x16x8xf32>
    %cst_5 = arith.constant dense<0.000000e+00> : vector<16x16x16xf32>
    %12 = tpu.matmul %9, %10, %cst_5 {dimension_numbers = #tpu.dot_dimension_numbers<[2], [2], [1], [1], [0, 0, 0, 1, 1, 1], [0], [0]>} : vector<16x16x8xf32>, vector<16x16x8xf32>, vector<16x16x16xf32> -> vector<16x16x16xf32>
    %cst_6 = arith.constant dense<0xFF800000> : vector<16x16xf32>
    %13 = vector.multi_reduction <maximumf>, %12, %cst_6 [2] : vector<16x16x16xf32> to vector<16x16xf32>
    %14 = vector.shape_cast %13 : vector<16x16xf32> to vector<16x16x1xf32>
    %15 = vector.broadcast %14 : vector<16x16x1xf32> to vector<16x16x16xf32>
    %16 = arith.subf %12, %15 : vector<16x16x16xf32>
    %17 = math.exp %16 : vector<16x16x16xf32>
    %cst_7 = arith.constant dense<0.000000e+00> : vector<16x16xf32>
    %18 = vector.multi_reduction <add>, %17, %cst_7 [2] : vector<16x16x16xf32> to vector<16x16xf32>
    %19 = vector.shape_cast %18 : vector<16x16xf32> to vector<16x16x1xf32>
    %20 = tpu.reciprocal %19 {approx = true} : vector<16x16x1xf32> -> vector<16x16x1xf32>
    %21 = vector.broadcast %20 : vector<16x16x1xf32> to vector<16x16x16xf32>
    %22 = arith.mulf %17, %21 : vector<16x16x16xf32>
    %23 = arith.truncf %22 : vector<16x16x16xf32> to vector<16x16x16xbf16>
    %24 = arith.truncf %11 : vector<16x16x8xf32> to vector<16x16x8xbf16>
    %cst_8 = arith.constant dense<0.000000e+00> : vector<16x16x8xf32>
    %25 = tpu.matmul %23, %24, %cst_8 {dimension_numbers = #tpu.dot_dimension_numbers<[2], [1], [1], [2], [0, 0, 0, 1, 1, 2], [0], [0]>} : vector<16x16x16xbf16>, vector<16x16x8xbf16>, vector<16x16x8xf32> -> vector<16x16x8xf32>
    %26 = vector.shape_cast %25 : vector<16x16x8xf32> to vector<8x32x8xf32>
    %27 = arith.truncf %26 : vector<8x32x8xf32> to vector<8x32x8xbf16>
    %c0_9 = arith.constant 0 : index
    %c0_10 = arith.constant 0 : index
    %c0_11 = arith.constant 0 : index
    %28 = vector.load %arg3[%c0_9, %c0_10, %c0_11] : memref<8x8x64xbf16, #tpu.memory_space<vmem>>, vector<8x8x64xbf16>
    %cst_12 = arith.constant dense<0.000000e+00> : vector<8x32x64xf32>
    %29 = tpu.matmul %27, %28, %cst_12 {dimension_numbers = #tpu.dot_dimension_numbers<[2], [1], [1], [2], [0, 0, 0, 1, 1, 2], [0], [0]>} : vector<8x32x8xbf16>, vector<8x8x64xbf16>, vector<8x32x64xf32> -> vector<8x32x64xf32>
    %cst_13 = arith.constant dense<0.000000e+00> : vector<32x64xf32>
    %30 = vector.multi_reduction <add>, %29, %cst_13 [0] : vector<8x32x64xf32> to vector<32x64xf32>
    %c0_14 = arith.constant 0 : index
    %c0_15 = arith.constant 0 : index
    %31 = vector.load %arg4[%c0_14, %c0_15] : memref<1x64xf32, #tpu.memory_space<vmem>>, vector<1x64xf32>
    %32 = vector.broadcast %31 : vector<1x64xf32> to vector<32x64xf32>
    %33 = arith.addf %30, %32 : vector<32x64xf32>
    %34 = vector.shape_cast %33 : vector<32x64xf32> to vector<2x16x64xf32>
    %c0_16 = arith.constant 0 : index
    %c0_17 = arith.constant 0 : index
    %c0_18 = arith.constant 0 : index
    %35 = vector.load %arg5[%c0_16, %c0_17, %c0_18] : memref<2x16x64xf32, #tpu.memory_space<vmem>>, vector<2x16x64xf32>
    tpu.vector_store %arg5[%c0_16, %c0_17, %c0_18], %34 {strides = array<i32>} : memref<2x16x64xf32, #tpu.memory_space<vmem>>, vector<2x16x64xf32>,
    return
  }
  func.func @transform_0(%arg0: i32) -> (i32, i32, i32) {
    %c0_i32 = arith.constant 0 : i32
    %c0_i32_0 = arith.constant 0 : i32
    %c0_i32_1 = arith.constant 0 : i32
    %c0_i32_2 = arith.constant 0 : i32
    return %c0_i32, %c0_i32_0, %c0_i32_1 : i32, i32, i32
  }
  func.func @transform_1(%arg0: i32) -> (i32, i32, i32) {
    %c0_i32 = arith.constant 0 : i32
    %c0_i32_0 = arith.constant 0 : i32
    %c0_i32_1 = arith.constant 0 : i32
    %c0_i32_2 = arith.constant 0 : i32
    return %c0_i32, %c0_i32_0, %c0_i32_1 : i32, i32, i32
  }
  func.func @transform_2(%arg0: i32) -> (i32, i32, i32) {
    %c0_i32 = arith.constant 0 : i32
    %c0_i32_0 = arith.constant 0 : i32
    %c0_i32_1 = arith.constant 0 : i32
    %c0_i32_2 = arith.constant 0 : i32
    return %c0_i32, %c0_i32_0, %c0_i32_1 : i32, i32, i32
  }
  func.func @transform_3(%arg0: i32) -> (i32, i32) {
    %c0_i32 = arith.constant 0 : i32
    %c0_i32_0 = arith.constant 0 : i32
    %c0_i32_1 = arith.constant 0 : i32
    return %c0_i32, %c0_i32_0 : i32, i32
  }
  func.func @transform_4(%arg0: i32) -> (i32, i32, i32) {
    %c0_i32 = arith.constant 0 : i32
    %c0_i32_0 = arith.constant 0 : i32
    %c0_i32_1 = arith.constant 0 : i32
    %c0_i32_2 = arith.constant 0 : i32
    return %c0_i32, %c0_i32_0, %c0_i32_1 : i32, i32, i32
  }
}

</mosaic_0001>

<llo_original>
// kernel: tpu_custom_call.1
$region0: #{tpu_custom_call.1}
  #allocation0 [shape = 'u32[]', space=smem, size = 0x4, offset = 0x4, fixed_abs, tag = 'smem constant byte address 0x4 - core index']
  #allocation1 [shape = 'u32[144,128]{1,0:T(1,128)}', space=vmem, size = 0x12000, scoped, tag = 'internal scratch']
  %s0 = inlined_call_operand.vmem [shape: bf16[2,16,64], index: 0, kind: input, shape index: {}]
  %s1 = inlined_call_operand.vmem [shape: bf16[24,64,8], index: 1, kind: input, shape index: {}]
  %s2 = inlined_call_operand.vmem [shape: bf16[8,8,64], index: 2, kind: input, shape index: {}]
  %s3 = inlined_call_operand.vmem [shape: f32[1,64], index: 3, kind: input, shape index: {}]
  %s4 = inlined_call_operand.hbm [shape: f32[2,16,64], index: 4, kind: output, shape index: {}]
  %s5 = sld [smem:[#allocation0]]
  $region26: #{tpu_custom_call.1} parent=0
    _
  %s7 = ssub.s32 1, %s5
  %s8 = scalar_select 0, %s7, %s5
  $region1: #{tpu_custom_call.1} parent=0
    #allocation2 [shape = 'u8[16384]{0}', space=vmem, size = 0x4000, scoped, tag = 'output window, operand 0, single buffered']
    #allocation3 [shape = 's32[1]{0}', space=sflag, size = 0x4, scoped, tag = 'scoped memory for tpu_custom_call.1']
    %9 = vsyncpa [#allocation3], 0
    // Predicated region
    $region2: #{tpu_custom_call.1} parent=1 // pred_check
      _
    $region3: #{tpu_custom_call.1} parent=1 // pred_check_branch
      %11 = sbr.rel (0) target = $region5
    $region4: #{tpu_custom_call.1} parent=1 // pred_region
      _
    $region5: #{tpu_custom_call.1} parent=1 // pred_fallthru
      _
    // Predicated region
    $region6: #{tpu_custom_call.1} parent=1 // pred_check
      _
    $region7: #{tpu_custom_call.1} parent=1 // pred_check_branch
      %13 = sbr.rel (0) target = $region9
    $region8: #{tpu_custom_call.1} parent=1 // pred_region
      _
    $region9: #{tpu_custom_call.1} parent=1 // pred_fallthru
      _
    // Predicated region
    $region10: #{tpu_custom_call.1} parent=1 // pred_check
      _
    $region11: #{tpu_custom_call.1} parent=1 // pred_check_branch
      %15 = sbr.rel (0) target = $region13
    $region12: #{tpu_custom_call.1} parent=1 // pred_region
      _
    $region13: #{tpu_custom_call.1} parent=1 // pred_fallthru
      _
    // Predicated region
    $region14: #{tpu_custom_call.1} parent=1 // pred_check
      _
    $region15: #{tpu_custom_call.1} parent=1 // pred_check_branch
      %17 = sbr.rel (0) target = $region17
    $region16: #{tpu_custom_call.1} parent=1 // pred_region
      _
    $region17: #{tpu_custom_call.1} parent=1 // pred_fallthru
      _
    %v19 = vld [vmem:[%s0] sm:$0xf]
    %v20 = vld [vmem:[%s0 + $0x4] sm:$0xf]
    %v21 = vld [vmem:[%s0 + $0x8] sm:$0xf]
    %v22 = vld [vmem:[%s0 + $0xc] sm:$0xf]
    %v23 = vld [vmem:[%s1] sm:$0xf]
    %v24 = vld [vmem:[%s1 + $0x4] sm:$0xf]
    %v25 = vld [vmem:[%s1 + $0x8] sm:$0xf]
    %v26 = vld [vmem:[%s1 + $0xc] sm:$0xf]
    %v27 = vld [vmem:[%s1 + $0x10] sm:$0xf]
    %v28 = vld [vmem:[%s1 + $0x14] sm:$0xf]
    %v29 = vld [vmem:[%s1 + $0x18] sm:$0xf]
    %v30 = vld [vmem:[%s1 + $0x1c] sm:$0xf]
    %v31 = vld [vmem:[%s1 + $0x20] sm:$0xf]
    %v32 = vld [vmem:[%s1 + $0x24] sm:$0xf]
    %v33 = vld [vmem:[%s1 + $0x28] sm:$0xf]
    %v34 = vld [vmem:[%s1 + $0x2c] sm:$0xf]
    %v35 = vld [vmem:[%s1 + $0x30] sm:$0xf]
    %v36 = vld [vmem:[%s1 + $0x34] sm:$0xf]
    %v37 = vld [vmem:[%s1 + $0x38] sm:$0xf]
    %v38 = vld [vmem:[%s1 + $0x3c] sm:$0xf]
    %v39 = vld [vmem:[%s1 + $0x40] sm:$0xf]
    %v40 = vld [vmem:[%s1 + $0x44] sm:$0xf]
    %v41 = vld [vmem:[%s1 + $0x48] sm:$0xf]
    %v42 = vld [vmem:[%s1 + $0x4c] sm:$0xf]
    %v43 = vld [vmem:[%s1 + $0x50] sm:$0xf]
    %v44 = vld [vmem:[%s1 + $0x54] sm:$0xf]
    %v45 = vld [vmem:[%s1 + $0x58] sm:$0xf]
    %v46 = vld [vmem:[%s1 + $0x5c] sm:$0xf]
    %v47 = vld [vmem:[%s1 + $0x60] sm:$0xf]
    %v48 = vld [vmem:[%s1 + $0x64] sm:$0xf]
    %v49 = vld [vmem:[%s1 + $0x68] sm:$0xf]
    %v50 = vld [vmem:[%s1 + $0x6c] sm:$0xf]
    %v51 = vld [vmem:[%s1 + $0x70] sm:$0xf]
    %v52 = vld [vmem:[%s1 + $0x74] sm:$0xf]
    %v53 = vld [vmem:[%s1 + $0x78] sm:$0xf]
    %v54 = vld [vmem:[%s1 + $0x7c] sm:$0xf]
    %v55 = vld [vmem:[%s1 + $0x80] sm:$0xf]
    %v56 = vld [vmem:[%s1 + $0x84] sm:$0xf]
    %v57 = vld [vmem:[%s1 + $0x88] sm:$0xf]
    %v58 = vld [vmem:[%s1 + $0x8c] sm:$0xf]
    %v59 = vld [vmem:[%s1 + $0x90] sm:$0xf]
    %v60 = vld [vmem:[%s1 + $0x94] sm:$0xf]
    %v61 = vld [vmem:[%s1 + $0x98] sm:$0xf]
    %v62 = vld [vmem:[%s1 + $0x9c] sm:$0xf]
    %v63 = vld [vmem:[%s1 + $0xa0] sm:$0xf]
    %v64 = vld [vmem:[%s1 + $0xa4] sm:$0xf]
    %v65 = vld [vmem:[%s1 + $0xa8] sm:$0xf]
    %v66 = vld [vmem:[%s1 + $0xac] sm:$0xf]
    %v67 = vld [vmem:[%s1 + $0xb0] sm:$0xf]
    %v68 = vld [vmem:[%s1 + $0xb4] sm:$0xf]
    %v69 = vld [vmem:[%s1 + $0xb8] sm:$0xf]
    %v70 = vld [vmem:[%s1 + $0xbc] sm:$0xf]
    %v71 = vld [vmem:[%s1 + $0xc0] sm:$0xf]
    %v72 = vld [vmem:[%s1 + $0xc4] sm:$0xf]
    %v73 = vld [vmem:[%s1 + $0xc8] sm:$0xf]
    %v74 = vld [vmem:[%s1 + $0xcc] sm:$0xf]
    %v75 = vld [vmem:[%s1 + $0xd0] sm:$0xf]
    %v76 = vld [vmem:[%s1 + $0xd4] sm:$0xf]
    %v77 = vld [vmem:[%s1 + $0xd8] sm:$0xf]
    %v78 = vld [vmem:[%s1 + $0xdc] sm:$0xf]
    %v79 = vld [vmem:[%s1 + $0xe0] sm:$0xf]
    %v80 = vld [vmem:[%s1 + $0xe4] sm:$0xf]
    %v81 = vld [vmem:[%s1 + $0xe8] sm:$0xf]
    %v82 = vld [vmem:[%s1 + $0xec] sm:$0xf]
    %v83 = vld [vmem:[%s1 + $0xf0] sm:$0xf]
    %v84 = vld [vmem:[%s1 + $0xf4] sm:$0xf]
    %v85 = vld [vmem:[%s1 + $0xf8] sm:$0xf]
    %v86 = vld [vmem:[%s1 + $0xfc] sm:$0xf]
    %v87 = vld [vmem:[%s1 + $0x100] sm:$0xf]
    %v88 = vld [vmem:[%s1 + $0x104] sm:$0xf]
    %v89 = vld [vmem:[%s1 + $0x108] sm:$0xf]
    %v90 = vld [vmem:[%s1 + $0x10c] sm:$0xf]
    %v91 = vld [vmem:[%s1 + $0x110] sm:$0xf]
    %v92 = vld [vmem:[%s1 + $0x114] sm:$0xf]
    %v93 = vld [vmem:[%s1 + $0x118] sm:$0xf]
    %v94 = vld [vmem:[%s1 + $0x11c] sm:$0xf]
    %v95 = vld [vmem:[%s1 + $0x120] sm:$0xf]
    %v96 = vld [vmem:[%s1 + $0x124] sm:$0xf]
    %v97 = vld [vmem:[%s1 + $0x128] sm:$0xf]
    %v98 = vld [vmem:[%s1 + $0x12c] sm:$0xf]
    %v99 = vld [vmem:[%s1 + $0x130] sm:$0xf]
    %v100 = vld [vmem:[%s1 + $0x134] sm:$0xf]
    %v101 = vld [vmem:[%s1 + $0x138] sm:$0xf]
    %v102 = vld [vmem:[%s1 + $0x13c] sm:$0xf]
    %v103 = vld [vmem:[%s1 + $0x140] sm:$0xf]
    %v104 = vld [vmem:[%s1 + $0x144] sm:$0xf]
    %v105 = vld [vmem:[%s1 + $0x148] sm:$0xf]
    %v106 = vld [vmem:[%s1 + $0x14c] sm:$0xf]
    %v107 = vld [vmem:[%s1 + $0x150] sm:$0xf]
    %v108 = vld [vmem:[%s1 + $0x154] sm:$0xf]
    %v109 = vld [vmem:[%s1 + $0x158] sm:$0xf]
    %v110 = vld [vmem:[%s1 + $0x15c] sm:$0xf]
    %v111 = vld [vmem:[%s1 + $0x160] sm:$0xf]
    %v112 = vld [vmem:[%s1 + $0x164] sm:$0xf]
    %v113 = vld [vmem:[%s1 + $0x168] sm:$0xf]
    %v114 = vld [vmem:[%s1 + $0x16c] sm:$0xf]
    %v115 = vld [vmem:[%s1 + $0x170] sm:$0xf]
    %v116 = vld [vmem:[%s1 + $0x174] sm:$0xf]
    %v117 = vld [vmem:[%s1 + $0x178] sm:$0xf]
    %v118 = vld [vmem:[%s1 + $0x17c] sm:$0xf]
    %v119 = vld [vmem:[%s1 + $0x180] sm:$0xf]
    %v120 = vld [vmem:[%s1 + $0x184] sm:$0xf]
    %v121 = vld [vmem:[%s1 + $0x188] sm:$0xf]
    %v122 = vld [vmem:[%s1 + $0x18c] sm:$0xf]
    %v123 = vld [vmem:[%s1 + $0x190] sm:$0xf]
    %v124 = vld [vmem:[%s1 + $0x194] sm:$0xf]
    %v125 = vld [vmem:[%s1 + $0x198] sm:$0xf]
    %v126 = vld [vmem:[%s1 + $0x19c] sm:$0xf]
    %v127 = vld [vmem:[%s1 + $0x1a0] sm:$0xf]
    %v128 = vld [vmem:[%s1 + $0x1a4] sm:$0xf]
    %v129 = vld [vmem:[%s1 + $0x1a8] sm:$0xf]
    %v130 = vld [vmem:[%s1 + $0x1ac] sm:$0xf]
    %v131 = vld [vmem:[%s1 + $0x1b0] sm:$0xf]
    %v132 = vld [vmem:[%s1 + $0x1b4] sm:$0xf]
    %v133 = vld [vmem:[%s1 + $0x1b8] sm:$0xf]
    %v134 = vld [vmem:[%s1 + $0x1bc] sm:$0xf]
    %v135 = vld [vmem:[%s1 + $0x1c0] sm:$0xf]
    %v136 = vld [vmem:[%s1 + $0x1c4] sm:$0xf]
    %v137 = vld [vmem:[%s1 + $0x1c8] sm:$0xf]
    %v138 = vld [vmem:[%s1 + $0x1cc] sm:$0xf]
    %v139 = vld [vmem:[%s1 + $0x1d0] sm:$0xf]
    %v140 = vld [vmem:[%s1 + $0x1d4] sm:$0xf]
    %v141 = vld [vmem:[%s1 + $0x1d8] sm:$0xf]
    %v142 = vld [vmem:[%s1 + $0x1dc] sm:$0xf]
    %v143 = vld [vmem:[%s1 + $0x1e0] sm:$0xf]
    %v144 = vld [vmem:[%s1 + $0x1e4] sm:$0xf]
    %v145 = vld [vmem:[%s1 + $0x1e8] sm:$0xf]
    %v146 = vld [vmem:[%s1 + $0x1ec] sm:$0xf]
    %v147 = vld [vmem:[%s1 + $0x1f0] sm:$0xf]
    %v148 = vld [vmem:[%s1 + $0x1f4] sm:$0xf]
    %v149 = vld [vmem:[%s1 + $0x1f8] sm:$0xf]
    %v150 = vld [vmem:[%s1 + $0x1fc] sm:$0xf]
    %v151 = vld [vmem:[%s1 + $0x200] sm:$0xf]
    %v152 = vld [vmem:[%s1 + $0x204] sm:$0xf]
    %v153 = vld [vmem:[%s1 + $0x208] sm:$0xf]
    %v154 = vld [vmem:[%s1 + $0x20c] sm:$0xf]
    %v155 = vld [vmem:[%s1 + $0x210] sm:$0xf]
    %v156 = vld [vmem:[%s1 + $0x214] sm:$0xf]
    %v157 = vld [vmem:[%s1 + $0x218] sm:$0xf]
    %v158 = vld [vmem:[%s1 + $0x21c] sm:$0xf]
    %v159 = vld [vmem:[%s1 + $0x220] sm:$0xf]
    %v160 = vld [vmem:[%s1 + $0x224] sm:$0xf]
    %v161 = vld [vmem:[%s1 + $0x228] sm:$0xf]
    %v162 = vld [vmem:[%s1 + $0x22c] sm:$0xf]
    %v163 = vld [vmem:[%s1 + $0x230] sm:$0xf]
    %v164 = vld [vmem:[%s1 + $0x234] sm:$0xf]
    %v165 = vld [vmem:[%s1 + $0x238] sm:$0xf]
    %v166 = vld [vmem:[%s1 + $0x23c] sm:$0xf]
    %v167 = vld [vmem:[%s1 + $0x240] sm:$0xf]
    %v168 = vld [vmem:[%s1 + $0x244] sm:$0xf]
    %v169 = vld [vmem:[%s1 + $0x248] sm:$0xf]
    %v170 = vld [vmem:[%s1 + $0x24c] sm:$0xf]
    %v171 = vld [vmem:[%s1 + $0x250] sm:$0xf]
    %v172 = vld [vmem:[%s1 + $0x254] sm:$0xf]
    %v173 = vld [vmem:[%s1 + $0x258] sm:$0xf]
    %v174 = vld [vmem:[%s1 + $0x25c] sm:$0xf]
    %v175 = vld [vmem:[%s1 + $0x260] sm:$0xf]
    %v176 = vld [vmem:[%s1 + $0x264] sm:$0xf]
    %v177 = vld [vmem:[%s1 + $0x268] sm:$0xf]
    %v178 = vld [vmem:[%s1 + $0x26c] sm:$0xf]
    %v179 = vld [vmem:[%s1 + $0x270] sm:$0xf]
    %v180 = vld [vmem:[%s1 + $0x274] sm:$0xf]
    %v181 = vld [vmem:[%s1 + $0x278] sm:$0xf]
    %v182 = vld [vmem:[%s1 + $0x27c] sm:$0xf]
    %v183 = vld [vmem:[%s1 + $0x280] sm:$0xf]
    %v184 = vld [vmem:[%s1 + $0x284] sm:$0xf]
    %v185 = vld [vmem:[%s1 + $0x288] sm:$0xf]
    %v186 = vld [vmem:[%s1 + $0x28c] sm:$0xf]
    %v187 = vld [vmem:[%s1 + $0x290] sm:$0xf]
    %v188 = vld [vmem:[%s1 + $0x294] sm:$0xf]
    %v189 = vld [vmem:[%s1 + $0x298] sm:$0xf]
    %v190 = vld [vmem:[%s1 + $0x29c] sm:$0xf]
    %v191 = vld [vmem:[%s1 + $0x2a0] sm:$0xf]
    %v192 = vld [vmem:[%s1 + $0x2a4] sm:$0xf]
    %v193 = vld [vmem:[%s1 + $0x2a8] sm:$0xf]
    %v194 = vld [vmem:[%s1 + $0x2ac] sm:$0xf]
    %v195 = vld [vmem:[%s1 + $0x2b0] sm:$0xf]
    %v196 = vld [vmem:[%s1 + $0x2b4] sm:$0xf]
    %v197 = vld [vmem:[%s1 + $0x2b8] sm:$0xf]
    %v198 = vld [vmem:[%s1 + $0x2bc] sm:$0xf]
    %v199 = vld [vmem:[%s1 + $0x2c0] sm:$0xf]
    %v200 = vld [vmem:[%s1 + $0x2c4] sm:$0xf]
    %v201 = vld [vmem:[%s1 + $0x2c8] sm:$0xf]
    %v202 = vld [vmem:[%s1 + $0x2cc] sm:$0xf]
    %v203 = vld [vmem:[%s1 + $0x2d0] sm:$0xf]
    %v204 = vld [vmem:[%s1 + $0x2d4] sm:$0xf]
    %v205 = vld [vmem:[%s1 + $0x2d8] sm:$0xf]
    %v206 = vld [vmem:[%s1 + $0x2dc] sm:$0xf]
    %v207 = vld [vmem:[%s1 + $0x2e0] sm:$0xf]
    %v208 = vld [vmem:[%s1 + $0x2e4] sm:$0xf]
    %v209 = vld [vmem:[%s1 + $0x2e8] sm:$0xf]
    %v210 = vld [vmem:[%s1 + $0x2ec] sm:$0xf]
    %v211 = vld [vmem:[%s1 + $0x2f0] sm:$0xf]
    %v212 = vld [vmem:[%s1 + $0x2f4] sm:$0xf]
    %v213 = vld [vmem:[%s1 + $0x2f8] sm:$0xf]
    %v214 = vld [vmem:[%s1 + $0x2fc] sm:$0xf]
    %v219 = vunpack.c.l.b16 %v19
    %v220 = vunpack.c.l.b16 %v20
    %v221 = vunpack.c.l.b16 %v21
    %v222 = vunpack.c.l.b16 %v22
    %v223 = vpack.c.b16 %v220, %v219
    %v224 = vpack.c.b16 %v222, %v221
    %v233 = vunpack.c.l.b16 %v23
    %v234 = vunpack.c.l.b16 %v24
    %v235 = vunpack.c.l.b16 %v25
    %v236 = vunpack.c.l.b16 %v26
    %v237 = vunpack.c.l.b16 %v27
    %v238 = vunpack.c.l.b16 %v28
    %v239 = vunpack.c.l.b16 %v29
    %v240 = vunpack.c.l.b16 %v30
    %v241 = vpack.c.b16 %v234, %v233
    %v242 = vpack.c.b16 %v236, %v235
    %v243 = vpack.c.b16 %v238, %v237
    %v244 = vpack.c.b16 %v240, %v239
    %vm249 = vcmask 523264
    %v251 = vsel %vm249, %v223, 0
    %v254 = vsel %vm249, %v224, 0
    %256 = vmatprep.subr.bf16.mxu0 0
    %257 = vmatpush1.bf16.msra.mxu0 0
    %258 = vmatprep.subr.bf16.mxu0 0
    %259 = vmatpush1.bf16.msra.mxu0 0
    %260 = vmatprep.subr.bf16.mxu0 0
    %261 = vmatpush1.bf16.msra.mxu0 0
    %262 = vmatprep.subr.bf16.mxu0 0
    %263 = vmatpush1.bf16.msra.mxu0 0
    %264 = vmatprep.subr.bf16.mxu0 0
    %265 = vmatpush1.bf16.msra.mxu0 %v244
    %266 = vmatprep.subr.bf16.mxu0 0
    %267 = vmatpush1.bf16.msra.mxu0 %v243
    %268 = vmatprep.subr.bf16.mxu0 0
    %269 = vmatpush1.bf16.msra.mxu0 %v242
    %270 = vmatprep.subr.bf16.mxu0 0
    %271 = vmatpush1.bf16.msra.mxu0 %v241
    %272 = vmatprep.subr.bf16.mxu0 0
    %273 = vmatpush2.bf16.msra.mxu0 0
    %274 = vmatprep.subr.bf16.mxu0 0
    %275 = vmatpush2.bf16.msra.mxu0 0
    %276 = vmatprep.subr.bf16.mxu0 0
    %277 = vmatpush2.bf16.msra.mxu0 0
    %278 = vmatprep.subr.bf16.mxu0 0
    %279 = vmatpush2.bf16.msra.mxu0 0
    %280 = vmatprep.subr.bf16.mxu0 0
    %281 = vmatpush2.bf16.msra.mxu0 0
    %282 = vmatprep.subr.bf16.mxu0 0
    %283 = vmatpush2.bf16.msra.mxu0 0
    %284 = vmatprep.subr.bf16.mxu0 0
    %285 = vmatpush2.bf16.msra.mxu0 0
    %286 = vmatprep.subr.bf16.mxu0 0
    %287 = vmatpush2.bf16.msra.mxu0 0
    %288 = vmatprep.mubr.bf16.mxu0 0
    %289 = vmatmul.mubr.bf16.gmra.mxu0 %v251
    %v290 = vpop.f32.mrf.mxu0
    %v291 = vadd.f32 0.0, %v290
    %v292 = vpop.f32.mrf.mxu0
    %v293 = vpop.f32.mrf.mxu0
    %v294 = vadd.f32 0.0, %v293
    %v295 = vpop.f32.mrf.mxu0
    %296 = vmatprep.mubr.bf16.mxu0 0
    %297 = vmatmul.mubr.bf16.gmra.mxu0 %v254
    %v298 = vpop.f32.mrf.mxu0
    %v299 = vadd.f32 0.0, %v298
    %v300 = vpop.f32.mrf.mxu0
    %v301 = vpop.f32.mrf.mxu0
    %v302 = vadd.f32 0.0, %v301
    %v303 = vpop.f32.mrf.mxu0
    %304 = vdwg.mxu0
    %v313 = vunpack.c.l.b16 %v31
    %v314 = vunpack.c.l.b16 %v32
    %v315 = vunpack.c.l.b16 %v33
    %v316 = vunpack.c.l.b16 %v34
    %v317 = vunpack.c.l.b16 %v35
    %v318 = vunpack.c.l.b16 %v36
    %v319 = vunpack.c.l.b16 %v37
    %v320 = vunpack.c.l.b16 %v38
    %v321 = vpack.c.b16 %v314, %v313
    %v322 = vpack.c.b16 %v316, %v315
    %v323 = vpack.c.b16 %v318, %v317
    %v324 = vpack.c.b16 %v320, %v319
    %329 = vmatprep.subr.bf16.mxu0 0
    %330 = vmatpush1.bf16.msra.mxu0 0
    %331 = vmatprep.subr.bf16.mxu0 0
    %332 = vmatpush1.bf16.msra.mxu0 0
    %333 = vmatprep.subr.bf16.mxu0 0
    %334 = vmatpush1.bf16.msra.mxu0 0
    %335 = vmatprep.subr.bf16.mxu0 0
    %336 = vmatpush1.bf16.msra.mxu0 0
    %337 = vmatprep.subr.bf16.mxu0 0
    %338 = vmatpush1.bf16.msra.mxu0 %v324
    %339 = vmatprep.subr.bf16.mxu0 0
    %340 = vmatpush1.bf16.msra.mxu0 %v323
    %341 = vmatprep.subr.bf16.mxu0 0
    %342 = vmatpush1.bf16.msra.mxu0 %v322
    %343 = vmatprep.subr.bf16.mxu0 0
    %344 = vmatpush1.bf16.msra.mxu0 %v321
    %345 = vmatprep.subr.bf16.mxu0 0
    %346 = vmatpush2.bf16.msra.mxu0 0
    %347 = vmatprep.subr.bf16.mxu0 0
    %348 = vmatpush2.bf16.msra.mxu0 0
    %349 = vmatprep.subr.bf16.mxu0 0
    %350 = vmatpush2.bf16.msra.mxu0 0
    %351 = vmatprep.subr.bf16.mxu0 0
    %352 = vmatpush2.bf16.msra.mxu0 0
    %353 = vmatprep.subr.bf16.mxu0 0
    %354 = vmatpush2.bf16.msra.mxu0 0
    %355 = vmatprep.subr.bf16.mxu0 0
    %356 = vmatpush2.bf16.msra.mxu0 0
    %357 = vmatprep.subr.bf16.mxu0 0
    %358 = vmatpush2.bf16.msra.mxu0 0
    %359 = vmatprep.subr.bf16.mxu0 0
    %360 = vmatpush2.bf16.msra.mxu0 0
    %361 = vmatprep.mubr.bf16.mxu0 0
    %362 = vmatmul.mubr.bf16.gmra.mxu0 %v251
    %v363 = vpop.f32.mrf.mxu0
    %v364 = vadd.f32 0.0, %v363
    %v365 = vpop.f32.mrf.mxu0
    %v366 = vpop.f32.mrf.mxu0
    %v367 = vadd.f32 0.0, %v366
    %v368 = vpop.f32.mrf.mxu0
    %369 = vmatprep.mubr.bf16.mxu0 0
    %370 = vmatmul.mubr.bf16.gmra.mxu0 %v254
    %v371 = vpop.f32.mrf.mxu0
    %v372 = vadd.f32 0.0, %v371
    %v373 = vpop.f32.mrf.mxu0
    %v374 = vpop.f32.mrf.mxu0
    %v375 = vadd.f32 0.0, %v374
    %v376 = vpop.f32.mrf.mxu0
    %377 = vdwg.mxu0
    %v386 = vunpack.c.l.b16 %v39
    %v387 = vunpack.c.l.b16 %v40
    %v388 = vunpack.c.l.b16 %v41
    %v389 = vunpack.c.l.b16 %v42
    %v390 = vunpack.c.l.b16 %v43
    %v391 = vunpack.c.l.b16 %v44
    %v392 = vunpack.c.l.b16 %v45
    %v393 = vunpack.c.l.b16 %v46
    %v394 = vpack.c.b16 %v387, %v386
    %v395 = vpack.c.b16 %v389, %v388
    %v396 = vpack.c.b16 %v391, %v390
    %v397 = vpack.c.b16 %v393, %v392
    %402 = vmatprep.subr.bf16.mxu0 0
    %403 = vmatpush1.bf16.msra.mxu0 0
    %404 = vmatprep.subr.bf16.mxu0 0
    %405 = vmatpush1.bf16.msra.mxu0 0
    %406 = vmatprep.subr.bf16.mxu0 0
    %407 = vmatpush1.bf16.msra.mxu0 0
    %408 = vmatprep.subr.bf16.mxu0 0
    %409 = vmatpush1.bf16.msra.mxu0 0
    %410 = vmatprep.subr.bf16.mxu0 0
    %411 = vmatpush1.bf16.msra.mxu0 %v397
    %412 = vmatprep.subr.bf16.mxu0 0
    %413 = vmatpush1.bf16.msra.mxu0 %v396
    %414 = vmatprep.subr.bf16.mxu0 0
    %415 = vmatpush1.bf16.msra.mxu0 %v395
    %416 = vmatprep.subr.bf16.mxu0 0
    %417 = vmatpush1.bf16.msra.mxu0 %v394
    %418 = vmatprep.subr.bf16.mxu0 0
    %419 = vmatpush2.bf16.msra.mxu0 0
    %420 = vmatprep.subr.bf16.mxu0 0
    %421 = vmatpush2.bf16.msra.mxu0 0
    %422 = vmatprep.subr.bf16.mxu0 0
    %423 = vmatpush2.bf16.msra.mxu0 0
    %424 = vmatprep.subr.bf16.mxu0 0
    %425 = vmatpush2.bf16.msra.mxu0 0
    %426 = vmatprep.subr.bf16.mxu0 0
    %427 = vmatpush2.bf16.msra.mxu0 0
    %428 = vmatprep.subr.bf16.mxu0 0
    %429 = vmatpush2.bf16.msra.mxu0 0
    %430 = vmatprep.subr.bf16.mxu0 0
    %431 = vmatpush2.bf16.msra.mxu0 0
    %432 = vmatprep.subr.bf16.mxu0 0
    %433 = vmatpush2.bf16.msra.mxu0 0
    %434 = vmatprep.mubr.bf16.mxu0 0
    %435 = vmatmul.mubr.bf16.gmra.mxu0 %v251
    %v436 = vpop.f32.mrf.mxu0
    %v437 = vadd.f32 0.0, %v436
    %v438 = vpop.f32.mrf.mxu0
    %v439 = vpop.f32.mrf.mxu0
    %v440 = vadd.f32 0.0, %v439
    %v441 = vpop.f32.mrf.mxu0
    %442 = vmatprep.mubr.bf16.mxu0 0
    %443 = vmatmul.mubr.bf16.gmra.mxu0 %v254
    %v444 = vpop.f32.mrf.mxu0
    %v445 = vadd.f32 0.0, %v444
    %v446 = vpop.f32.mrf.mxu0
    %v447 = vpop.f32.mrf.mxu0
    %v448 = vadd.f32 0.0, %v447
    %v449 = vpop.f32.mrf.mxu0
    %450 = vdwg.mxu0
    %v459 = vunpack.c.l.b16 %v47
    %v460 = vunpack.c.l.b16 %v48
    %v461 = vunpack.c.l.b16 %v49
    %v462 = vunpack.c.l.b16 %v50
    %v463 = vunpack.c.l.b16 %v51
    %v464 = vunpack.c.l.b16 %v52
    %v465 = vunpack.c.l.b16 %v53
    %v466 = vunpack.c.l.b16 %v54
    %v467 = vpack.c.b16 %v460, %v459
    %v468 = vpack.c.b16 %v462, %v461
    %v469 = vpack.c.b16 %v464, %v463
    %v470 = vpack.c.b16 %v466, %v465
    %475 = vmatprep.subr.bf16.mxu0 0
    %476 = vmatpush1.bf16.msra.mxu0 0
    %477 = vmatprep.subr.bf16.mxu0 0
    %478 = vmatpush1.bf16.msra.mxu0 0
    %479 = vmatprep.subr.bf16.mxu0 0
    %480 = vmatpush1.bf16.msra.mxu0 0
    %481 = vmatprep.subr.bf16.mxu0 0
    %482 = vmatpush1.bf16.msra.mxu0 0
    %483 = vmatprep.subr.bf16.mxu0 0
    %484 = vmatpush1.bf16.msra.mxu0 %v470
    %485 = vmatprep.subr.bf16.mxu0 0
    %486 = vmatpush1.bf16.msra.mxu0 %v469
    %487 = vmatprep.subr.bf16.mxu0 0
    %488 = vmatpush1.bf16.msra.mxu0 %v468
    %489 = vmatprep.subr.bf16.mxu0 0
    %490 = vmatpush1.bf16.msra.mxu0 %v467
    %491 = vmatprep.subr.bf16.mxu0 0
    %492 = vmatpush2.bf16.msra.mxu0 0
    %493 = vmatprep.subr.bf16.mxu0 0
    %494 = vmatpush2.bf16.msra.mxu0 0
    %495 = vmatprep.subr.bf16.mxu0 0
    %496 = vmatpush2.bf16.msra.mxu0 0
    %497 = vmatprep.subr.bf16.mxu0 0
    %498 = vmatpush2.bf16.msra.mxu0 0
    %499 = vmatprep.subr.bf16.mxu0 0
    %500 = vmatpush2.bf16.msra.mxu0 0
    %501 = vmatprep.subr.bf16.mxu0 0
    %502 = vmatpush2.bf16.msra.mxu0 0
    %503 = vmatprep.subr.bf16.mxu0 0
    %504 = vmatpush2.bf16.msra.mxu0 0
    %505 = vmatprep.subr.bf16.mxu0 0
    %506 = vmatpush2.bf16.msra.mxu0 0
    %507 = vmatprep.mubr.bf16.mxu0 0
    %508 = vmatmul.mubr.bf16.gmra.mxu0 %v251
    %v509 = vpop.f32.mrf.mxu0
    %v510 = vadd.f32 0.0, %v509
    %v511 = vpop.f32.mrf.mxu0
    %v512 = vpop.f32.mrf.mxu0
    %v513 = vadd.f32 0.0, %v512
    %v514 = vpop.f32.mrf.mxu0
    %515 = vmatprep.mubr.bf16.mxu0 0
    %516 = vmatmul.mubr.bf16.gmra.mxu0 %v254
    %v517 = vpop.f32.mrf.mxu0
    %v518 = vadd.f32 0.0, %v517
    %v519 = vpop.f32.mrf.mxu0
    %v520 = vpop.f32.mrf.mxu0
    %v521 = vadd.f32 0.0, %v520
    %v522 = vpop.f32.mrf.mxu0
    %523 = vdwg.mxu0
    %v532 = vunpack.c.l.b16 %v55
    %v533 = vunpack.c.l.b16 %v56
    %v534 = vunpack.c.l.b16 %v57
    %v535 = vunpack.c.l.b16 %v58
    %v536 = vunpack.c.l.b16 %v59
    %v537 = vunpack.c.l.b16 %v60
    %v538 = vunpack.c.l.b16 %v61
    %v539 = vunpack.c.l.b16 %v62
    %v540 = vpack.c.b16 %v533, %v532
    %v541 = vpack.c.b16 %v535, %v534
    %v542 = vpack.c.b16 %v537, %v536
    %v543 = vpack.c.b16 %v539, %v538
    %548 = vmatprep.subr.bf16.mxu0 0
    %549 = vmatpush1.bf16.msra.mxu0 0
    %550 = vmatprep.subr.bf16.mxu0 0
    %551 = vmatpush1.bf16.msra.mxu0 0
    %552 = vmatprep.subr.bf16.mxu0 0
    %553 = vmatpush1.bf16.msra.mxu0 0
    %554 = vmatprep.subr.bf16.mxu0 0
    %555 = vmatpush1.bf16.msra.mxu0 0
    %556 = vmatprep.subr.bf16.mxu0 0
    %557 = vmatpush1.bf16.msra.mxu0 %v543
    %558 = vmatprep.subr.bf16.mxu0 0
    %559 = vmatpush1.bf16.msra.mxu0 %v542
    %560 = vmatprep.subr.bf16.mxu0 0
    %561 = vmatpush1.bf16.msra.mxu0 %v541
    %562 = vmatprep.subr.bf16.mxu0 0
    %563 = vmatpush1.bf16.msra.mxu0 %v540
    %564 = vmatprep.subr.bf16.mxu0 0
    %565 = vmatpush2.bf16.msra.mxu0 0
    %566 = vmatprep.subr.bf16.mxu0 0
    %567 = vmatpush2.bf16.msra.mxu0 0
    %568 = vmatprep.subr.bf16.mxu0 0
    %569 = vmatpush2.bf16.msra.mxu0 0
    %570 = vmatprep.subr.bf16.mxu0 0
    %571 = vmatpush2.bf16.msra.mxu0 0
    %572 = vmatprep.subr.bf16.mxu0 0
    %573 = vmatpush2.bf16.msra.mxu0 0
    %574 = vmatprep.subr.bf16.mxu0 0
    %575 = vmatpush2.bf16.msra.mxu0 0
    %576 = vmatprep.subr.bf16.mxu0 0
    %577 = vmatpush2.bf16.msra.mxu0 0
    %578 = vmatprep.subr.bf16.mxu0 0
    %579 = vmatpush2.bf16.msra.mxu0 0
    %580 = vmatprep.mubr.bf16.mxu0 0
    %581 = vmatmul.mubr.bf16.gmra.mxu0 %v251
    %v582 = vpop.f32.mrf.mxu0
    %v583 = vadd.f32 0.0, %v582
    %v584 = vpop.f32.mrf.mxu0
    %v585 = vpop.f32.mrf.mxu0
    %v586 = vadd.f32 0.0, %v585
    %v587 = vpop.f32.mrf.mxu0
    %588 = vmatprep.mubr.bf16.mxu0 0
    %589 = vmatmul.mubr.bf16.gmra.mxu0 %v254
    %v590 = vpop.f32.mrf.mxu0
    %v591 = vadd.f32 0.0, %v590
    %v592 = vpop.f32.mrf.mxu0
    %v593 = vpop.f32.mrf.mxu0
    %v594 = vadd.f32 0.0, %v593
    %v595 = vpop.f32.mrf.mxu0
    %596 = vdwg.mxu0
    %v605 = vunpack.c.l.b16 %v63
    %v606 = vunpack.c.l.b16 %v64
    %v607 = vunpack.c.l.b16 %v65
    %v608 = vunpack.c.l.b16 %v66
    %v609 = vunpack.c.l.b16 %v67
    %v610 = vunpack.c.l.b16 %v68
    %v611 = vunpack.c.l.b16 %v69
    %v612 = vunpack.c.l.b16 %v70
    %v613 = vpack.c.b16 %v606, %v605
    %v614 = vpack.c.b16 %v608, %v607
    %v615 = vpack.c.b16 %v610, %v609
    %v616 = vpack.c.b16 %v612, %v611
    %621 = vmatprep.subr.bf16.mxu0 0
    %622 = vmatpush1.bf16.msra.mxu0 0
    %623 = vmatprep.subr.bf16.mxu0 0
    %624 = vmatpush1.bf16.msra.mxu0 0
    %625 = vmatprep.subr.bf16.mxu0 0
    %626 = vmatpush1.bf16.msra.mxu0 0
    %627 = vmatprep.subr.bf16.mxu0 0
    %628 = vmatpush1.bf16.msra.mxu0 0
    %629 = vmatprep.subr.bf16.mxu0 0
    %630 = vmatpush1.bf16.msra.mxu0 %v616
    %631 = vmatprep.subr.bf16.mxu0 0
    %632 = vmatpush1.bf16.msra.mxu0 %v615
    %633 = vmatprep.subr.bf16.mxu0 0
    %634 = vmatpush1.bf16.msra.mxu0 %v614
    %635 = vmatprep.subr.bf16.mxu0 0
    %636 = vmatpush1.bf16.msra.mxu0 %v613
    %637 = vmatprep.subr.bf16.mxu0 0
    %638 = vmatpush2.bf16.msra.mxu0 0
    %639 = vmatprep.subr.bf16.mxu0 0
    %640 = vmatpush2.bf16.msra.mxu0 0
    %641 = vmatprep.subr.bf16.mxu0 0
    %642 = vmatpush2.bf16.msra.mxu0 0
    %643 = vmatprep.subr.bf16.mxu0 0
    %644 = vmatpush2.bf16.msra.mxu0 0
    %645 = vmatprep.subr.bf16.mxu0 0
    %646 = vmatpush2.bf16.msra.mxu0 0
    %647 = vmatprep.subr.bf16.mxu0 0
    %648 = vmatpush2.bf16.msra.mxu0 0
    %649 = vmatprep.subr.bf16.mxu0 0
    %650 = vmatpush2.bf16.msra.mxu0 0
    %651 = vmatprep.subr.bf16.mxu0 0
    %652 = vmatpush2.bf16.msra.mxu0 0
    %653 = vmatprep.mubr.bf16.mxu0 0
    %654 = vmatmul.mubr.bf16.gmra.mxu0 %v251
    %v655 = vpop.f32.mrf.mxu0
    %v656 = vadd.f32 0.0, %v655
    %v657 = vpop.f32.mrf.mxu0
    %v658 = vpop.f32.mrf.mxu0
    %v659 = vadd.f32 0.0, %v658
    %v660 = vpop.f32.mrf.mxu0
    %661 = vmatprep.mubr.bf16.mxu0 0
    %662 = vmatmul.mubr.bf16.gmra.mxu0 %v254
    %v663 = vpop.f32.mrf.mxu0
    %v664 = vadd.f32 0.0, %v663
    %v665 = vpop.f32.mrf.mxu0
    %v666 = vpop.f32.mrf.mxu0
    %v667 = vadd.f32 0.0, %v666
    %v668 = vpop.f32.mrf.mxu0
    %669 = vdwg.mxu0
    %v678 = vunpack.c.l.b16 %v71
    %v679 = vunpack.c.l.b16 %v72
    %v680 = vunpack.c.l.b16 %v73
    %v681 = vunpack.c.l.b16 %v74
    %v682 = vunpack.c.l.b16 %v75
    %v683 = vunpack.c.l.b16 %v76
    %v684 = vunpack.c.l.b16 %v77
    %v685 = vunpack.c.l.b16 %v78
    %v686 = vpack.c.b16 %v679, %v678
    %v687 = vpack.c.b16 %v681, %v680
    %v688 = vpack.c.b16 %v683, %v682
    %v689 = vpack.c.b16 %v685, %v684
    %694 = vmatprep.subr.bf16.mxu0 0
    %695 = vmatpush1.bf16.msra.mxu0 0
    %696 = vmatprep.subr.bf16.mxu0 0
    %697 = vmatpush1.bf16.msra.mxu0 0
    %698 = vmatprep.subr.bf16.mxu0 0
    %699 = vmatpush1.bf16.msra.mxu0 0
    %700 = vmatprep.subr.bf16.mxu0 0
    %701 = vmatpush1.bf16.msra.mxu0 0
    %702 = vmatprep.subr.bf16.mxu0 0
    %703 = vmatpush1.bf16.msra.mxu0 %v689
    %704 = vmatprep.subr.bf16.mxu0 0
    %705 = vmatpush1.bf16.msra.mxu0 %v688
    %706 = vmatprep.subr.bf16.mxu0 0
    %707 = vmatpush1.bf16.msra.mxu0 %v687
    %708 = vmatprep.subr.bf16.mxu0 0
    %709 = vmatpush1.bf16.msra.mxu0 %v686
    %710 = vmatprep.subr.bf16.mxu0 0
    %711 = vmatpush2.bf16.msra.mxu0 0
    %712 = vmatprep.subr.bf16.mxu0 0
    %713 = vmatpush2.bf16.msra.mxu0 0
    %714 = vmatprep.subr.bf16.mxu0 0
    %715 = vmatpush2.bf16.msra.mxu0 0
    %716 = vmatprep.subr.bf16.mxu0 0
    %717 = vmatpush2.bf16.msra.mxu0 0
    %718 = vmatprep.subr.bf16.mxu0 0
    %719 = vmatpush2.bf16.msra.mxu0 0
    %720 = vmatprep.subr.bf16.mxu0 0
    %721 = vmatpush2.bf16.msra.mxu0 0
    %722 = vmatprep.subr.bf16.mxu0 0
    %723 = vmatpush2.bf16.msra.mxu0 0
    %724 = vmatprep.subr.bf16.mxu0 0
    %725 = vmatpush2.bf16.msra.mxu0 0
    %726 = vmatprep.mubr.bf16.mxu0 0
    %727 = vmatmul.mubr.bf16.gmra.mxu0 %v251
    %v728 = vpop.f32.mrf.mxu0
    %v729 = vadd.f32 0.0, %v728
    %v730 = vpop.f32.mrf.mxu0
    %v731 = vpop.f32.mrf.mxu0
    %v732 = vadd.f32 0.0, %v731
    %v733 = vpop.f32.mrf.mxu0
    %734 = vmatprep.mubr.bf16.mxu0 0
    %735 = vmatmul.mubr.bf16.gmra.mxu0 %v254
    %v736 = vpop.f32.mrf.mxu0
    %v737 = vadd.f32 0.0, %v736
    %v738 = vpop.f32.mrf.mxu0
    %v739 = vpop.f32.mrf.mxu0
    %v740 = vadd.f32 0.0, %v739
    %v741 = vpop.f32.mrf.mxu0
    %742 = vdwg.mxu0
    %v751 = vunpack.c.l.b16 %v79
    %v752 = vunpack.c.l.b16 %v80
    %v753 = vunpack.c.l.b16 %v81
    %v754 = vunpack.c.l.b16 %v82
    %v755 = vunpack.c.l.b16 %v83
    %v756 = vunpack.c.l.b16 %v84
    %v757 = vunpack.c.l.b16 %v85
    %v758 = vunpack.c.l.b16 %v86
    %v759 = vpack.c.b16 %v752, %v751
    %v760 = vpack.c.b16 %v754, %v753
    %v761 = vpack.c.b16 %v756, %v755
    %v762 = vpack.c.b16 %v758, %v757
    %767 = vmatprep.subr.bf16.mxu0 0
    %768 = vmatpush1.bf16.msra.mxu0 0
    %769 = vmatprep.subr.bf16.mxu0 0
    %770 = vmatpush1.bf16.msra.mxu0 0
    %771 = vmatprep.subr.bf16.mxu0 0
    %772 = vmatpush1.bf16.msra.mxu0 0
    %773 = vmatprep.subr.bf16.mxu0 0
    %774 = vmatpush1.bf16.msra.mxu0 0
    %775 = vmatprep.subr.bf16.mxu0 0
    %776 = vmatpush1.bf16.msra.mxu0 %v762
    %777 = vmatprep.subr.bf16.mxu0 0
    %778 = vmatpush1.bf16.msra.mxu0 %v761
    %779 = vmatprep.subr.bf16.mxu0 0
    %780 = vmatpush1.bf16.msra.mxu0 %v760
    %781 = vmatprep.subr.bf16.mxu0 0
    %782 = vmatpush1.bf16.msra.mxu0 %v759
    %783 = vmatprep.subr.bf16.mxu0 0
    %784 = vmatpush2.bf16.msra.mxu0 0
    %785 = vmatprep.subr.bf16.mxu0 0
    %786 = vmatpush2.bf16.msra.mxu0 0
    %787 = vmatprep.subr.bf16.mxu0 0
    %788 = vmatpush2.bf16.msra.mxu0 0
    %789 = vmatprep.subr.bf16.mxu0 0
    %790 = vmatpush2.bf16.msra.mxu0 0
    %791 = vmatprep.subr.bf16.mxu0 0
    %792 = vmatpush2.bf16.msra.mxu0 0
    %793 = vmatprep.subr.bf16.mxu0 0
    %794 = vmatpush2.bf16.msra.mxu0 0
    %795 = vmatprep.subr.bf16.mxu0 0
    %796 = vmatpush2.bf16.msra.mxu0 0
    %797 = vmatprep.subr.bf16.mxu0 0
    %798 = vmatpush2.bf16.msra.mxu0 0
    %799 = vmatprep.mubr.bf16.mxu0 0
    %800 = vmatmul.mubr.bf16.gmra.mxu0 %v251
    %v801 = vpop.f32.mrf.mxu0
    %v802 = vadd.f32 0.0, %v801
    %v803 = vpop.f32.mrf.mxu0
    %v804 = vpop.f32.mrf.mxu0
    %v805 = vadd.f32 0.0, %v804
    %v806 = vpop.f32.mrf.mxu0
    %807 = vmatprep.mubr.bf16.mxu0 0
    %808 = vmatmul.mubr.bf16.gmra.mxu0 %v254
    %v809 = vpop.f32.mrf.mxu0
    %v810 = vadd.f32 0.0, %v809
    %v811 = vpop.f32.mrf.mxu0
    %v812 = vpop.f32.mrf.mxu0
    %v813 = vadd.f32 0.0, %v812
    %v814 = vpop.f32.mrf.mxu0
    %815 = vdwg.mxu0
    %v824 = vunpack.c.l.b16 %v87
    %v825 = vunpack.c.l.b16 %v88
    %v826 = vunpack.c.l.b16 %v89
    %v827 = vunpack.c.l.b16 %v90
    %v828 = vunpack.c.l.b16 %v91
    %v829 = vunpack.c.l.b16 %v92
    %v830 = vunpack.c.l.b16 %v93
    %v831 = vunpack.c.l.b16 %v94
    %v832 = vpack.c.b16 %v825, %v824
    %v833 = vpack.c.b16 %v827, %v826
    %v834 = vpack.c.b16 %v829, %v828
    %v835 = vpack.c.b16 %v831, %v830
    %840 = vmatprep.subr.bf16.mxu0 0
    %841 = vmatpush1.bf16.msra.mxu0 0
    %842 = vmatprep.subr.bf16.mxu0 0
    %843 = vmatpush1.bf16.msra.mxu0 0
    %844 = vmatprep.subr.bf16.mxu0 0
    %845 = vmatpush1.bf16.msra.mxu0 0
    %846 = vmatprep.subr.bf16.mxu0 0
    %847 = vmatpush1.bf16.msra.mxu0 0
    %848 = vmatprep.subr.bf16.mxu0 0
    %849 = vmatpush1.bf16.msra.mxu0 %v835
    %850 = vmatprep.subr.bf16.mxu0 0
    %851 = vmatpush1.bf16.msra.mxu0 %v834
    %852 = vmatprep.subr.bf16.mxu0 0
    %853 = vmatpush1.bf16.msra.mxu0 %v833
    %854 = vmatprep.subr.bf16.mxu0 0
    %855 = vmatpush1.bf16.msra.mxu0 %v832
    %856 = vmatprep.subr.bf16.mxu0 0
    %857 = vmatpush2.bf16.msra.mxu0 0
    %858 = vmatprep.subr.bf16.mxu0 0
    %859 = vmatpush2.bf16.msra.mxu0 0
    %860 = vmatprep.subr.bf16.mxu0 0
    %861 = vmatpush2.bf16.msra.mxu0 0
    %862 = vmatprep.subr.bf16.mxu0 0
    %863 = vmatpush2.bf16.msra.mxu0 0
    %864 = vmatprep.subr.bf16.mxu0 0
    %865 = vmatpush2.bf16.msra.mxu0 0
    %866 = vmatprep.subr.bf16.mxu0 0
    %867 = vmatpush2.bf16.msra.mxu0 0
    %868 = vmatprep.subr.bf16.mxu0 0
    %869 = vmatpush2.bf16.msra.mxu0 0
    %870 = vmatprep.subr.bf16.mxu0 0
    %871 = vmatpush2.bf16.msra.mxu0 0
    %872 = vmatprep.mubr.bf16.mxu0 0
    %873 = vmatmul.mubr.bf16.gmra.mxu0 %v251
    %v874 = vpop.f32.mrf.mxu0
    %v875 = vadd.f32 0.0, %v874
    %v876 = vpop.f32.mrf.mxu0
    %v877 = vpop.f32.mrf.mxu0
    %v878 = vadd.f32 0.0, %v877
    %v879 = vpop.f32.mrf.mxu0
    %880 = vmatprep.mubr.bf16.mxu0 0
    %881 = vmatmul.mubr.bf16.gmra.mxu0 %v254
    %v882 = vpop.f32.mrf.mxu0
    %v883 = vadd.f32 0.0, %v882
    %v884 = vpop.f32.mrf.mxu0
    %v885 = vpop.f32.mrf.mxu0
    %v886 = vadd.f32 0.0, %v885
    %v887 = vpop.f32.mrf.mxu0
    %888 = vdwg.mxu0
    %v897 = vunpack.c.l.b16 %v95
    %v898 = vunpack.c.l.b16 %v96
    %v899 = vunpack.c.l.b16 %v97
    %v900 = vunpack.c.l.b16 %v98
    %v901 = vunpack.c.l.b16 %v99
    %v902 = vunpack.c.l.b16 %v100
    %v903 = vunpack.c.l.b16 %v101
    %v904 = vunpack.c.l.b16 %v102
    %v905 = vpack.c.b16 %v898, %v897
    %v906 = vpack.c.b16 %v900, %v899
    %v907 = vpack.c.b16 %v902, %v901
    %v908 = vpack.c.b16 %v904, %v903
    %913 = vmatprep.subr.bf16.mxu0 0
    %914 = vmatpush1.bf16.msra.mxu0 0
    %915 = vmatprep.subr.bf16.mxu0 0
    %916 = vmatpush1.bf16.msra.mxu0 0
    %917 = vmatprep.subr.bf16.mxu0 0
    %918 = vmatpush1.bf16.msra.mxu0 0
    %919 = vmatprep.subr.bf16.mxu0 0
    %920 = vmatpush1.bf16.msra.mxu0 0
    %921 = vmatprep.subr.bf16.mxu0 0
    %922 = vmatpush1.bf16.msra.mxu0 %v908
    %923 = vmatprep.subr.bf16.mxu0 0
    %924 = vmatpush1.bf16.msra.mxu0 %v907
    %925 = vmatprep.subr.bf16.mxu0 0
    %926 = vmatpush1.bf16.msra.mxu0 %v906
    %927 = vmatprep.subr.bf16.mxu0 0
    %928 = vmatpush1.bf16.msra.mxu0 %v905
    %929 = vmatprep.subr.bf16.mxu0 0
    %930 = vmatpush2.bf16.msra.mxu0 0
    %931 = vmatprep.subr.bf16.mxu0 0
    %932 = vmatpush2.bf16.msra.mxu0 0
    %933 = vmatprep.subr.bf16.mxu0 0
    %934 = vmatpush2.bf16.msra.mxu0 0
    %935 = vmatprep.subr.bf16.mxu0 0
    %936 = vmatpush2.bf16.msra.mxu0 0
    %937 = vmatprep.subr.bf16.mxu0 0
    %938 = vmatpush2.bf16.msra.mxu0 0
    %939 = vmatprep.subr.bf16.mxu0 0
    %940 = vmatpush2.bf16.msra.mxu0 0
    %941 = vmatprep.subr.bf16.mxu0 0
    %942 = vmatpush2.bf16.msra.mxu0 0
    %943 = vmatprep.subr.bf16.mxu0 0
    %944 = vmatpush2.bf16.msra.mxu0 0
    %945 = vmatprep.mubr.bf16.mxu0 0
    %946 = vmatmul.mubr.bf16.gmra.mxu0 %v251
    %v947 = vpop.f32.mrf.mxu0
    %v948 = vadd.f32 0.0, %v947
    %v949 = vpop.f32.mrf.mxu0
    %v950 = vpop.f32.mrf.mxu0
    %v951 = vadd.f32 0.0, %v950
    %v952 = vpop.f32.mrf.mxu0
    %953 = vmatprep.mubr.bf16.mxu0 0
    %954 = vmatmul.mubr.bf16.gmra.mxu0 %v254
    %v955 = vpop.f32.mrf.mxu0
    %v956 = vadd.f32 0.0, %v955
    %v957 = vpop.f32.mrf.mxu0
    %v958 = vpop.f32.mrf.mxu0
    %v959 = vadd.f32 0.0, %v958
    %v960 = vpop.f32.mrf.mxu0
    %961 = vdwg.mxu0
    %v970 = vunpack.c.l.b16 %v103
    %v971 = vunpack.c.l.b16 %v104
    %v972 = vunpack.c.l.b16 %v105
    %v973 = vunpack.c.l.b16 %v106
    %v974 = vunpack.c.l.b16 %v107
    %v975 = vunpack.c.l.b16 %v108
    %v976 = vunpack.c.l.b16 %v109
    %v977 = vunpack.c.l.b16 %v110
    %v978 = vpack.c.b16 %v971, %v970
    %v979 = vpack.c.b16 %v973, %v972
    %v980 = vpack.c.b16 %v975, %v974
    %v981 = vpack.c.b16 %v977, %v976
    %986 = vmatprep.subr.bf16.mxu0 0
    %987 = vmatpush1.bf16.msra.mxu0 0
    %988 = vmatprep.subr.bf16.mxu0 0
    %989 = vmatpush1.bf16.msra.mxu0 0
    %990 = vmatprep.subr.bf16.mxu0 0
    %991 = vmatpush1.bf16.msra.mxu0 0
    %992 = vmatprep.subr.bf16.mxu0 0
    %993 = vmatpush1.bf16.msra.mxu0 0
    %994 = vmatprep.subr.bf16.mxu0 0
    %995 = vmatpush1.bf16.msra.mxu0 %v981
    %996 = vmatprep.subr.bf16.mxu0 0
    %997 = vmatpush1.bf16.msra.mxu0 %v980
    %998 = vmatprep.subr.bf16.mxu0 0
    %999 = vmatpush1.bf16.msra.mxu0 %v979
    %1000 = vmatprep.subr.bf16.mxu0 0
    %1001 = vmatpush1.bf16.msra.mxu0 %v978
    %1002 = vmatprep.subr.bf16.mxu0 0
    %1003 = vmatpush2.bf16.msra.mxu0 0
    %1004 = vmatprep.subr.bf16.mxu0 0
    %1005 = vmatpush2.bf16.msra.mxu0 0
    %1006 = vmatprep.subr.bf16.mxu0 0
    %1007 = vmatpush2.bf16.msra.mxu0 0
    %1008 = vmatprep.subr.bf16.mxu0 0
    %1009 = vmatpush2.bf16.msra.mxu0 0
    %1010 = vmatprep.subr.bf16.mxu0 0
    %1011 = vmatpush2.bf16.msra.mxu0 0
    %1012 = vmatprep.subr.bf16.mxu0 0
    %1013 = vmatpush2.bf16.msra.mxu0 0
    %1014 = vmatprep.subr.bf16.mxu0 0
    %1015 = vmatpush2.bf16.msra.mxu0 0
    %1016 = vmatprep.subr.bf16.mxu0 0
    %1017 = vmatpush2.bf16.msra.mxu0 0
    %1018 = vmatprep.mubr.bf16.mxu0 0
    %1019 = vmatmul.mubr.bf16.gmra.mxu0 %v251
    %v1020 = vpop.f32.mrf.mxu0
    %v1021 = vadd.f32 0.0, %v1020
    %v1022 = vpop.f32.mrf.mxu0
    %v1023 = vpop.f32.mrf.mxu0
    %v1024 = vadd.f32 0.0, %v1023
    %v1025 = vpop.f32.mrf.mxu0
    %1026 = vmatprep.mubr.bf16.mxu0 0
    %1027 = vmatmul.mubr.bf16.gmra.mxu0 %v254
    %v1028 = vpop.f32.mrf.mxu0
    %v1029 = vadd.f32 0.0, %v1028
    %v1030 = vpop.f32.mrf.mxu0
    %v1031 = vpop.f32.mrf.mxu0
    %v1032 = vadd.f32 0.0, %v1031
    %v1033 = vpop.f32.mrf.mxu0
    %1034 = vdwg.mxu0
    %v1043 = vunpack.c.l.b16 %v111
    %v1044 = vunpack.c.l.b16 %v112
    %v1045 = vunpack.c.l.b16 %v113
    %v1046 = vunpack.c.l.b16 %v114
    %v1047 = vunpack.c.l.b16 %v115
    %v1048 = vunpack.c.l.b16 %v116
    %v1049 = vunpack.c.l.b16 %v117
    %v1050 = vunpack.c.l.b16 %v118
    %v1051 = vpack.c.b16 %v1044, %v1043
    %v1052 = vpack.c.b16 %v1046, %v1045
    %v1053 = vpack.c.b16 %v1048, %v1047
    %v1054 = vpack.c.b16 %v1050, %v1049
    %1059 = vmatprep.subr.bf16.mxu0 0
    %1060 = vmatpush1.bf16.msra.mxu0 0
    %1061 = vmatprep.subr.bf16.mxu0 0
    %1062 = vmatpush1.bf16.msra.mxu0 0
    %1063 = vmatprep.subr.bf16.mxu0 0
    %1064 = vmatpush1.bf16.msra.mxu0 0
    %1065 = vmatprep.subr.bf16.mxu0 0
    %1066 = vmatpush1.bf16.msra.mxu0 0
    %1067 = vmatprep.subr.bf16.mxu0 0
    %1068 = vmatpush1.bf16.msra.mxu0 %v1054
    %1069 = vmatprep.subr.bf16.mxu0 0
    %1070 = vmatpush1.bf16.msra.mxu0 %v1053
    %1071 = vmatprep.subr.bf16.mxu0 0
    %1072 = vmatpush1.bf16.msra.mxu0 %v1052
    %1073 = vmatprep.subr.bf16.mxu0 0
    %1074 = vmatpush1.bf16.msra.mxu0 %v1051
    %1075 = vmatprep.subr.bf16.mxu0 0
    %1076 = vmatpush2.bf16.msra.mxu0 0
    %1077 = vmatprep.subr.bf16.mxu0 0
    %1078 = vmatpush2.bf16.msra.mxu0 0
    %1079 = vmatprep.subr.bf16.mxu0 0
    %1080 = vmatpush2.bf16.msra.mxu0 0
    %1081 = vmatprep.subr.bf16.mxu0 0
    %1082 = vmatpush2.bf16.msra.mxu0 0
    %1083 = vmatprep.subr.bf16.mxu0 0
    %1084 = vmatpush2.bf16.msra.mxu0 0
    %1085 = vmatprep.subr.bf16.mxu0 0
    %1086 = vmatpush2.bf16.msra.mxu0 0
    %1087 = vmatprep.subr.bf16.mxu0 0
    %1088 = vmatpush2.bf16.msra.mxu0 0
    %1089 = vmatprep.subr.bf16.mxu0 0
    %1090 = vmatpush2.bf16.msra.mxu0 0
    %1091 = vmatprep.mubr.bf16.mxu0 0
    %1092 = vmatmul.mubr.bf16.gmra.mxu0 %v251
    %v1093 = vpop.f32.mrf.mxu0
    %v1094 = vadd.f32 0.0, %v1093
    %v1095 = vpop.f32.mrf.mxu0
    %v1096 = vpop.f32.mrf.mxu0
    %v1097 = vadd.f32 0.0, %v1096
    %v1098 = vpop.f32.mrf.mxu0
    %1099 = vmatprep.mubr.bf16.mxu0 0
    %1100 = vmatmul.mubr.bf16.gmra.mxu0 %v254
    %v1101 = vpop.f32.mrf.mxu0
    %v1102 = vadd.f32 0.0, %v1101
    %v1103 = vpop.f32.mrf.mxu0
    %v1104 = vpop.f32.mrf.mxu0
    %v1105 = vadd.f32 0.0, %v1104
    %v1106 = vpop.f32.mrf.mxu0
    %1107 = vdwg.mxu0
    %v1116 = vunpack.c.l.b16 %v119
    %v1117 = vunpack.c.l.b16 %v120
    %v1118 = vunpack.c.l.b16 %v121
    %v1119 = vunpack.c.l.b16 %v122
    %v1120 = vunpack.c.l.b16 %v123
    %v1121 = vunpack.c.l.b16 %v124
    %v1122 = vunpack.c.l.b16 %v125
    %v1123 = vunpack.c.l.b16 %v126
    %v1124 = vpack.c.b16 %v1117, %v1116
    %v1125 = vpack.c.b16 %v1119, %v1118
    %v1126 = vpack.c.b16 %v1121, %v1120
    %v1127 = vpack.c.b16 %v1123, %v1122
    %1132 = vmatprep.subr.bf16.mxu0 0
    %1133 = vmatpush1.bf16.msra.mxu0 0
    %1134 = vmatprep.subr.bf16.mxu0 0
    %1135 = vmatpush1.bf16.msra.mxu0 0
    %1136 = vmatprep.subr.bf16.mxu0 0
    %1137 = vmatpush1.bf16.msra.mxu0 0
    %1138 = vmatprep.subr.bf16.mxu0 0
    %1139 = vmatpush1.bf16.msra.mxu0 0
    %1140 = vmatprep.subr.bf16.mxu0 0
    %1141 = vmatpush1.bf16.msra.mxu0 %v1127
    %1142 = vmatprep.subr.bf16.mxu0 0
    %1143 = vmatpush1.bf16.msra.mxu0 %v1126
    %1144 = vmatprep.subr.bf16.mxu0 0
    %1145 = vmatpush1.bf16.msra.mxu0 %v1125
    %1146 = vmatprep.subr.bf16.mxu0 0
    %1147 = vmatpush1.bf16.msra.mxu0 %v1124
    %1148 = vmatprep.subr.bf16.mxu0 0
    %1149 = vmatpush2.bf16.msra.mxu0 0
    %1150 = vmatprep.subr.bf16.mxu0 0
    %1151 = vmatpush2.bf16.msra.mxu0 0
    %1152 = vmatprep.subr.bf16.mxu0 0
    %1153 = vmatpush2.bf16.msra.mxu0 0
    %1154 = vmatprep.subr.bf16.mxu0 0
    %1155 = vmatpush2.bf16.msra.mxu0 0
    %1156 = vmatprep.subr.bf16.mxu0 0
    %1157 = vmatpush2.bf16.msra.mxu0 0
    %1158 = vmatprep.subr.bf16.mxu0 0
    %1159 = vmatpush2.bf16.msra.mxu0 0
    %1160 = vmatprep.subr.bf16.mxu0 0
    %1161 = vmatpush2.bf16.msra.mxu0 0
    %1162 = vmatprep.subr.bf16.mxu0 0
    %1163 = vmatpush2.bf16.msra.mxu0 0
    %1164 = vmatprep.mubr.bf16.mxu0 0
    %1165 = vmatmul.mubr.bf16.gmra.mxu0 %v251
    %v1166 = vpop.f32.mrf.mxu0
    %v1167 = vadd.f32 0.0, %v1166
    %v1168 = vpop.f32.mrf.mxu0
    %v1169 = vpop.f32.mrf.mxu0
    %v1170 = vadd.f32 0.0, %v1169
    %v1171 = vpop.f32.mrf.mxu0
    %1172 = vmatprep.mubr.bf16.mxu0 0
    %1173 = vmatmul.mubr.bf16.gmra.mxu0 %v254
    %v1174 = vpop.f32.mrf.mxu0
    %v1175 = vadd.f32 0.0, %v1174
    %v1176 = vpop.f32.mrf.mxu0
    %v1177 = vpop.f32.mrf.mxu0
    %v1178 = vadd.f32 0.0, %v1177
    %v1179 = vpop.f32.mrf.mxu0
    %1180 = vdwg.mxu0
    %v1189 = vunpack.c.l.b16 %v127
    %v1190 = vunpack.c.l.b16 %v128
    %v1191 = vunpack.c.l.b16 %v129
    %v1192 = vunpack.c.l.b16 %v130
    %v1193 = vunpack.c.l.b16 %v131
    %v1194 = vunpack.c.l.b16 %v132
    %v1195 = vunpack.c.l.b16 %v133
    %v1196 = vunpack.c.l.b16 %v134
    %v1197 = vpack.c.b16 %v1190, %v1189
    %v1198 = vpack.c.b16 %v1192, %v1191
    %v1199 = vpack.c.b16 %v1194, %v1193
    %v1200 = vpack.c.b16 %v1196, %v1195
    %1205 = vmatprep.subr.bf16.mxu0 0
    %1206 = vmatpush1.bf16.msra.mxu0 0
    %1207 = vmatprep.subr.bf16.mxu0 0
    %1208 = vmatpush1.bf16.msra.mxu0 0
    %1209 = vmatprep.subr.bf16.mxu0 0
    %1210 = vmatpush1.bf16.msra.mxu0 0
    %1211 = vmatprep.subr.bf16.mxu0 0
    %1212 = vmatpush1.bf16.msra.mxu0 0
    %1213 = vmatprep.subr.bf16.mxu0 0
    %1214 = vmatpush1.bf16.msra.mxu0 %v1200
    %1215 = vmatprep.subr.bf16.mxu0 0
    %1216 = vmatpush1.bf16.msra.mxu0 %v1199
    %1217 = vmatprep.subr.bf16.mxu0 0
    %1218 = vmatpush1.bf16.msra.mxu0 %v1198
    %1219 = vmatprep.subr.bf16.mxu0 0
    %1220 = vmatpush1.bf16.msra.mxu0 %v1197
    %1221 = vmatprep.subr.bf16.mxu0 0
    %1222 = vmatpush2.bf16.msra.mxu0 0
    %1223 = vmatprep.subr.bf16.mxu0 0
    %1224 = vmatpush2.bf16.msra.mxu0 0
    %1225 = vmatprep.subr.bf16.mxu0 0
    %1226 = vmatpush2.bf16.msra.mxu0 0
    %1227 = vmatprep.subr.bf16.mxu0 0
    %1228 = vmatpush2.bf16.msra.mxu0 0
    %1229 = vmatprep.subr.bf16.mxu0 0
    %1230 = vmatpush2.bf16.msra.mxu0 0
    %1231 = vmatprep.subr.bf16.mxu0 0
    %1232 = vmatpush2.bf16.msra.mxu0 0
    %1233 = vmatprep.subr.bf16.mxu0 0
    %1234 = vmatpush2.bf16.msra.mxu0 0
    %1235 = vmatprep.subr.bf16.mxu0 0
    %1236 = vmatpush2.bf16.msra.mxu0 0
    %1237 = vmatprep.mubr.bf16.mxu0 0
    %1238 = vmatmul.mubr.bf16.gmra.mxu0 %v251
    %v1239 = vpop.f32.mrf.mxu0
    %v1240 = vadd.f32 0.0, %v1239
    %v1241 = vpop.f32.mrf.mxu0
    %v1242 = vpop.f32.mrf.mxu0
    %v1243 = vadd.f32 0.0, %v1242
    %v1244 = vpop.f32.mrf.mxu0
    %1245 = vmatprep.mubr.bf16.mxu0 0
    %1246 = vmatmul.mubr.bf16.gmra.mxu0 %v254
    %v1247 = vpop.f32.mrf.mxu0
    %v1248 = vadd.f32 0.0, %v1247
    %v1249 = vpop.f32.mrf.mxu0
    %v1250 = vpop.f32.mrf.mxu0
    %v1251 = vadd.f32 0.0, %v1250
    %v1252 = vpop.f32.mrf.mxu0
    %1253 = vdwg.mxu0
    %v1262 = vunpack.c.l.b16 %v135
    %v1263 = vunpack.c.l.b16 %v136
    %v1264 = vunpack.c.l.b16 %v137
    %v1265 = vunpack.c.l.b16 %v138
    %v1266 = vunpack.c.l.b16 %v139
    %v1267 = vunpack.c.l.b16 %v140
    %v1268 = vunpack.c.l.b16 %v141
    %v1269 = vunpack.c.l.b16 %v142
    %v1270 = vpack.c.b16 %v1263, %v1262
    %v1271 = vpack.c.b16 %v1265, %v1264
    %v1272 = vpack.c.b16 %v1267, %v1266
    %v1273 = vpack.c.b16 %v1269, %v1268
    %1278 = vmatprep.subr.bf16.mxu0 0
    %1279 = vmatpush1.bf16.msra.mxu0 0
    %1280 = vmatprep.subr.bf16.mxu0 0
    %1281 = vmatpush1.bf16.msra.mxu0 0
    %1282 = vmatprep.subr.bf16.mxu0 0
    %1283 = vmatpush1.bf16.msra.mxu0 0
    %1284 = vmatprep.subr.bf16.mxu0 0
    %1285 = vmatpush1.bf16.msra.mxu0 0
    %1286 = vmatprep.subr.bf16.mxu0 0
    %1287 = vmatpush1.bf16.msra.mxu0 %v1273
    %1288 = vmatprep.subr.bf16.mxu0 0
    %1289 = vmatpush1.bf16.msra.mxu0 %v1272
    %1290 = vmatprep.subr.bf16.mxu0 0
    %1291 = vmatpush1.bf16.msra.mxu0 %v1271
    %1292 = vmatprep.subr.bf16.mxu0 0
    %1293 = vmatpush1.bf16.msra.mxu0 %v1270
    %1294 = vmatprep.subr.bf16.mxu0 0
    %1295 = vmatpush2.bf16.msra.mxu0 0
    %1296 = vmatprep.subr.bf16.mxu0 0
    %1297 = vmatpush2.bf16.msra.mxu0 0
    %1298 = vmatprep.subr.bf16.mxu0 0
    %1299 = vmatpush2.bf16.msra.mxu0 0
    %1300 = vmatprep.subr.bf16.mxu0 0
    %1301 = vmatpush2.bf16.msra.mxu0 0
    %1302 = vmatprep.subr.bf16.mxu0 0
    %1303 = vmatpush2.bf16.msra.mxu0 0
    %1304 = vmatprep.subr.bf16.mxu0 0
    %1305 = vmatpush2.bf16.msra.mxu0 0
    %1306 = vmatprep.subr.bf16.mxu0 0
    %1307 = vmatpush2.bf16.msra.mxu0 0
    %1308 = vmatprep.subr.bf16.mxu0 0
    %1309 = vmatpush2.bf16.msra.mxu0 0
    %1310 = vmatprep.mubr.bf16.mxu0 0
    %1311 = vmatmul.mubr.bf16.gmra.mxu0 %v251
    %v1312 = vpop.f32.mrf.mxu0
    %v1313 = vadd.f32 0.0, %v1312
    %v1314 = vpop.f32.mrf.mxu0
    %v1315 = vpop.f32.mrf.mxu0
    %v1316 = vadd.f32 0.0, %v1315
    %v1317 = vpop.f32.mrf.mxu0
    %1318 = vmatprep.mubr.bf16.mxu0 0
    %1319 = vmatmul.mubr.bf16.gmra.mxu0 %v254
    %v1320 = vpop.f32.mrf.mxu0
    %v1321 = vadd.f32 0.0, %v1320
    %v1322 = vpop.f32.mrf.mxu0
    %v1323 = vpop.f32.mrf.mxu0
    %v1324 = vadd.f32 0.0, %v1323
    %v1325 = vpop.f32.mrf.mxu0
    %1326 = vdwg.mxu0
    %v1335 = vunpack.c.l.b16 %v143
    %v1336 = vunpack.c.l.b16 %v144
    %v1337 = vunpack.c.l.b16 %v145
    %v1338 = vunpack.c.l.b16 %v146
    %v1339 = vunpack.c.l.b16 %v147
    %v1340 = vunpack.c.l.b16 %v148
    %v1341 = vunpack.c.l.b16 %v149
    %v1342 = vunpack.c.l.b16 %v150
    %v1343 = vpack.c.b16 %v1336, %v1335
    %v1344 = vpack.c.b16 %v1338, %v1337
    %v1345 = vpack.c.b16 %v1340, %v1339
    %v1346 = vpack.c.b16 %v1342, %v1341
    %1351 = vmatprep.subr.bf16.mxu0 0
    %1352 = vmatpush1.bf16.msra.mxu0 0
    %1353 = vmatprep.subr.bf16.mxu0 0
    %1354 = vmatpush1.bf16.msra.mxu0 0
    %1355 = vmatprep.subr.bf16.mxu0 0
    %1356 = vmatpush1.bf16.msra.mxu0 0
    %1357 = vmatprep.subr.bf16.mxu0 0
    %1358 = vmatpush1.bf16.msra.mxu0 0
    %1359 = vmatprep.subr.bf16.mxu0 0
    %1360 = vmatpush1.bf16.msra.mxu0 %v1346
    %1361 = vmatprep.subr.bf16.mxu0 0
    %1362 = vmatpush1.bf16.msra.mxu0 %v1345
    %1363 = vmatprep.subr.bf16.mxu0 0
    %1364 = vmatpush1.bf16.msra.mxu0 %v1344
    %1365 = vmatprep.subr.bf16.mxu0 0
    %1366 = vmatpush1.bf16.msra.mxu0 %v1343
    %1367 = vmatprep.subr.bf16.mxu0 0
    %1368 = vmatpush2.bf16.msra.mxu0 0
    %1369 = vmatprep.subr.bf16.mxu0 0
    %1370 = vmatpush2.bf16.msra.mxu0 0
    %1371 = vmatprep.subr.bf16.mxu0 0
    %1372 = vmatpush2.bf16.msra.mxu0 0
    %1373 = vmatprep.subr.bf16.mxu0 0
    %1374 = vmatpush2.bf16.msra.mxu0 0
    %1375 = vmatprep.subr.bf16.mxu0 0
    %1376 = vmatpush2.bf16.msra.mxu0 0
    %1377 = vmatprep.subr.bf16.mxu0 0
    %1378 = vmatpush2.bf16.msra.mxu0 0
    %1379 = vmatprep.subr.bf16.mxu0 0
    %1380 = vmatpush2.bf16.msra.mxu0 0
    %1381 = vmatprep.subr.bf16.mxu0 0
    %1382 = vmatpush2.bf16.msra.mxu0 0
    %1383 = vmatprep.mubr.bf16.mxu0 0
    %1384 = vmatmul.mubr.bf16.gmra.mxu0 %v251
    %v1385 = vpop.f32.mrf.mxu0
    %v1386 = vadd.f32 0.0, %v1385
    %v1387 = vpop.f32.mrf.mxu0
    %v1388 = vpop.f32.mrf.mxu0
    %v1389 = vadd.f32 0.0, %v1388
    %v1390 = vpop.f32.mrf.mxu0
    %1391 = vmatprep.mubr.bf16.mxu0 0
    %1392 = vmatmul.mubr.bf16.gmra.mxu0 %v254
    %v1393 = vpop.f32.mrf.mxu0
    %v1394 = vadd.f32 0.0, %v1393
    %v1395 = vpop.f32.mrf.mxu0
    %v1396 = vpop.f32.mrf.mxu0
    %v1397 = vadd.f32 0.0, %v1396
    %v1398 = vpop.f32.mrf.mxu0
    %1399 = vdwg.mxu0
    %v1408 = vunpack.c.l.b16 %v151
    %v1409 = vunpack.c.l.b16 %v152
    %v1410 = vunpack.c.l.b16 %v153
    %v1411 = vunpack.c.l.b16 %v154
    %v1412 = vunpack.c.l.b16 %v155
    %v1413 = vunpack.c.l.b16 %v156
    %v1414 = vunpack.c.l.b16 %v157
    %v1415 = vunpack.c.l.b16 %v158
    %v1416 = vpack.c.b16 %v1409, %v1408
    %v1417 = vpack.c.b16 %v1411, %v1410
    %v1418 = vpack.c.b16 %v1413, %v1412
    %v1419 = vpack.c.b16 %v1415, %v1414
    %1424 = vmatprep.subr.bf16.mxu0 0
    %1425 = vmatpush1.bf16.msra.mxu0 0
    %1426 = vmatprep.subr.bf16.mxu0 0
    %1427 = vmatpush1.bf16.msra.mxu0 0
    %1428 = vmatprep.subr.bf16.mxu0 0
    %1429 = vmatpush1.bf16.msra.mxu0 0
    %1430 = vmatprep.subr.bf16.mxu0 0
    %1431 = vmatpush1.bf16.msra.mxu0 0
    %1432 = vmatprep.subr.bf16.mxu0 0
    %1433 = vmatpush1.bf16.msra.mxu0 %v1419
    %1434 = vmatprep.subr.bf16.mxu0 0
    %1435 = vmatpush1.bf16.msra.mxu0 %v1418
    %1436 = vmatprep.subr.bf16.mxu0 0
    %1437 = vmatpush1.bf16.msra.mxu0 %v1417
    %1438 = vmatprep.subr.bf16.mxu0 0
    %1439 = vmatpush1.bf16.msra.mxu0 %v1416
    %1440 = vmatprep.subr.bf16.mxu0 0
    %1441 = vmatpush2.bf16.msra.mxu0 0
    %1442 = vmatprep.subr.bf16.mxu0 0
    %1443 = vmatpush2.bf16.msra.mxu0 0
    %1444 = vmatprep.subr.bf16.mxu0 0
    %1445 = vmatpush2.bf16.msra.mxu0 0
    %1446 = vmatprep.subr.bf16.mxu0 0
    %1447 = vmatpush2.bf16.msra.mxu0 0
    %1448 = vmatprep.subr.bf16.mxu0 0
    %1449 = vmatpush2.bf16.msra.mxu0 0
    %1450 = vmatprep.subr.bf16.mxu0 0
    %1451 = vmatpush2.bf16.msra.mxu0 0
    %1452 = vmatprep.subr.bf16.mxu0 0
    %1453 = vmatpush2.bf16.msra.mxu0 0
    %1454 = vmatprep.subr.bf16.mxu0 0
    %1455 = vmatpush2.bf16.msra.mxu0 0
    %1456 = vmatprep.mubr.bf16.mxu0 0
    %1457 = vmatmul.mubr.bf16.gmra.mxu0 %v251
    %v1458 = vpop.f32.mrf.mxu0
    %v1459 = vadd.f32 0.0, %v1458
    %v1460 = vpop.f32.mrf.mxu0
    %v1461 = vpop.f32.mrf.mxu0
    %v1462 = vadd.f32 0.0, %v1461
    %v1463 = vpop.f32.mrf.mxu0
    %1464 = vmatprep.mubr.bf16.mxu0 0
    %1465 = vmatmul.mubr.bf16.gmra.mxu0 %v254
    %v1466 = vpop.f32.mrf.mxu0
    %v1467 = vadd.f32 0.0, %v1466
    %v1468 = vpop.f32.mrf.mxu0
    %v1469 = vpop.f32.mrf.mxu0
    %v1470 = vadd.f32 0.0, %v1469
    %v1471 = vpop.f32.mrf.mxu0
    %1472 = vdwg.mxu0
    %v1481 = vunpack.c.l.b16 %v159
    %v1482 = vunpack.c.l.b16 %v160
    %v1483 = vunpack.c.l.b16 %v161
    %v1484 = vunpack.c.l.b16 %v162
    %v1485 = vunpack.c.l.b16 %v163
    %v1486 = vunpack.c.l.b16 %v164
    %v1487 = vunpack.c.l.b16 %v165
    %v1488 = vunpack.c.l.b16 %v166
    %v1489 = vpack.c.b16 %v1482, %v1481
    %v1490 = vpack.c.b16 %v1484, %v1483
    %v1491 = vpack.c.b16 %v1486, %v1485
    %v1492 = vpack.c.b16 %v1488, %v1487
    %1497 = vmatprep.subr.bf16.mxu0 0
    %1498 = vmatpush1.bf16.msra.mxu0 0
    %1499 = vmatprep.subr.bf16.mxu0 0
    %1500 = vmatpush1.bf16.msra.mxu0 0
    %1501 = vmatprep.subr.bf16.mxu0 0
    %1502 = vmatpush1.bf16.msra.mxu0 0
    %1503 = vmatprep.subr.bf16.mxu0 0
    %1504 = vmatpush1.bf16.msra.mxu0 0
    %1505 = vmatprep.subr.bf16.mxu0 0
    %1506 = vmatpush1.bf16.msra.mxu0 %v1492
    %1507 = vmatprep.subr.bf16.mxu0 0
    %1508 = vmatpush1.bf16.msra.mxu0 %v1491
    %1509 = vmatprep.subr.bf16.mxu0 0
    %1510 = vmatpush1.bf16.msra.mxu0 %v1490
    %1511 = vmatprep.subr.bf16.mxu0 0
    %1512 = vmatpush1.bf16.msra.mxu0 %v1489
    %1513 = vmatprep.subr.bf16.mxu0 0
    %1514 = vmatpush2.bf16.msra.mxu0 0
    %1515 = vmatprep.subr.bf16.mxu0 0
    %1516 = vmatpush2.bf16.msra.mxu0 0
    %1517 = vmatprep.subr.bf16.mxu0 0
    %1518 = vmatpush2.bf16.msra.mxu0 0
    %1519 = vmatprep.subr.bf16.mxu0 0
    %1520 = vmatpush2.bf16.msra.mxu0 0
    %1521 = vmatprep.subr.bf16.mxu0 0
    %1522 = vmatpush2.bf16.msra.mxu0 0
    %1523 = vmatprep.subr.bf16.mxu0 0
    %1524 = vmatpush2.bf16.msra.mxu0 0
    %1525 = vmatprep.subr.bf16.mxu0 0
    %1526 = vmatpush2.bf16.msra.mxu0 0
    %1527 = vmatprep.subr.bf16.mxu0 0
    %1528 = vmatpush2.bf16.msra.mxu0 0
    %1529 = vmatprep.mubr.bf16.mxu0 0
    %1530 = vmatmul.mubr.bf16.gmra.mxu0 %v251
    %v1531 = vpop.f32.mrf.mxu0
    %v1532 = vadd.f32 0.0, %v1531
    %v1533 = vpop.f32.mrf.mxu0
    %v1534 = vpop.f32.mrf.mxu0
    %v1535 = vadd.f32 0.0, %v1534
    %v1536 = vpop.f32.mrf.mxu0
    %1537 = vmatprep.mubr.bf16.mxu0 0
    %1538 = vmatmul.mubr.bf16.gmra.mxu0 %v254
    %v1539 = vpop.f32.mrf.mxu0
    %v1540 = vadd.f32 0.0, %v1539
    %v1541 = vpop.f32.mrf.mxu0
    %v1542 = vpop.f32.mrf.mxu0
    %v1543 = vadd.f32 0.0, %v1542
    %v1544 = vpop.f32.mrf.mxu0
    %1545 = vdwg.mxu0
    %v1554 = vunpack.c.l.b16 %v167
    %v1555 = vunpack.c.l.b16 %v168
    %v1556 = vunpack.c.l.b16 %v169
    %v1557 = vunpack.c.l.b16 %v170
    %v1558 = vunpack.c.l.b16 %v171
    %v1559 = vunpack.c.l.b16 %v172
    %v1560 = vunpack.c.l.b16 %v173
    %v1561 = vunpack.c.l.b16 %v174
    %v1562 = vpack.c.b16 %v1555, %v1554
    %v1563 = vpack.c.b16 %v1557, %v1556
    %v1564 = vpack.c.b16 %v1559, %v1558
    %v1565 = vpack.c.b16 %v1561, %v1560
    %1570 = vmatprep.subr.bf16.mxu0 0
    %1571 = vmatpush1.bf16.msra.mxu0 0
    %1572 = vmatprep.subr.bf16.mxu0 0
    %1573 = vmatpush1.bf16.msra.mxu0 0
    %1574 = vmatprep.subr.bf16.mxu0 0
    %1575 = vmatpush1.bf16.msra.mxu0 0
    %1576 = vmatprep.subr.bf16.mxu0 0
    %1577 = vmatpush1.bf16.msra.mxu0 0
    %1578 = vmatprep.subr.bf16.mxu0 0
    %1579 = vmatpush1.bf16.msra.mxu0 %v1565
    %1580 = vmatprep.subr.bf16.mxu0 0
    %1581 = vmatpush1.bf16.msra.mxu0 %v1564
    %1582 = vmatprep.subr.bf16.mxu0 0
    %1583 = vmatpush1.bf16.msra.mxu0 %v1563
    %1584 = vmatprep.subr.bf16.mxu0 0
    %1585 = vmatpush1.bf16.msra.mxu0 %v1562
    %1586 = vmatprep.subr.bf16.mxu0 0
    %1587 = vmatpush2.bf16.msra.mxu0 0
    %1588 = vmatprep.subr.bf16.mxu0 0
    %1589 = vmatpush2.bf16.msra.mxu0 0
    %1590 = vmatprep.subr.bf16.mxu0 0
    %1591 = vmatpush2.bf16.msra.mxu0 0
    %1592 = vmatprep.subr.bf16.mxu0 0
    %1593 = vmatpush2.bf16.msra.mxu0 0
    %1594 = vmatprep.subr.bf16.mxu0 0
    %1595 = vmatpush2.bf16.msra.mxu0 0
    %1596 = vmatprep.subr.bf16.mxu0 0
    %1597 = vmatpush2.bf16.msra.mxu0 0
    %1598 = vmatprep.subr.bf16.mxu0 0
    %1599 = vmatpush2.bf16.msra.mxu0 0
    %1600 = vmatprep.subr.bf16.mxu0 0
    %1601 = vmatpush2.bf16.msra.mxu0 0
    %1602 = vmatprep.mubr.bf16.mxu0 0
    %1603 = vmatmul.mubr.bf16.gmra.mxu0 %v251
    %v1604 = vpop.f32.mrf.mxu0
    %v1605 = vadd.f32 0.0, %v1604
    %v1606 = vpop.f32.mrf.mxu0
    %v1607 = vpop.f32.mrf.mxu0
    %v1608 = vadd.f32 0.0, %v1607
    %v1609 = vpop.f32.mrf.mxu0
    %1610 = vmatprep.mubr.bf16.mxu0 0
    %1611 = vmatmul.mubr.bf16.gmra.mxu0 %v254
    %v1612 = vpop.f32.mrf.mxu0
    %v1613 = vadd.f32 0.0, %v1612
    %v1614 = vpop.f32.mrf.mxu0
    %v1615 = vpop.f32.mrf.mxu0
    %v1616 = vadd.f32 0.0, %v1615
    %v1617 = vpop.f32.mrf.mxu0
    %1618 = vdwg.mxu0
    %v1627 = vunpack.c.l.b16 %v175
    %v1628 = vunpack.c.l.b16 %v176
    %v1629 = vunpack.c.l.b16 %v177
    %v1630 = vunpack.c.l.b16 %v178
    %v1631 = vunpack.c.l.b16 %v179
    %v1632 = vunpack.c.l.b16 %v180
    %v1633 = vunpack.c.l.b16 %v181
    %v1634 = vunpack.c.l.b16 %v182
    %v1635 = vpack.c.b16 %v1628, %v1627
    %v1636 = vpack.c.b16 %v1630, %v1629
    %v1637 = vpack.c.b16 %v1632, %v1631
    %v1638 = vpack.c.b16 %v1634, %v1633
    %1643 = vmatprep.subr.bf16.mxu0 0
    %1644 = vmatpush1.bf16.msra.mxu0 0
    %1645 = vmatprep.subr.bf16.mxu0 0
    %1646 = vmatpush1.bf16.msra.mxu0 0
    %1647 = vmatprep.subr.bf16.mxu0 0
    %1648 = vmatpush1.bf16.msra.mxu0 0
    %1649 = vmatprep.subr.bf16.mxu0 0
    %1650 = vmatpush1.bf16.msra.mxu0 0
    %1651 = vmatprep.subr.bf16.mxu0 0
    %1652 = vmatpush1.bf16.msra.mxu0 %v1638
    %1653 = vmatprep.subr.bf16.mxu0 0
    %1654 = vmatpush1.bf16.msra.mxu0 %v1637
    %1655 = vmatprep.subr.bf16.mxu0 0
    %1656 = vmatpush1.bf16.msra.mxu0 %v1636
    %1657 = vmatprep.subr.bf16.mxu0 0
    %1658 = vmatpush1.bf16.msra.mxu0 %v1635
    %1659 = vmatprep.subr.bf16.mxu0 0
    %1660 = vmatpush2.bf16.msra.mxu0 0
    %1661 = vmatprep.subr.bf16.mxu0 0
    %1662 = vmatpush2.bf16.msra.mxu0 0
    %1663 = vmatprep.subr.bf16.mxu0 0
    %1664 = vmatpush2.bf16.msra.mxu0 0
    %1665 = vmatprep.subr.bf16.mxu0 0
    %1666 = vmatpush2.bf16.msra.mxu0 0
    %1667 = vmatprep.subr.bf16.mxu0 0
    %1668 = vmatpush2.bf16.msra.mxu0 0
    %1669 = vmatprep.subr.bf16.mxu0 0
    %1670 = vmatpush2.bf16.msra.mxu0 0
    %1671 = vmatprep.subr.bf16.mxu0 0
    %1672 = vmatpush2.bf16.msra.mxu0 0
    %1673 = vmatprep.subr.bf16.mxu0 0
    %1674 = vmatpush2.bf16.msra.mxu0 0
    %1675 = vmatprep.mubr.bf16.mxu0 0
    %1676 = vmatmul.mubr.bf16.gmra.mxu0 %v251
    %v1677 = vpop.f32.mrf.mxu0
    %v1678 = vadd.f32 0.0, %v1677
    %v1679 = vpop.f32.mrf.mxu0
    %v1680 = vpop.f32.mrf.mxu0
    %v1681 = vadd.f32 0.0, %v1680
    %v1682 = vpop.f32.mrf.mxu0
    %1683 = vmatprep.mubr.bf16.mxu0 0
    %1684 = vmatmul.mubr.bf16.gmra.mxu0 %v254
    %v1685 = vpop.f32.mrf.mxu0
    %v1686 = vadd.f32 0.0, %v1685
    %v1687 = vpop.f32.mrf.mxu0
    %v1688 = vpop.f32.mrf.mxu0
    %v1689 = vadd.f32 0.0, %v1688
    %v1690 = vpop.f32.mrf.mxu0
    %1691 = vdwg.mxu0
    %v1700 = vunpack.c.l.b16 %v183
    %v1701 = vunpack.c.l.b16 %v184
    %v1702 = vunpack.c.l.b16 %v185
    %v1703 = vunpack.c.l.b16 %v186
    %v1704 = vunpack.c.l.b16 %v187
    %v1705 = vunpack.c.l.b16 %v188
    %v1706 = vunpack.c.l.b16 %v189
    %v1707 = vunpack.c.l.b16 %v190
    %v1708 = vpack.c.b16 %v1701, %v1700
    %v1709 = vpack.c.b16 %v1703, %v1702
    %v1710 = vpack.c.b16 %v1705, %v1704
    %v1711 = vpack.c.b16 %v1707, %v1706
    %1716 = vmatprep.subr.bf16.mxu0 0
    %1717 = vmatpush1.bf16.msra.mxu0 0
    %1718 = vmatprep.subr.bf16.mxu0 0
    %1719 = vmatpush1.bf16.msra.mxu0 0
    %1720 = vmatprep.subr.bf16.mxu0 0
    %1721 = vmatpush1.bf16.msra.mxu0 0
    %1722 = vmatprep.subr.bf16.mxu0 0
    %1723 = vmatpush1.bf16.msra.mxu0 0
    %1724 = vmatprep.subr.bf16.mxu0 0
    %1725 = vmatpush1.bf16.msra.mxu0 %v1711
    %1726 = vmatprep.subr.bf16.mxu0 0
    %1727 = vmatpush1.bf16.msra.mxu0 %v1710
    %1728 = vmatprep.subr.bf16.mxu0 0
    %1729 = vmatpush1.bf16.msra.mxu0 %v1709
    %1730 = vmatprep.subr.bf16.mxu0 0
    %1731 = vmatpush1.bf16.msra.mxu0 %v1708
    %1732 = vmatprep.subr.bf16.mxu0 0
    %1733 = vmatpush2.bf16.msra.mxu0 0
    %1734 = vmatprep.subr.bf16.mxu0 0
    %1735 = vmatpush2.bf16.msra.mxu0 0
    %1736 = vmatprep.subr.bf16.mxu0 0
    %1737 = vmatpush2.bf16.msra.mxu0 0
    %1738 = vmatprep.subr.bf16.mxu0 0
    %1739 = vmatpush2.bf16.msra.mxu0 0
    %1740 = vmatprep.subr.bf16.mxu0 0
    %1741 = vmatpush2.bf16.msra.mxu0 0
    %1742 = vmatprep.subr.bf16.mxu0 0
    %1743 = vmatpush2.bf16.msra.mxu0 0
    %1744 = vmatprep.subr.bf16.mxu0 0
    %1745 = vmatpush2.bf16.msra.mxu0 0
    %1746 = vmatprep.subr.bf16.mxu0 0
    %1747 = vmatpush2.bf16.msra.mxu0 0
    %1748 = vmatprep.mubr.bf16.mxu0 0
    %1749 = vmatmul.mubr.bf16.gmra.mxu0 %v251
    %v1750 = vpop.f32.mrf.mxu0
    %v1751 = vadd.f32 0.0, %v1750
    %v1752 = vpop.f32.mrf.mxu0
    %v1753 = vpop.f32.mrf.mxu0
    %v1754 = vadd.f32 0.0, %v1753
    %v1755 = vpop.f32.mrf.mxu0
    %1756 = vmatprep.mubr.bf16.mxu0 0
    %1757 = vmatmul.mubr.bf16.gmra.mxu0 %v254
    %v1758 = vpop.f32.mrf.mxu0
    %v1759 = vadd.f32 0.0, %v1758
    %v1760 = vpop.f32.mrf.mxu0
    %v1761 = vpop.f32.mrf.mxu0
    %v1762 = vadd.f32 0.0, %v1761
    %v1763 = vpop.f32.mrf.mxu0
    %1764 = vdwg.mxu0
    %v1773 = vunpack.c.l.b16 %v191
    %v1774 = vunpack.c.l.b16 %v192
    %v1775 = vunpack.c.l.b16 %v193
    %v1776 = vunpack.c.l.b16 %v194
    %v1777 = vunpack.c.l.b16 %v195
    %v1778 = vunpack.c.l.b16 %v196
    %v1779 = vunpack.c.l.b16 %v197
    %v1780 = vunpack.c.l.b16 %v198
    %v1781 = vpack.c.b16 %v1774, %v1773
    %v1782 = vpack.c.b16 %v1776, %v1775
    %v1783 = vpack.c.b16 %v1778, %v1777
    %v1784 = vpack.c.b16 %v1780, %v1779
    %1789 = vmatprep.subr.bf16.mxu0 0
    %1790 = vmatpush1.bf16.msra.mxu0 0
    %1791 = vmatprep.subr.bf16.mxu0 0
    %1792 = vmatpush1.bf16.msra.mxu0 0
    %1793 = vmatprep.subr.bf16.mxu0 0
    %1794 = vmatpush1.bf16.msra.mxu0 0
    %1795 = vmatprep.subr.bf16.mxu0 0
    %1796 = vmatpush1.bf16.msra.mxu0 0
    %1797 = vmatprep.subr.bf16.mxu0 0
    %1798 = vmatpush1.bf16.msra.mxu0 %v1784
    %1799 = vmatprep.subr.bf16.mxu0 0
    %1800 = vmatpush1.bf16.msra.mxu0 %v1783
    %1801 = vmatprep.subr.bf16.mxu0 0
    %1802 = vmatpush1.bf16.msra.mxu0 %v1782
    %1803 = vmatprep.subr.bf16.mxu0 0
    %1804 = vmatpush1.bf16.msra.mxu0 %v1781
    %1805 = vmatprep.subr.bf16.mxu0 0
    %1806 = vmatpush2.bf16.msra.mxu0 0
    %1807 = vmatprep.subr.bf16.mxu0 0
    %1808 = vmatpush2.bf16.msra.mxu0 0
    %1809 = vmatprep.subr.bf16.mxu0 0
    %1810 = vmatpush2.bf16.msra.mxu0 0
    %1811 = vmatprep.subr.bf16.mxu0 0
    %1812 = vmatpush2.bf16.msra.mxu0 0
    %1813 = vmatprep.subr.bf16.mxu0 0
    %1814 = vmatpush2.bf16.msra.mxu0 0
    %1815 = vmatprep.subr.bf16.mxu0 0
    %1816 = vmatpush2.bf16.msra.mxu0 0
    %1817 = vmatprep.subr.bf16.mxu0 0
    %1818 = vmatpush2.bf16.msra.mxu0 0
    %1819 = vmatprep.subr.bf16.mxu0 0
    %1820 = vmatpush2.bf16.msra.mxu0 0
    %1821 = vmatprep.mubr.bf16.mxu0 0
    %1822 = vmatmul.mubr.bf16.gmra.mxu0 %v251
    %v1823 = vpop.f32.mrf.mxu0
    %v1824 = vadd.f32 0.0, %v1823
    %v1825 = vpop.f32.mrf.mxu0
    %v1826 = vpop.f32.mrf.mxu0
    %v1827 = vadd.f32 0.0, %v1826
    %v1828 = vpop.f32.mrf.mxu0
    %1829 = vmatprep.mubr.bf16.mxu0 0
    %1830 = vmatmul.mubr.bf16.gmra.mxu0 %v254
    %v1831 = vpop.f32.mrf.mxu0
    %v1832 = vadd.f32 0.0, %v1831
    %v1833 = vpop.f32.mrf.mxu0
    %v1834 = vpop.f32.mrf.mxu0
    %v1835 = vadd.f32 0.0, %v1834
    %v1836 = vpop.f32.mrf.mxu0
    %1837 = vdwg.mxu0
    %v1846 = vunpack.c.l.b16 %v199
    %v1847 = vunpack.c.l.b16 %v200
    %v1848 = vunpack.c.l.b16 %v201
    %v1849 = vunpack.c.l.b16 %v202
    %v1850 = vunpack.c.l.b16 %v203
    %v1851 = vunpack.c.l.b16 %v204
    %v1852 = vunpack.c.l.b16 %v205
    %v1853 = vunpack.c.l.b16 %v206
    %v1854 = vpack.c.b16 %v1847, %v1846
    %v1855 = vpack.c.b16 %v1849, %v1848
    %v1856 = vpack.c.b16 %v1851, %v1850
    %v1857 = vpack.c.b16 %v1853, %v1852
    %1862 = vmatprep.subr.bf16.mxu0 0
    %1863 = vmatpush1.bf16.msra.mxu0 0
    %1864 = vmatprep.subr.bf16.mxu0 0
    %1865 = vmatpush1.bf16.msra.mxu0 0
    %1866 = vmatprep.subr.bf16.mxu0 0
    %1867 = vmatpush1.bf16.msra.mxu0 0
    %1868 = vmatprep.subr.bf16.mxu0 0
    %1869 = vmatpush1.bf16.msra.mxu0 0
    %1870 = vmatprep.subr.bf16.mxu0 0
    %1871 = vmatpush1.bf16.msra.mxu0 %v1857
    %1872 = vmatprep.subr.bf16.mxu0 0
    %1873 = vmatpush1.bf16.msra.mxu0 %v1856
    %1874 = vmatprep.subr.bf16.mxu0 0
    %1875 = vmatpush1.bf16.msra.mxu0 %v1855
    %1876 = vmatprep.subr.bf16.mxu0 0
    %1877 = vmatpush1.bf16.msra.mxu0 %v1854
    %1878 = vmatprep.subr.bf16.mxu0 0
    %1879 = vmatpush2.bf16.msra.mxu0 0
    %1880 = vmatprep.subr.bf16.mxu0 0
    %1881 = vmatpush2.bf16.msra.mxu0 0
    %1882 = vmatprep.subr.bf16.mxu0 0
    %1883 = vmatpush2.bf16.msra.mxu0 0
    %1884 = vmatprep.subr.bf16.mxu0 0
    %1885 = vmatpush2.bf16.msra.mxu0 0
    %1886 = vmatprep.subr.bf16.mxu0 0
    %1887 = vmatpush2.bf16.msra.mxu0 0
    %1888 = vmatprep.subr.bf16.mxu0 0
    %1889 = vmatpush2.bf16.msra.mxu0 0
    %1890 = vmatprep.subr.bf16.mxu0 0
    %1891 = vmatpush2.bf16.msra.mxu0 0
    %1892 = vmatprep.subr.bf16.mxu0 0
    %1893 = vmatpush2.bf16.msra.mxu0 0
    %1894 = vmatprep.mubr.bf16.mxu0 0
    %1895 = vmatmul.mubr.bf16.gmra.mxu0 %v251
    %v1896 = vpop.f32.mrf.mxu0
    %v1897 = vadd.f32 0.0, %v1896
    %v1898 = vpop.f32.mrf.mxu0
    %v1899 = vpop.f32.mrf.mxu0
    %v1900 = vadd.f32 0.0, %v1899
    %v1901 = vpop.f32.mrf.mxu0
    %1902 = vmatprep.mubr.bf16.mxu0 0
    %1903 = vmatmul.mubr.bf16.gmra.mxu0 %v254
    %v1904 = vpop.f32.mrf.mxu0
    %v1905 = vadd.f32 0.0, %v1904
    %v1906 = vpop.f32.mrf.mxu0
    %v1907 = vpop.f32.mrf.mxu0
    %v1908 = vadd.f32 0.0, %v1907
    %v1909 = vpop.f32.mrf.mxu0
    %1910 = vdwg.mxu0
    %v1919 = vunpack.c.l.b16 %v207
    %v1920 = vunpack.c.l.b16 %v208
    %v1921 = vunpack.c.l.b16 %v209
    %v1922 = vunpack.c.l.b16 %v210
    %v1923 = vunpack.c.l.b16 %v211
    %v1924 = vunpack.c.l.b16 %v212
    %v1925 = vunpack.c.l.b16 %v213
    %v1926 = vunpack.c.l.b16 %v214
    %v1927 = vpack.c.b16 %v1920, %v1919
    %v1928 = vpack.c.b16 %v1922, %v1921
    %v1929 = vpack.c.b16 %v1924, %v1923
    %v1930 = vpack.c.b16 %v1926, %v1925
    %1935 = vmatprep.subr.bf16.mxu0 0
    %1936 = vmatpush1.bf16.msra.mxu0 0
    %1937 = vmatprep.subr.bf16.mxu0 0
    %1938 = vmatpush1.bf16.msra.mxu0 0
    %1939 = vmatprep.subr.bf16.mxu0 0
    %1940 = vmatpush1.bf16.msra.mxu0 0
    %1941 = vmatprep.subr.bf16.mxu0 0
    %1942 = vmatpush1.bf16.msra.mxu0 0
    %1943 = vmatprep.subr.bf16.mxu0 0
    %1944 = vmatpush1.bf16.msra.mxu0 %v1930
    %1945 = vmatprep.subr.bf16.mxu0 0
    %1946 = vmatpush1.bf16.msra.mxu0 %v1929
    %1947 = vmatprep.subr.bf16.mxu0 0
    %1948 = vmatpush1.bf16.msra.mxu0 %v1928
    %1949 = vmatprep.subr.bf16.mxu0 0
    %1950 = vmatpush1.bf16.msra.mxu0 %v1927
    %1951 = vmatprep.subr.bf16.mxu0 0
    %1952 = vmatpush2.bf16.msra.mxu0 0
    %1953 = vmatprep.subr.bf16.mxu0 0
    %1954 = vmatpush2.bf16.msra.mxu0 0
    %1955 = vmatprep.subr.bf16.mxu0 0
    %1956 = vmatpush2.bf16.msra.mxu0 0
    %1957 = vmatprep.subr.bf16.mxu0 0
    %1958 = vmatpush2.bf16.msra.mxu0 0
    %1959 = vmatprep.subr.bf16.mxu0 0
    %1960 = vmatpush2.bf16.msra.mxu0 0
    %1961 = vmatprep.subr.bf16.mxu0 0
    %1962 = vmatpush2.bf16.msra.mxu0 0
    %1963 = vmatprep.subr.bf16.mxu0 0
    %1964 = vmatpush2.bf16.msra.mxu0 0
    %1965 = vmatprep.subr.bf16.mxu0 0
    %1966 = vmatpush2.bf16.msra.mxu0 0
    %1967 = vmatprep.mubr.bf16.mxu0 0
    %1968 = vmatmul.mubr.bf16.gmra.mxu0 %v251
    %v1969 = vpop.f32.mrf.mxu0
    %v1970 = vadd.f32 0.0, %v1969
    %v1971 = vpop.f32.mrf.mxu0
    %v1972 = vpop.f32.mrf.mxu0
    %v1973 = vadd.f32 0.0, %v1972
    %v1974 = vpop.f32.mrf.mxu0
    %1975 = vmatprep.mubr.bf16.mxu0 0
    %1976 = vmatmul.mubr.bf16.gmra.mxu0 %v254
    %v1977 = vpop.f32.mrf.mxu0
    %v1978 = vadd.f32 0.0, %v1977
    %v1979 = vpop.f32.mrf.mxu0
    %v1980 = vpop.f32.mrf.mxu0
    %v1981 = vadd.f32 0.0, %v1980
    %v1982 = vpop.f32.mrf.mxu0
    %1983 = vdwg.mxu0
    %vm1984 = vcmask 64512
    %v1986 = vsel %vm1984, %v291, 0
    %v1989 = vsel %vm1984, %v294, 0
    %v1992 = vsel %vm1984, %v875, 0
    %v1995 = vsel %vm1984, %v878, 0
    %1997 = vmatprep.subr.mxu0 0.0
    %1998 = vmatpush1.xpose.msra.mxu0 0.0
    %1999 = vmatprep.subr.mxu0 0.0
    %2000 = vmatpush1.xpose.msra.mxu0 0.0
    %2001 = vmatprep.subr.mxu0 0.0
    %2002 = vmatpush1.xpose.msra.mxu0 0.0
    %2003 = vmatprep.subr.mxu0 0.0
    %2004 = vmatpush1.xpose.msra.mxu0 0.0
    %2005 = vmatprep.subr.mxu0 0.0
    %2006 = vmatpush1.xpose.msra.mxu0 0.0
    %2007 = vmatprep.subr.mxu0 0.0
    %2008 = vmatpush1.xpose.msra.mxu0 0.0
    %2009 = vmatprep.subr.mxu0 0.0
    %2010 = vmatpush1.xpose.msra.mxu0 0.0
    %2011 = vmatprep.subr.mxu0 0.0
    %2012 = vmatpush1.xpose.msra.mxu0 0.0
    %2013 = vmatprep.subr.mxu0 0.0
    %2014 = vmatpush1.xpose.msra.mxu0 0.0
    %2015 = vmatprep.subr.mxu0 0.0
    %2016 = vmatpush1.xpose.msra.mxu0 0.0
    %2017 = vmatprep.subr.mxu0 0.0
    %2018 = vmatpush1.xpose.msra.mxu0 0.0
    %2019 = vmatprep.subr.mxu0 0.0
    %2020 = vmatpush1.xpose.msra.mxu0 0.0
    %2021 = vmatprep.subr.mxu0 0.0
    %2022 = vmatpush1.xpose.msra.mxu0 0.0
    %2023 = vmatprep.subr.mxu0 0.0
    %2024 = vmatpush1.xpose.msra.mxu0 0.0
    %2025 = vmatprep.subr.mxu0 0.0
    %2026 = vmatpush1.xpose.msra.mxu0 %v1995
    %2027 = vmatprep.subr.mxu0 0.0
    %2028 = vmatpush1.xpose.msra.mxu0 %v1992
    %2029 = vmatprep.subr.mxu0 0.0
    %2030 = vmatpush2.xpose.msra.mxu0 0.0
    %2031 = vmatprep.subr.mxu0 0.0
    %2032 = vmatpush2.xpose.msra.mxu0 0.0
    %2033 = vmatprep.subr.mxu0 0.0
    %2034 = vmatpush2.xpose.msra.mxu0 0.0
    %2035 = vmatprep.subr.mxu0 0.0
    %2036 = vmatpush2.xpose.msra.mxu0 0.0
    %2037 = vmatprep.subr.mxu0 0.0
    %2038 = vmatpush2.xpose.msra.mxu0 0.0
    %2039 = vmatprep.subr.mxu0 0.0
    %2040 = vmatpush2.xpose.msra.mxu0 0.0
    %2041 = vmatprep.subr.mxu0 0.0
    %2042 = vmatpush2.xpose.msra.mxu0 0.0
    %2043 = vmatprep.subr.mxu0 0.0
    %2044 = vmatpush2.xpose.msra.mxu0 0.0
    %2045 = vmatprep.subr.mxu0 0.0
    %2046 = vmatpush2.xpose.msra.mxu0 0.0
    %2047 = vmatprep.subr.mxu0 0.0
    %2048 = vmatpush2.xpose.msra.mxu0 0.0
    %2049 = vmatprep.subr.mxu0 0.0
    %2050 = vmatpush2.xpose.msra.mxu0 0.0
    %2051 = vmatprep.subr.mxu0 0.0
    %2052 = vmatpush2.xpose.msra.mxu0 0.0
    %2053 = vmatprep.subr.mxu0 0.0
    %2054 = vmatpush2.xpose.msra.mxu0 0.0
    %2055 = vmatprep.subr.mxu0 0.0
    %2056 = vmatpush2.xpose.msra.mxu0 0.0
    %2057 = vmatprep.subr.mxu0 0.0
    %2058 = vmatpush2.xpose.msra.mxu0 0.0
    %2059 = vmatprep.subr.mxu0 0.0
    %2060 = vmatpush2.xpose.msra.mxu0 0.0
    %2061 = vmatprep.mubr.f32.mxu0 0.0
    %2062 = vmatmul.mubr.f32.gmra.mxu0 %v1986
    %v2063 = vpop.f32.mrf.mxu0
    %v2064 = vadd.f32 0.0, %v2063
    %v2065 = vpop.f32.mrf.mxu0
    %2066 = vmatprep.mubr.f32.mxu0 0.0
    %2067 = vmatmul.mubr.f32.gmra.mxu0 %v1989
    %v2068 = vpop.f32.mrf.mxu0
    %v2069 = vadd.f32 0.0, %v2068
    %v2070 = vpop.f32.mrf.mxu0
    %2071 = vdwg.mxu0
    %v2073 = vsel %vm1984, %v299, 0
    %v2076 = vsel %vm1984, %v302, 0
    %v2079 = vsel %vm1984, %v883, 0
    %v2082 = vsel %vm1984, %v886, 0
    %2084 = vmatprep.subr.mxu0 0.0
    %2085 = vmatpush1.xpose.msra.mxu0 0.0
    %2086 = vmatprep.subr.mxu0 0.0
    %2087 = vmatpush1.xpose.msra.mxu0 0.0
    %2088 = vmatprep.subr.mxu0 0.0
    %2089 = vmatpush1.xpose.msra.mxu0 0.0
    %2090 = vmatprep.subr.mxu0 0.0
    %2091 = vmatpush1.xpose.msra.mxu0 0.0
    %2092 = vmatprep.subr.mxu0 0.0
    %2093 = vmatpush1.xpose.msra.mxu0 0.0
    %2094 = vmatprep.subr.mxu0 0.0
    %2095 = vmatpush1.xpose.msra.mxu0 0.0
    %2096 = vmatprep.subr.mxu0 0.0
    %2097 = vmatpush1.xpose.msra.mxu0 0.0
    %2098 = vmatprep.subr.mxu0 0.0
    %2099 = vmatpush1.xpose.msra.mxu0 0.0
    %2100 = vmatprep.subr.mxu0 0.0
    %2101 = vmatpush1.xpose.msra.mxu0 0.0
    %2102 = vmatprep.subr.mxu0 0.0
    %2103 = vmatpush1.xpose.msra.mxu0 0.0
    %2104 = vmatprep.subr.mxu0 0.0
    %2105 = vmatpush1.xpose.msra.mxu0 0.0
    %2106 = vmatprep.subr.mxu0 0.0
    %2107 = vmatpush1.xpose.msra.mxu0 0.0
    %2108 = vmatprep.subr.mxu0 0.0
    %2109 = vmatpush1.xpose.msra.mxu0 0.0
    %2110 = vmatprep.subr.mxu0 0.0
    %2111 = vmatpush1.xpose.msra.mxu0 0.0
    %2112 = vmatprep.subr.mxu0 0.0
    %2113 = vmatpush1.xpose.msra.mxu0 %v2082
    %2114 = vmatprep.subr.mxu0 0.0
    %2115 = vmatpush1.xpose.msra.mxu0 %v2079
    %2116 = vmatprep.subr.mxu0 0.0
    %2117 = vmatpush2.xpose.msra.mxu0 0.0
    %2118 = vmatprep.subr.mxu0 0.0
    %2119 = vmatpush2.xpose.msra.mxu0 0.0
    %2120 = vmatprep.subr.mxu0 0.0
    %2121 = vmatpush2.xpose.msra.mxu0 0.0
    %2122 = vmatprep.subr.mxu0 0.0
    %2123 = vmatpush2.xpose.msra.mxu0 0.0
    %2124 = vmatprep.subr.mxu0 0.0
    %2125 = vmatpush2.xpose.msra.mxu0 0.0
    %2126 = vmatprep.subr.mxu0 0.0
    %2127 = vmatpush2.xpose.msra.mxu0 0.0
    %2128 = vmatprep.subr.mxu0 0.0
    %2129 = vmatpush2.xpose.msra.mxu0 0.0
    %2130 = vmatprep.subr.mxu0 0.0
    %2131 = vmatpush2.xpose.msra.mxu0 0.0
    %2132 = vmatprep.subr.mxu0 0.0
    %2133 = vmatpush2.xpose.msra.mxu0 0.0
    %2134 = vmatprep.subr.mxu0 0.0
    %2135 = vmatpush2.xpose.msra.mxu0 0.0
    %2136 = vmatprep.subr.mxu0 0.0
    %2137 = vmatpush2.xpose.msra.mxu0 0.0
    %2138 = vmatprep.subr.mxu0 0.0
    %2139 = vmatpush2.xpose.msra.mxu0 0.0
    %2140 = vmatprep.subr.mxu0 0.0
    %2141 = vmatpush2.xpose.msra.mxu0 0.0
    %2142 = vmatprep.subr.mxu0 0.0
    %2143 = vmatpush2.xpose.msra.mxu0 0.0
    %2144 = vmatprep.subr.mxu0 0.0
    %2145 = vmatpush2.xpose.msra.mxu0 0.0
    %2146 = vmatprep.subr.mxu0 0.0
    %2147 = vmatpush2.xpose.msra.mxu0 0.0
    %2148 = vmatprep.mubr.f32.mxu0 0.0
    %2149 = vmatmul.mubr.f32.gmra.mxu0 %v2073
    %v2150 = vpop.f32.mrf.mxu0
    %v2151 = vadd.f32 0.0, %v2150
    %v2152 = vpop.f32.mrf.mxu0
    %2153 = vmatprep.mubr.f32.mxu0 0.0
    %2154 = vmatmul.mubr.f32.gmra.mxu0 %v2076
    %v2155 = vpop.f32.mrf.mxu0
    %v2156 = vadd.f32 0.0, %v2155
    %v2157 = vpop.f32.mrf.mxu0
    %2158 = vdwg.mxu0
    %v2160 = vsel %vm1984, %v364, 0
    %v2163 = vsel %vm1984, %v367, 0
    %v2166 = vsel %vm1984, %v948, 0
    %v2169 = vsel %vm1984, %v951, 0
    %2171 = vmatprep.subr.mxu0 0.0
    %2172 = vmatpush1.xpose.msra.mxu0 0.0
    %2173 = vmatprep.subr.mxu0 0.0
    %2174 = vmatpush1.xpose.msra.mxu0 0.0
    %2175 = vmatprep.subr.mxu0 0.0
    %2176 = vmatpush1.xpose.msra.mxu0 0.0
    %2177 = vmatprep.subr.mxu0 0.0
    %2178 = vmatpush1.xpose.msra.mxu0 0.0
    %2179 = vmatprep.subr.mxu0 0.0
    %2180 = vmatpush1.xpose.msra.mxu0 0.0
    %2181 = vmatprep.subr.mxu0 0.0
    %2182 = vmatpush1.xpose.msra.mxu0 0.0
    %2183 = vmatprep.subr.mxu0 0.0
    %2184 = vmatpush1.xpose.msra.mxu0 0.0
    %2185 = vmatprep.subr.mxu0 0.0
    %2186 = vmatpush1.xpose.msra.mxu0 0.0
    %2187 = vmatprep.subr.mxu0 0.0
    %2188 = vmatpush1.xpose.msra.mxu0 0.0
    %2189 = vmatprep.subr.mxu0 0.0
    %2190 = vmatpush1.xpose.msra.mxu0 0.0
    %2191 = vmatprep.subr.mxu0 0.0
    %2192 = vmatpush1.xpose.msra.mxu0 0.0
    %2193 = vmatprep.subr.mxu0 0.0
    %2194 = vmatpush1.xpose.msra.mxu0 0.0
    %2195 = vmatprep.subr.mxu0 0.0
    %2196 = vmatpush1.xpose.msra.mxu0 0.0
    %2197 = vmatprep.subr.mxu0 0.0
    %2198 = vmatpush1.xpose.msra.mxu0 0.0
    %2199 = vmatprep.subr.mxu0 0.0
    %2200 = vmatpush1.xpose.msra.mxu0 %v2169
    %2201 = vmatprep.subr.mxu0 0.0
    %2202 = vmatpush1.xpose.msra.mxu0 %v2166
    %2203 = vmatprep.subr.mxu0 0.0
    %2204 = vmatpush2.xpose.msra.mxu0 0.0
    %2205 = vmatprep.subr.mxu0 0.0
    %2206 = vmatpush2.xpose.msra.mxu0 0.0
    %2207 = vmatprep.subr.mxu0 0.0
    %2208 = vmatpush2.xpose.msra.mxu0 0.0
    %2209 = vmatprep.subr.mxu0 0.0
    %2210 = vmatpush2.xpose.msra.mxu0 0.0
    %2211 = vmatprep.subr.mxu0 0.0
    %2212 = vmatpush2.xpose.msra.mxu0 0.0
    %2213 = vmatprep.subr.mxu0 0.0
    %2214 = vmatpush2.xpose.msra.mxu0 0.0
    %2215 = vmatprep.subr.mxu0 0.0
    %2216 = vmatpush2.xpose.msra.mxu0 0.0
    %2217 = vmatprep.subr.mxu0 0.0
    %2218 = vmatpush2.xpose.msra.mxu0 0.0
    %2219 = vmatprep.subr.mxu0 0.0
    %2220 = vmatpush2.xpose.msra.mxu0 0.0
    %2221 = vmatprep.subr.mxu0 0.0
    %2222 = vmatpush2.xpose.msra.mxu0 0.0
    %2223 = vmatprep.subr.mxu0 0.0
    %2224 = vmatpush2.xpose.msra.mxu0 0.0
    %2225 = vmatprep.subr.mxu0 0.0
    %2226 = vmatpush2.xpose.msra.mxu0 0.0
    %2227 = vmatprep.subr.mxu0 0.0
    %2228 = vmatpush2.xpose.msra.mxu0 0.0
    %2229 = vmatprep.subr.mxu0 0.0
    %2230 = vmatpush2.xpose.msra.mxu0 0.0
    %2231 = vmatprep.subr.mxu0 0.0
    %2232 = vmatpush2.xpose.msra.mxu0 0.0
    %2233 = vmatprep.subr.mxu0 0.0
    %2234 = vmatpush2.xpose.msra.mxu0 0.0
    %2235 = vmatprep.mubr.f32.mxu0 0.0
    %2236 = vmatmul.mubr.f32.gmra.mxu0 %v2160
    %v2237 = vpop.f32.mrf.mxu0
    %v2238 = vadd.f32 0.0, %v2237
    %v2239 = vpop.f32.mrf.mxu0
    %2240 = vmatprep.mubr.f32.mxu0 0.0
    %2241 = vmatmul.mubr.f32.gmra.mxu0 %v2163
    %v2242 = vpop.f32.mrf.mxu0
    %v2243 = vadd.f32 0.0, %v2242
    %v2244 = vpop.f32.mrf.mxu0
    %2245 = vdwg.mxu0
    %v2247 = vsel %vm1984, %v372, 0
    %v2250 = vsel %vm1984, %v375, 0
    %v2253 = vsel %vm1984, %v956, 0
    %v2256 = vsel %vm1984, %v959, 0
    %2258 = vmatprep.subr.mxu0 0.0
    %2259 = vmatpush1.xpose.msra.mxu0 0.0
    %2260 = vmatprep.subr.mxu0 0.0
    %2261 = vmatpush1.xpose.msra.mxu0 0.0
    %2262 = vmatprep.subr.mxu0 0.0
    %2263 = vmatpush1.xpose.msra.mxu0 0.0
    %2264 = vmatprep.subr.mxu0 0.0
    %2265 = vmatpush1.xpose.msra.mxu0 0.0
    %2266 = vmatprep.subr.mxu0 0.0
    %2267 = vmatpush1.xpose.msra.mxu0 0.0
    %2268 = vmatprep.subr.mxu0 0.0
    %2269 = vmatpush1.xpose.msra.mxu0 0.0
    %2270 = vmatprep.subr.mxu0 0.0
    %2271 = vmatpush1.xpose.msra.mxu0 0.0
    %2272 = vmatprep.subr.mxu0 0.0
    %2273 = vmatpush1.xpose.msra.mxu0 0.0
    %2274 = vmatprep.subr.mxu0 0.0
    %2275 = vmatpush1.xpose.msra.mxu0 0.0
    %2276 = vmatprep.subr.mxu0 0.0
    %2277 = vmatpush1.xpose.msra.mxu0 0.0
    %2278 = vmatprep.subr.mxu0 0.0
    %2279 = vmatpush1.xpose.msra.mxu0 0.0
    %2280 = vmatprep.subr.mxu0 0.0
    %2281 = vmatpush1.xpose.msra.mxu0 0.0
    %2282 = vmatprep.subr.mxu0 0.0
    %2283 = vmatpush1.xpose.msra.mxu0 0.0
    %2284 = vmatprep.subr.mxu0 0.0
    %2285 = vmatpush1.xpose.msra.mxu0 0.0
    %2286 = vmatprep.subr.mxu0 0.0
    %2287 = vmatpush1.xpose.msra.mxu0 %v2256
    %2288 = vmatprep.subr.mxu0 0.0
    %2289 = vmatpush1.xpose.msra.mxu0 %v2253
    %2290 = vmatprep.subr.mxu0 0.0
    %2291 = vmatpush2.xpose.msra.mxu0 0.0
    %2292 = vmatprep.subr.mxu0 0.0
    %2293 = vmatpush2.xpose.msra.mxu0 0.0
    %2294 = vmatprep.subr.mxu0 0.0
    %2295 = vmatpush2.xpose.msra.mxu0 0.0
    %2296 = vmatprep.subr.mxu0 0.0
    %2297 = vmatpush2.xpose.msra.mxu0 0.0
    %2298 = vmatprep.subr.mxu0 0.0
    %2299 = vmatpush2.xpose.msra.mxu0 0.0
    %2300 = vmatprep.subr.mxu0 0.0
    %2301 = vmatpush2.xpose.msra.mxu0 0.0
    %2302 = vmatprep.subr.mxu0 0.0
    %2303 = vmatpush2.xpose.msra.mxu0 0.0
    %2304 = vmatprep.subr.mxu0 0.0
    %2305 = vmatpush2.xpose.msra.mxu0 0.0
    %2306 = vmatprep.subr.mxu0 0.0
    %2307 = vmatpush2.xpose.msra.mxu0 0.0
    %2308 = vmatprep.subr.mxu0 0.0
    %2309 = vmatpush2.xpose.msra.mxu0 0.0
    %2310 = vmatprep.subr.mxu0 0.0
    %2311 = vmatpush2.xpose.msra.mxu0 0.0
    %2312 = vmatprep.subr.mxu0 0.0
    %2313 = vmatpush2.xpose.msra.mxu0 0.0
    %2314 = vmatprep.subr.mxu0 0.0
    %2315 = vmatpush2.xpose.msra.mxu0 0.0
    %2316 = vmatprep.subr.mxu0 0.0
    %2317 = vmatpush2.xpose.msra.mxu0 0.0
    %2318 = vmatprep.subr.mxu0 0.0
    %2319 = vmatpush2.xpose.msra.mxu0 0.0
    %2320 = vmatprep.subr.mxu0 0.0
    %2321 = vmatpush2.xpose.msra.mxu0 0.0
    %2322 = vmatprep.mubr.f32.mxu0 0.0
    %2323 = vmatmul.mubr.f32.gmra.mxu0 %v2247
    %v2324 = vpop.f32.mrf.mxu0
    %v2325 = vadd.f32 0.0, %v2324
    %v2326 = vpop.f32.mrf.mxu0
    %2327 = vmatprep.mubr.f32.mxu0 0.0
    %2328 = vmatmul.mubr.f32.gmra.mxu0 %v2250
    %v2329 = vpop.f32.mrf.mxu0
    %v2330 = vadd.f32 0.0, %v2329
    %v2331 = vpop.f32.mrf.mxu0
    %2332 = vdwg.mxu0
    %v2334 = vsel %vm1984, %v437, 0
    %v2337 = vsel %vm1984, %v440, 0
    %v2340 = vsel %vm1984, %v1021, 0
    %v2343 = vsel %vm1984, %v1024, 0
    %2345 = vmatprep.subr.mxu0 0.0
    %2346 = vmatpush1.xpose.msra.mxu0 0.0
    %2347 = vmatprep.subr.mxu0 0.0
    %2348 = vmatpush1.xpose.msra.mxu0 0.0
    %2349 = vmatprep.subr.mxu0 0.0
    %2350 = vmatpush1.xpose.msra.mxu0 0.0
    %2351 = vmatprep.subr.mxu0 0.0
    %2352 = vmatpush1.xpose.msra.mxu0 0.0
    %2353 = vmatprep.subr.mxu0 0.0
    %2354 = vmatpush1.xpose.msra.mxu0 0.0
    %2355 = vmatprep.subr.mxu0 0.0
    %2356 = vmatpush1.xpose.msra.mxu0 0.0
    %2357 = vmatprep.subr.mxu0 0.0
    %2358 = vmatpush1.xpose.msra.mxu0 0.0
    %2359 = vmatprep.subr.mxu0 0.0
    %2360 = vmatpush1.xpose.msra.mxu0 0.0
    %2361 = vmatprep.subr.mxu0 0.0
    %2362 = vmatpush1.xpose.msra.mxu0 0.0
    %2363 = vmatprep.subr.mxu0 0.0
    %2364 = vmatpush1.xpose.msra.mxu0 0.0
    %2365 = vmatprep.subr.mxu0 0.0
    %2366 = vmatpush1.xpose.msra.mxu0 0.0
    %2367 = vmatprep.subr.mxu0 0.0
    %2368 = vmatpush1.xpose.msra.mxu0 0.0
    %2369 = vmatprep.subr.mxu0 0.0
    %2370 = vmatpush1.xpose.msra.mxu0 0.0
    %2371 = vmatprep.subr.mxu0 0.0
    %2372 = vmatpush1.xpose.msra.mxu0 0.0
    %2373 = vmatprep.subr.mxu0 0.0
    %2374 = vmatpush1.xpose.msra.mxu0 %v2343
    %2375 = vmatprep.subr.mxu0 0.0
    %2376 = vmatpush1.xpose.msra.mxu0 %v2340
    %2377 = vmatprep.subr.mxu0 0.0
    %2378 = vmatpush2.xpose.msra.mxu0 0.0
    %2379 = vmatprep.subr.mxu0 0.0
    %2380 = vmatpush2.xpose.msra.mxu0 0.0
    %2381 = vmatprep.subr.mxu0 0.0
    %2382 = vmatpush2.xpose.msra.mxu0 0.0
    %2383 = vmatprep.subr.mxu0 0.0
    %2384 = vmatpush2.xpose.msra.mxu0 0.0
    %2385 = vmatprep.subr.mxu0 0.0
    %2386 = vmatpush2.xpose.msra.mxu0 0.0
    %2387 = vmatprep.subr.mxu0 0.0
    %2388 = vmatpush2.xpose.msra.mxu0 0.0
    %2389 = vmatprep.subr.mxu0 0.0
    %2390 = vmatpush2.xpose.msra.mxu0 0.0
    %2391 = vmatprep.subr.mxu0 0.0
    %2392 = vmatpush2.xpose.msra.mxu0 0.0
    %2393 = vmatprep.subr.mxu0 0.0
    %2394 = vmatpush2.xpose.msra.mxu0 0.0
    %2395 = vmatprep.subr.mxu0 0.0
    %2396 = vmatpush2.xpose.msra.mxu0 0.0
    %2397 = vmatprep.subr.mxu0 0.0
    %2398 = vmatpush2.xpose.msra.mxu0 0.0
    %2399 = vmatprep.subr.mxu0 0.0
    %2400 = vmatpush2.xpose.msra.mxu0 0.0
    %2401 = vmatprep.subr.mxu0 0.0
    %2402 = vmatpush2.xpose.msra.mxu0 0.0
    %2403 = vmatprep.subr.mxu0 0.0
    %2404 = vmatpush2.xpose.msra.mxu0 0.0
    %2405 = vmatprep.subr.mxu0 0.0
    %2406 = vmatpush2.xpose.msra.mxu0 0.0
    %2407 = vmatprep.subr.mxu0 0.0
    %2408 = vmatpush2.xpose.msra.mxu0 0.0
    %2409 = vmatprep.mubr.f32.mxu0 0.0
    %2410 = vmatmul.mubr.f32.gmra.mxu0 %v2334
    %v2411 = vpop.f32.mrf.mxu0
    %v2412 = vadd.f32 0.0, %v2411
    %v2413 = vpop.f32.mrf.mxu0
    %2414 = vmatprep.mubr.f32.mxu0 0.0
    %2415 = vmatmul.mubr.f32.gmra.mxu0 %v2337
    %v2416 = vpop.f32.mrf.mxu0
    %v2417 = vadd.f32 0.0, %v2416
    %v2418 = vpop.f32.mrf.mxu0
    %2419 = vdwg.mxu0
    %v2421 = vsel %vm1984, %v445, 0
    %v2424 = vsel %vm1984, %v448, 0
    %v2427 = vsel %vm1984, %v1029, 0
    %v2430 = vsel %vm1984, %v1032, 0
    %2432 = vmatprep.subr.mxu0 0.0
    %2433 = vmatpush1.xpose.msra.mxu0 0.0
    %2434 = vmatprep.subr.mxu0 0.0
    %2435 = vmatpush1.xpose.msra.mxu0 0.0
    %2436 = vmatprep.subr.mxu0 0.0
    %2437 = vmatpush1.xpose.msra.mxu0 0.0
    %2438 = vmatprep.subr.mxu0 0.0
    %2439 = vmatpush1.xpose.msra.mxu0 0.0
    %2440 = vmatprep.subr.mxu0 0.0
    %2441 = vmatpush1.xpose.msra.mxu0 0.0
    %2442 = vmatprep.subr.mxu0 0.0
    %2443 = vmatpush1.xpose.msra.mxu0 0.0
    %2444 = vmatprep.subr.mxu0 0.0
    %2445 = vmatpush1.xpose.msra.mxu0 0.0
    %2446 = vmatprep.subr.mxu0 0.0
    %2447 = vmatpush1.xpose.msra.mxu0 0.0
    %2448 = vmatprep.subr.mxu0 0.0
    %2449 = vmatpush1.xpose.msra.mxu0 0.0
    %2450 = vmatprep.subr.mxu0 0.0
    %2451 = vmatpush1.xpose.msra.mxu0 0.0
    %2452 = vmatprep.subr.mxu0 0.0
    %2453 = vmatpush1.xpose.msra.mxu0 0.0
    %2454 = vmatprep.subr.mxu0 0.0
    %2455 = vmatpush1.xpose.msra.mxu0 0.0
    %2456 = vmatprep.subr.mxu0 0.0
    %2457 = vmatpush1.xpose.msra.mxu0 0.0
    %2458 = vmatprep.subr.mxu0 0.0
    %2459 = vmatpush1.xpose.msra.mxu0 0.0
    %2460 = vmatprep.subr.mxu0 0.0
    %2461 = vmatpush1.xpose.msra.mxu0 %v2430
    %2462 = vmatprep.subr.mxu0 0.0
    %2463 = vmatpush1.xpose.msra.mxu0 %v2427
    %2464 = vmatprep.subr.mxu0 0.0
    %2465 = vmatpush2.xpose.msra.mxu0 0.0
    %2466 = vmatprep.subr.mxu0 0.0
    %2467 = vmatpush2.xpose.msra.mxu0 0.0
    %2468 = vmatprep.subr.mxu0 0.0
    %2469 = vmatpush2.xpose.msra.mxu0 0.0
    %2470 = vmatprep.subr.mxu0 0.0
    %2471 = vmatpush2.xpose.msra.mxu0 0.0
    %2472 = vmatprep.subr.mxu0 0.0
    %2473 = vmatpush2.xpose.msra.mxu0 0.0
    %2474 = vmatprep.subr.mxu0 0.0
    %2475 = vmatpush2.xpose.msra.mxu0 0.0
    %2476 = vmatprep.subr.mxu0 0.0
    %2477 = vmatpush2.xpose.msra.mxu0 0.0
    %2478 = vmatprep.subr.mxu0 0.0
    %2479 = vmatpush2.xpose.msra.mxu0 0.0
    %2480 = vmatprep.subr.mxu0 0.0
    %2481 = vmatpush2.xpose.msra.mxu0 0.0
    %2482 = vmatprep.subr.mxu0 0.0
    %2483 = vmatpush2.xpose.msra.mxu0 0.0
    %2484 = vmatprep.subr.mxu0 0.0
    %2485 = vmatpush2.xpose.msra.mxu0 0.0
    %2486 = vmatprep.subr.mxu0 0.0
    %2487 = vmatpush2.xpose.msra.mxu0 0.0
    %2488 = vmatprep.subr.mxu0 0.0
    %2489 = vmatpush2.xpose.msra.mxu0 0.0
    %2490 = vmatprep.subr.mxu0 0.0
    %2491 = vmatpush2.xpose.msra.mxu0 0.0
    %2492 = vmatprep.subr.mxu0 0.0
    %2493 = vmatpush2.xpose.msra.mxu0 0.0
    %2494 = vmatprep.subr.mxu0 0.0
    %2495 = vmatpush2.xpose.msra.mxu0 0.0
    %2496 = vmatprep.mubr.f32.mxu0 0.0
    %2497 = vmatmul.mubr.f32.gmra.mxu0 %v2421
    %v2498 = vpop.f32.mrf.mxu0
    %v2499 = vadd.f32 0.0, %v2498
    %v2500 = vpop.f32.mrf.mxu0
    %2501 = vmatprep.mubr.f32.mxu0 0.0
    %2502 = vmatmul.mubr.f32.gmra.mxu0 %v2424
    %v2503 = vpop.f32.mrf.mxu0
    %v2504 = vadd.f32 0.0, %v2503
    %v2505 = vpop.f32.mrf.mxu0
    %2506 = vdwg.mxu0
    %v2508 = vsel %vm1984, %v510, 0
    %v2511 = vsel %vm1984, %v513, 0
    %v2514 = vsel %vm1984, %v1094, 0
    %v2517 = vsel %vm1984, %v1097, 0
    %2519 = vmatprep.subr.mxu0 0.0
    %2520 = vmatpush1.xpose.msra.mxu0 0.0
    %2521 = vmatprep.subr.mxu0 0.0
    %2522 = vmatpush1.xpose.msra.mxu0 0.0
    %2523 = vmatprep.subr.mxu0 0.0
    %2524 = vmatpush1.xpose.msra.mxu0 0.0
    %2525 = vmatprep.subr.mxu0 0.0
    %2526 = vmatpush1.xpose.msra.mxu0 0.0
    %2527 = vmatprep.subr.mxu0 0.0
    %2528 = vmatpush1.xpose.msra.mxu0 0.0
    %2529 = vmatprep.subr.mxu0 0.0
    %2530 = vmatpush1.xpose.msra.mxu0 0.0
    %2531 = vmatprep.subr.mxu0 0.0
    %2532 = vmatpush1.xpose.msra.mxu0 0.0
    %2533 = vmatprep.subr.mxu0 0.0
    %2534 = vmatpush1.xpose.msra.mxu0 0.0
    %2535 = vmatprep.subr.mxu0 0.0
    %2536 = vmatpush1.xpose.msra.mxu0 0.0
    %2537 = vmatprep.subr.mxu0 0.0
    %2538 = vmatpush1.xpose.msra.mxu0 0.0
    %2539 = vmatprep.subr.mxu0 0.0
    %2540 = vmatpush1.xpose.msra.mxu0 0.0
    %2541 = vmatprep.subr.mxu0 0.0
    %2542 = vmatpush1.xpose.msra.mxu0 0.0
    %2543 = vmatprep.subr.mxu0 0.0
    %2544 = vmatpush1.xpose.msra.mxu0 0.0
    %2545 = vmatprep.subr.mxu0 0.0
    %2546 = vmatpush1.xpose.msra.mxu0 0.0
    %2547 = vmatprep.subr.mxu0 0.0
    %2548 = vmatpush1.xpose.msra.mxu0 %v2517
    %2549 = vmatprep.subr.mxu0 0.0
    %2550 = vmatpush1.xpose.msra.mxu0 %v2514
    %2551 = vmatprep.subr.mxu0 0.0
    %2552 = vmatpush2.xpose.msra.mxu0 0.0
    %2553 = vmatprep.subr.mxu0 0.0
    %2554 = vmatpush2.xpose.msra.mxu0 0.0
    %2555 = vmatprep.subr.mxu0 0.0
    %2556 = vmatpush2.xpose.msra.mxu0 0.0
    %2557 = vmatprep.subr.mxu0 0.0
    %2558 = vmatpush2.xpose.msra.mxu0 0.0
    %2559 = vmatprep.subr.mxu0 0.0
    %2560 = vmatpush2.xpose.msra.mxu0 0.0
    %2561 = vmatprep.subr.mxu0 0.0
    %2562 = vmatpush2.xpose.msra.mxu0 0.0
    %2563 = vmatprep.subr.mxu0 0.0
    %2564 = vmatpush2.xpose.msra.mxu0 0.0
    %2565 = vmatprep.subr.mxu0 0.0
    %2566 = vmatpush2.xpose.msra.mxu0 0.0
    %2567 = vmatprep.subr.mxu0 0.0
    %2568 = vmatpush2.xpose.msra.mxu0 0.0
    %2569 = vmatprep.subr.mxu0 0.0
    %2570 = vmatpush2.xpose.msra.mxu0 0.0
    %2571 = vmatprep.subr.mxu0 0.0
    %2572 = vmatpush2.xpose.msra.mxu0 0.0
    %2573 = vmatprep.subr.mxu0 0.0
    %2574 = vmatpush2.xpose.msra.mxu0 0.0
    %2575 = vmatprep.subr.mxu0 0.0
    %2576 = vmatpush2.xpose.msra.mxu0 0.0
    %2577 = vmatprep.subr.mxu0 0.0
    %2578 = vmatpush2.xpose.msra.mxu0 0.0
    %2579 = vmatprep.subr.mxu0 0.0
    %2580 = vmatpush2.xpose.msra.mxu0 0.0
    %2581 = vmatprep.subr.mxu0 0.0
    %2582 = vmatpush2.xpose.msra.mxu0 0.0
    %2583 = vmatprep.mubr.f32.mxu0 0.0
    %2584 = vmatmul.mubr.f32.gmra.mxu0 %v2508
    %v2585 = vpop.f32.mrf.mxu0
    %v2586 = vadd.f32 0.0, %v2585
    %v2587 = vpop.f32.mrf.mxu0
    %2588 = vmatprep.mubr.f32.mxu0 0.0
    %2589 = vmatmul.mubr.f32.gmra.mxu0 %v2511
    %v2590 = vpop.f32.mrf.mxu0
    %v2591 = vadd.f32 0.0, %v2590
    %v2592 = vpop.f32.mrf.mxu0
    %2593 = vdwg.mxu0
    %v2595 = vsel %vm1984, %v518, 0
    %v2598 = vsel %vm1984, %v521, 0
    %v2601 = vsel %vm1984, %v1102, 0
    %v2604 = vsel %vm1984, %v1105, 0
    %2606 = vmatprep.subr.mxu0 0.0
    %2607 = vmatpush1.xpose.msra.mxu0 0.0
    %2608 = vmatprep.subr.mxu0 0.0
    %2609 = vmatpush1.xpose.msra.mxu0 0.0
    %2610 = vmatprep.subr.mxu0 0.0
    %2611 = vmatpush1.xpose.msra.mxu0 0.0
    %2612 = vmatprep.subr.mxu0 0.0
    %2613 = vmatpush1.xpose.msra.mxu0 0.0
    %2614 = vmatprep.subr.mxu0 0.0
    %2615 = vmatpush1.xpose.msra.mxu0 0.0
    %2616 = vmatprep.subr.mxu0 0.0
    %2617 = vmatpush1.xpose.msra.mxu0 0.0
    %2618 = vmatprep.subr.mxu0 0.0
    %2619 = vmatpush1.xpose.msra.mxu0 0.0
    %2620 = vmatprep.subr.mxu0 0.0
    %2621 = vmatpush1.xpose.msra.mxu0 0.0
    %2622 = vmatprep.subr.mxu0 0.0
    %2623 = vmatpush1.xpose.msra.mxu0 0.0
    %2624 = vmatprep.subr.mxu0 0.0
    %2625 = vmatpush1.xpose.msra.mxu0 0.0
    %2626 = vmatprep.subr.mxu0 0.0
    %2627 = vmatpush1.xpose.msra.mxu0 0.0
    %2628 = vmatprep.subr.mxu0 0.0
    %2629 = vmatpush1.xpose.msra.mxu0 0.0
    %2630 = vmatprep.subr.mxu0 0.0
    %2631 = vmatpush1.xpose.msra.mxu0 0.0
    %2632 = vmatprep.subr.mxu0 0.0
    %2633 = vmatpush1.xpose.msra.mxu0 0.0
    %2634 = vmatprep.subr.mxu0 0.0
    %2635 = vmatpush1.xpose.msra.mxu0 %v2604
    %2636 = vmatprep.subr.mxu0 0.0
    %2637 = vmatpush1.xpose.msra.mxu0 %v2601
    %2638 = vmatprep.subr.mxu0 0.0
    %2639 = vmatpush2.xpose.msra.mxu0 0.0
    %2640 = vmatprep.subr.mxu0 0.0
    %2641 = vmatpush2.xpose.msra.mxu0 0.0
    %2642 = vmatprep.subr.mxu0 0.0
    %2643 = vmatpush2.xpose.msra.mxu0 0.0
    %2644 = vmatprep.subr.mxu0 0.0
    %2645 = vmatpush2.xpose.msra.mxu0 0.0
    %2646 = vmatprep.subr.mxu0 0.0
    %2647 = vmatpush2.xpose.msra.mxu0 0.0
    %2648 = vmatprep.subr.mxu0 0.0
    %2649 = vmatpush2.xpose.msra.mxu0 0.0
    %2650 = vmatprep.subr.mxu0 0.0
    %2651 = vmatpush2.xpose.msra.mxu0 0.0
    %2652 = vmatprep.subr.mxu0 0.0
    %2653 = vmatpush2.xpose.msra.mxu0 0.0
    %2654 = vmatprep.subr.mxu0 0.0
    %2655 = vmatpush2.xpose.msra.mxu0 0.0
    %2656 = vmatprep.subr.mxu0 0.0
    %2657 = vmatpush2.xpose.msra.mxu0 0.0
    %2658 = vmatprep.subr.mxu0 0.0
    %2659 = vmatpush2.xpose.msra.mxu0 0.0
    %2660 = vmatprep.subr.mxu0 0.0
    %2661 = vmatpush2.xpose.msra.mxu0 0.0
    %2662 = vmatprep.subr.mxu0 0.0
    %2663 = vmatpush2.xpose.msra.mxu0 0.0
    %2664 = vmatprep.subr.mxu0 0.0
    %2665 = vmatpush2.xpose.msra.mxu0 0.0
    %2666 = vmatprep.subr.mxu0 0.0
    %2667 = vmatpush2.xpose.msra.mxu0 0.0
    %2668 = vmatprep.subr.mxu0 0.0
    %2669 = vmatpush2.xpose.msra.mxu0 0.0
    %2670 = vmatprep.mubr.f32.mxu0 0.0
    %2671 = vmatmul.mubr.f32.gmra.mxu0 %v2595
    %v2672 = vpop.f32.mrf.mxu0
    %v2673 = vadd.f32 0.0, %v2672
    %v2674 = vpop.f32.mrf.mxu0
    %2675 = vmatprep.mubr.f32.mxu0 0.0
    %2676 = vmatmul.mubr.f32.gmra.mxu0 %v2598
    %v2677 = vpop.f32.mrf.mxu0
    %v2678 = vadd.f32 0.0, %v2677
    %v2679 = vpop.f32.mrf.mxu0
    %2680 = vdwg.mxu0
    %v2682 = vsel %vm1984, %v583, 0
    %v2685 = vsel %vm1984, %v586, 0
    %v2688 = vsel %vm1984, %v1167, 0
    %v2691 = vsel %vm1984, %v1170, 0
    %2693 = vmatprep.subr.mxu0 0.0
    %2694 = vmatpush1.xpose.msra.mxu0 0.0
    %2695 = vmatprep.subr.mxu0 0.0
    %2696 = vmatpush1.xpose.msra.mxu0 0.0
    %2697 = vmatprep.subr.mxu0 0.0
    %2698 = vmatpush1.xpose.msra.mxu0 0.0
    %2699 = vmatprep.subr.mxu0 0.0
    %2700 = vmatpush1.xpose.msra.mxu0 0.0
    %2701 = vmatprep.subr.mxu0 0.0
    %2702 = vmatpush1.xpose.msra.mxu0 0.0
    %2703 = vmatprep.subr.mxu0 0.0
    %2704 = vmatpush1.xpose.msra.mxu0 0.0
    %2705 = vmatprep.subr.mxu0 0.0
    %2706 = vmatpush1.xpose.msra.mxu0 0.0
    %2707 = vmatprep.subr.mxu0 0.0
    %2708 = vmatpush1.xpose.msra.mxu0 0.0
    %2709 = vmatprep.subr.mxu0 0.0
    %2710 = vmatpush1.xpose.msra.mxu0 0.0
    %2711 = vmatprep.subr.mxu0 0.0
    %2712 = vmatpush1.xpose.msra.mxu0 0.0
    %2713 = vmatprep.subr.mxu0 0.0
    %2714 = vmatpush1.xpose.msra.mxu0 0.0
    %2715 = vmatprep.subr.mxu0 0.0
    %2716 = vmatpush1.xpose.msra.mxu0 0.0
    %2717 = vmatprep.subr.mxu0 0.0
    %2718 = vmatpush1.xpose.msra.mxu0 0.0
    %2719 = vmatprep.subr.mxu0 0.0
    %2720 = vmatpush1.xpose.msra.mxu0 0.0
    %2721 = vmatprep.subr.mxu0 0.0
    %2722 = vmatpush1.xpose.msra.mxu0 %v2691
    %2723 = vmatprep.subr.mxu0 0.0
    %2724 = vmatpush1.xpose.msra.mxu0 %v2688
    %2725 = vmatprep.subr.mxu0 0.0
    %2726 = vmatpush2.xpose.msra.mxu0 0.0
    %2727 = vmatprep.subr.mxu0 0.0
    %2728 = vmatpush2.xpose.msra.mxu0 0.0
    %2729 = vmatprep.subr.mxu0 0.0
    %2730 = vmatpush2.xpose.msra.mxu0 0.0
    %2731 = vmatprep.subr.mxu0 0.0
    %2732 = vmatpush2.xpose.msra.mxu0 0.0
    %2733 = vmatprep.subr.mxu0 0.0
    %2734 = vmatpush2.xpose.msra.mxu0 0.0
    %2735 = vmatprep.subr.mxu0 0.0
    %2736 = vmatpush2.xpose.msra.mxu0 0.0
    %2737 = vmatprep.subr.mxu0 0.0
    %2738 = vmatpush2.xpose.msra.mxu0 0.0
    %2739 = vmatprep.subr.mxu0 0.0
    %2740 = vmatpush2.xpose.msra.mxu0 0.0
    %2741 = vmatprep.subr.mxu0 0.0
    %2742 = vmatpush2.xpose.msra.mxu0 0.0
    %2743 = vmatprep.subr.mxu0 0.0
    %2744 = vmatpush2.xpose.msra.mxu0 0.0
    %2745 = vmatprep.subr.mxu0 0.0
    %2746 = vmatpush2.xpose.msra.mxu0 0.0
    %2747 = vmatprep.subr.mxu0 0.0
    %2748 = vmatpush2.xpose.msra.mxu0 0.0
    %2749 = vmatprep.subr.mxu0 0.0
    %2750 = vmatpush2.xpose.msra.mxu0 0.0
    %2751 = vmatprep.subr.mxu0 0.0
    %2752 = vmatpush2.xpose.msra.mxu0 0.0
    %2753 = vmatprep.subr.mxu0 0.0
    %2754 = vmatpush2.xpose.msra.mxu0 0.0
    %2755 = vmatprep.subr.mxu0 0.0
    %2756 = vmatpush2.xpose.msra.mxu0 0.0
    %2757 = vmatprep.mubr.f32.mxu0 0.0
    %2758 = vmatmul.mubr.f32.gmra.mxu0 %v2682
    %v2759 = vpop.f32.mrf.mxu0
    %v2760 = vadd.f32 0.0, %v2759
    %v2761 = vpop.f32.mrf.mxu0
    %2762 = vmatprep.mubr.f32.mxu0 0.0
    %2763 = vmatmul.mubr.f32.gmra.mxu0 %v2685
    %v2764 = vpop.f32.mrf.mxu0
    %v2765 = vadd.f32 0.0, %v2764
    %v2766 = vpop.f32.mrf.mxu0
    %2767 = vdwg.mxu0
    %v2769 = vsel %vm1984, %v591, 0
    %v2772 = vsel %vm1984, %v594, 0
    %v2775 = vsel %vm1984, %v1175, 0
    %v2778 = vsel %vm1984, %v1178, 0
    %2780 = vmatprep.subr.mxu0 0.0
    %2781 = vmatpush1.xpose.msra.mxu0 0.0
    %2782 = vmatprep.subr.mxu0 0.0
    %2783 = vmatpush1.xpose.msra.mxu0 0.0
    %2784 = vmatprep.subr.mxu0 0.0
    %2785 = vmatpush1.xpose.msra.mxu0 0.0
    %2786 = vmatprep.subr.mxu0 0.0
    %2787 = vmatpush1.xpose.msra.mxu0 0.0
    %2788 = vmatprep.subr.mxu0 0.0
    %2789 = vmatpush1.xpose.msra.mxu0 0.0
    %2790 = vmatprep.subr.mxu0 0.0
    %2791 = vmatpush1.xpose.msra.mxu0 0.0
    %2792 = vmatprep.subr.mxu0 0.0
    %2793 = vmatpush1.xpose.msra.mxu0 0.0
    %2794 = vmatprep.subr.mxu0 0.0
    %2795 = vmatpush1.xpose.msra.mxu0 0.0
    %2796 = vmatprep.subr.mxu0 0.0
    %2797 = vmatpush1.xpose.msra.mxu0 0.0
    %2798 = vmatprep.subr.mxu0 0.0
    %2799 = vmatpush1.xpose.msra.mxu0 0.0
    %2800 = vmatprep.subr.mxu0 0.0
    %2801 = vmatpush1.xpose.msra.mxu0 0.0
    %2802 = vmatprep.subr.mxu0 0.0
    %2803 = vmatpush1.xpose.msra.mxu0 0.0
    %2804 = vmatprep.subr.mxu0 0.0
    %2805 = vmatpush1.xpose.msra.mxu0 0.0
    %2806 = vmatprep.subr.mxu0 0.0
    %2807 = vmatpush1.xpose.msra.mxu0 0.0
    %2808 = vmatprep.subr.mxu0 0.0
    %2809 = vmatpush1.xpose.msra.mxu0 %v2778
    %2810 = vmatprep.subr.mxu0 0.0
    %2811 = vmatpush1.xpose.msra.mxu0 %v2775
    %2812 = vmatprep.subr.mxu0 0.0
    %2813 = vmatpush2.xpose.msra.mxu0 0.0
    %2814 = vmatprep.subr.mxu0 0.0
    %2815 = vmatpush2.xpose.msra.mxu0 0.0
    %2816 = vmatprep.subr.mxu0 0.0
    %2817 = vmatpush2.xpose.msra.mxu0 0.0
    %2818 = vmatprep.subr.mxu0 0.0
    %2819 = vmatpush2.xpose.msra.mxu0 0.0
    %2820 = vmatprep.subr.mxu0 0.0
    %2821 = vmatpush2.xpose.msra.mxu0 0.0
    %2822 = vmatprep.subr.mxu0 0.0
    %2823 = vmatpush2.xpose.msra.mxu0 0.0
    %2824 = vmatprep.subr.mxu0 0.0
    %2825 = vmatpush2.xpose.msra.mxu0 0.0
    %2826 = vmatprep.subr.mxu0 0.0
    %2827 = vmatpush2.xpose.msra.mxu0 0.0
    %2828 = vmatprep.subr.mxu0 0.0
    %2829 = vmatpush2.xpose.msra.mxu0 0.0
    %2830 = vmatprep.subr.mxu0 0.0
    %2831 = vmatpush2.xpose.msra.mxu0 0.0
    %2832 = vmatprep.subr.mxu0 0.0
    %2833 = vmatpush2.xpose.msra.mxu0 0.0
    %2834 = vmatprep.subr.mxu0 0.0
    %2835 = vmatpush2.xpose.msra.mxu0 0.0
    %2836 = vmatprep.subr.mxu0 0.0
    %2837 = vmatpush2.xpose.msra.mxu0 0.0
    %2838 = vmatprep.subr.mxu0 0.0
    %2839 = vmatpush2.xpose.msra.mxu0 0.0
    %2840 = vmatprep.subr.mxu0 0.0
    %2841 = vmatpush2.xpose.msra.mxu0 0.0
    %2842 = vmatprep.subr.mxu0 0.0
    %2843 = vmatpush2.xpose.msra.mxu0 0.0
    %2844 = vmatprep.mubr.f32.mxu0 0.0
    %2845 = vmatmul.mubr.f32.gmra.mxu0 %v2769
    %v2846 = vpop.f32.mrf.mxu0
    %v2847 = vadd.f32 0.0, %v2846
    %v2848 = vpop.f32.mrf.mxu0
    %2849 = vmatprep.mubr.f32.mxu0 0.0
    %2850 = vmatmul.mubr.f32.gmra.mxu0 %v2772
    %v2851 = vpop.f32.mrf.mxu0
    %v2852 = vadd.f32 0.0, %v2851
    %v2853 = vpop.f32.mrf.mxu0
    %2854 = vdwg.mxu0
    %v2856 = vsel %vm1984, %v656, 0
    %v2859 = vsel %vm1984, %v659, 0
    %v2862 = vsel %vm1984, %v1240, 0
    %v2865 = vsel %vm1984, %v1243, 0
    %2867 = vmatprep.subr.mxu0 0.0
    %2868 = vmatpush1.xpose.msra.mxu0 0.0
    %2869 = vmatprep.subr.mxu0 0.0
    %2870 = vmatpush1.xpose.msra.mxu0 0.0
    %2871 = vmatprep.subr.mxu0 0.0
    %2872 = vmatpush1.xpose.msra.mxu0 0.0
    %2873 = vmatprep.subr.mxu0 0.0
    %2874 = vmatpush1.xpose.msra.mxu0 0.0
    %2875 = vmatprep.subr.mxu0 0.0
    %2876 = vmatpush1.xpose.msra.mxu0 0.0
    %2877 = vmatprep.subr.mxu0 0.0
    %2878 = vmatpush1.xpose.msra.mxu0 0.0
    %2879 = vmatprep.subr.mxu0 0.0
    %2880 = vmatpush1.xpose.msra.mxu0 0.0
    %2881 = vmatprep.subr.mxu0 0.0
    %2882 = vmatpush1.xpose.msra.mxu0 0.0
    %2883 = vmatprep.subr.mxu0 0.0
    %2884 = vmatpush1.xpose.msra.mxu0 0.0
    %2885 = vmatprep.subr.mxu0 0.0
    %2886 = vmatpush1.xpose.msra.mxu0 0.0
    %2887 = vmatprep.subr.mxu0 0.0
    %2888 = vmatpush1.xpose.msra.mxu0 0.0
    %2889 = vmatprep.subr.mxu0 0.0
    %2890 = vmatpush1.xpose.msra.mxu0 0.0
    %2891 = vmatprep.subr.mxu0 0.0
    %2892 = vmatpush1.xpose.msra.mxu0 0.0
    %2893 = vmatprep.subr.mxu0 0.0
    %2894 = vmatpush1.xpose.msra.mxu0 0.0
    %2895 = vmatprep.subr.mxu0 0.0
    %2896 = vmatpush1.xpose.msra.mxu0 %v2865
    %2897 = vmatprep.subr.mxu0 0.0
    %2898 = vmatpush1.xpose.msra.mxu0 %v2862
    %2899 = vmatprep.subr.mxu0 0.0
    %2900 = vmatpush2.xpose.msra.mxu0 0.0
    %2901 = vmatprep.subr.mxu0 0.0
    %2902 = vmatpush2.xpose.msra.mxu0 0.0
    %2903 = vmatprep.subr.mxu0 0.0
    %2904 = vmatpush2.xpose.msra.mxu0 0.0
    %2905 = vmatprep.subr.mxu0 0.0
    %2906 = vmatpush2.xpose.msra.mxu0 0.0
    %2907 = vmatprep.subr.mxu0 0.0
    %2908 = vmatpush2.xpose.msra.mxu0 0.0
    %2909 = vmatprep.subr.mxu0 0.0
    %2910 = vmatpush2.xpose.msra.mxu0 0.0
    %2911 = vmatprep.subr.mxu0 0.0
    %2912 = vmatpush2.xpose.msra.mxu0 0.0
    %2913 = vmatprep.subr.mxu0 0.0
    %2914 = vmatpush2.xpose.msra.mxu0 0.0
    %2915 = vmatprep.subr.mxu0 0.0
    %2916 = vmatpush2.xpose.msra.mxu0 0.0
    %2917 = vmatprep.subr.mxu0 0.0
    %2918 = vmatpush2.xpose.msra.mxu0 0.0
    %2919 = vmatprep.subr.mxu0 0.0
    %2920 = vmatpush2.xpose.msra.mxu0 0.0
    %2921 = vmatprep.subr.mxu0 0.0
    %2922 = vmatpush2.xpose.msra.mxu0 0.0
    %2923 = vmatprep.subr.mxu0 0.0
    %2924 = vmatpush2.xpose.msra.mxu0 0.0
    %2925 = vmatprep.subr.mxu0 0.0
    %2926 = vmatpush2.xpose.msra.mxu0 0.0
    %2927 = vmatprep.subr.mxu0 0.0
    %2928 = vmatpush2.xpose.msra.mxu0 0.0
    %2929 = vmatprep.subr.mxu0 0.0
    %2930 = vmatpush2.xpose.msra.mxu0 0.0
    %2931 = vmatprep.mubr.f32.mxu0 0.0
    %2932 = vmatmul.mubr.f32.gmra.mxu0 %v2856
    %v2933 = vpop.f32.mrf.mxu0
    %v2934 = vadd.f32 0.0, %v2933
    %v2935 = vpop.f32.mrf.mxu0
    %2936 = vmatprep.mubr.f32.mxu0 0.0
    %2937 = vmatmul.mubr.f32.gmra.mxu0 %v2859
    %v2938 = vpop.f32.mrf.mxu0
    %v2939 = vadd.f32 0.0, %v2938
    %v2940 = vpop.f32.mrf.mxu0
    %2941 = vdwg.mxu0
    %v2943 = vsel %vm1984, %v664, 0
    %v2946 = vsel %vm1984, %v667, 0
    %v2949 = vsel %vm1984, %v1248, 0
    %v2952 = vsel %vm1984, %v1251, 0
    %2954 = vmatprep.subr.mxu0 0.0
    %2955 = vmatpush1.xpose.msra.mxu0 0.0
    %2956 = vmatprep.subr.mxu0 0.0
    %2957 = vmatpush1.xpose.msra.mxu0 0.0
    %2958 = vmatprep.subr.mxu0 0.0
    %2959 = vmatpush1.xpose.msra.mxu0 0.0
    %2960 = vmatprep.subr.mxu0 0.0
    %2961 = vmatpush1.xpose.msra.mxu0 0.0
    %2962 = vmatprep.subr.mxu0 0.0
    %2963 = vmatpush1.xpose.msra.mxu0 0.0
    %2964 = vmatprep.subr.mxu0 0.0
    %2965 = vmatpush1.xpose.msra.mxu0 0.0
    %2966 = vmatprep.subr.mxu0 0.0
    %2967 = vmatpush1.xpose.msra.mxu0 0.0
    %2968 = vmatprep.subr.mxu0 0.0
    %2969 = vmatpush1.xpose.msra.mxu0 0.0
    %2970 = vmatprep.subr.mxu0 0.0
    %2971 = vmatpush1.xpose.msra.mxu0 0.0
    %2972 = vmatprep.subr.mxu0 0.0
    %2973 = vmatpush1.xpose.msra.mxu0 0.0
    %2974 = vmatprep.subr.mxu0 0.0
    %2975 = vmatpush1.xpose.msra.mxu0 0.0
    %2976 = vmatprep.subr.mxu0 0.0
    %2977 = vmatpush1.xpose.msra.mxu0 0.0
    %2978 = vmatprep.subr.mxu0 0.0
    %2979 = vmatpush1.xpose.msra.mxu0 0.0
    %2980 = vmatprep.subr.mxu0 0.0
    %2981 = vmatpush1.xpose.msra.mxu0 0.0
    %2982 = vmatprep.subr.mxu0 0.0
    %2983 = vmatpush1.xpose.msra.mxu0 %v2952
    %2984 = vmatprep.subr.mxu0 0.0
    %2985 = vmatpush1.xpose.msra.mxu0 %v2949
    %2986 = vmatprep.subr.mxu0 0.0
    %2987 = vmatpush2.xpose.msra.mxu0 0.0
    %2988 = vmatprep.subr.mxu0 0.0
    %2989 = vmatpush2.xpose.msra.mxu0 0.0
    %2990 = vmatprep.subr.mxu0 0.0
    %2991 = vmatpush2.xpose.msra.mxu0 0.0
    %2992 = vmatprep.subr.mxu0 0.0
    %2993 = vmatpush2.xpose.msra.mxu0 0.0
    %2994 = vmatprep.subr.mxu0 0.0
    %2995 = vmatpush2.xpose.msra.mxu0 0.0
    %2996 = vmatprep.subr.mxu0 0.0
    %2997 = vmatpush2.xpose.msra.mxu0 0.0
    %2998 = vmatprep.subr.mxu0 0.0
    %2999 = vmatpush2.xpose.msra.mxu0 0.0
    %3000 = vmatprep.subr.mxu0 0.0
    %3001 = vmatpush2.xpose.msra.mxu0 0.0
    %3002 = vmatprep.subr.mxu0 0.0
    %3003 = vmatpush2.xpose.msra.mxu0 0.0
    %3004 = vmatprep.subr.mxu0 0.0
    %3005 = vmatpush2.xpose.msra.mxu0 0.0
    %3006 = vmatprep.subr.mxu0 0.0
    %3007 = vmatpush2.xpose.msra.mxu0 0.0
    %3008 = vmatprep.subr.mxu0 0.0
    %3009 = vmatpush2.xpose.msra.mxu0 0.0
    %3010 = vmatprep.subr.mxu0 0.0
    %3011 = vmatpush2.xpose.msra.mxu0 0.0
    %3012 = vmatprep.subr.mxu0 0.0
    %3013 = vmatpush2.xpose.msra.mxu0 0.0
    %3014 = vmatprep.subr.mxu0 0.0
    %3015 = vmatpush2.xpose.msra.mxu0 0.0
    %3016 = vmatprep.subr.mxu0 0.0
    %3017 = vmatpush2.xpose.msra.mxu0 0.0
    %3018 = vmatprep.mubr.f32.mxu0 0.0
    %3019 = vmatmul.mubr.f32.gmra.mxu0 %v2943
    %v3020 = vpop.f32.mrf.mxu0
    %v3021 = vadd.f32 0.0, %v3020
    %v3022 = vpop.f32.mrf.mxu0
    %3023 = vmatprep.mubr.f32.mxu0 0.0
    %3024 = vmatmul.mubr.f32.gmra.mxu0 %v2946
    %v3025 = vpop.f32.mrf.mxu0
    %v3026 = vadd.f32 0.0, %v3025
    %v3027 = vpop.f32.mrf.mxu0
    %3028 = vdwg.mxu0
    %v3030 = vsel %vm1984, %v729, 0
    %v3033 = vsel %vm1984, %v732, 0
    %v3036 = vsel %vm1984, %v1313, 0
    %v3039 = vsel %vm1984, %v1316, 0
    %3041 = vmatprep.subr.mxu0 0.0
    %3042 = vmatpush1.xpose.msra.mxu0 0.0
    %3043 = vmatprep.subr.mxu0 0.0
    %3044 = vmatpush1.xpose.msra.mxu0 0.0
    %3045 = vmatprep.subr.mxu0 0.0
    %3046 = vmatpush1.xpose.msra.mxu0 0.0
    %3047 = vmatprep.subr.mxu0 0.0
    %3048 = vmatpush1.xpose.msra.mxu0 0.0
    %3049 = vmatprep.subr.mxu0 0.0
    %3050 = vmatpush1.xpose.msra.mxu0 0.0
    %3051 = vmatprep.subr.mxu0 0.0
    %3052 = vmatpush1.xpose.msra.mxu0 0.0
    %3053 = vmatprep.subr.mxu0 0.0
    %3054 = vmatpush1.xpose.msra.mxu0 0.0
    %3055 = vmatprep.subr.mxu0 0.0
    %3056 = vmatpush1.xpose.msra.mxu0 0.0
    %3057 = vmatprep.subr.mxu0 0.0
    %3058 = vmatpush1.xpose.msra.mxu0 0.0
    %3059 = vmatprep.subr.mxu0 0.0
    %3060 = vmatpush1.xpose.msra.mxu0 0.0
    %3061 = vmatprep.subr.mxu0 0.0
    %3062 = vmatpush1.xpose.msra.mxu0 0.0
    %3063 = vmatprep.subr.mxu0 0.0
    %3064 = vmatpush1.xpose.msra.mxu0 0.0
    %3065 = vmatprep.subr.mxu0 0.0
    %3066 = vmatpush1.xpose.msra.mxu0 0.0
    %3067 = vmatprep.subr.mxu0 0.0
    %3068 = vmatpush1.xpose.msra.mxu0 0.0
    %3069 = vmatprep.subr.mxu0 0.0
    %3070 = vmatpush1.xpose.msra.mxu0 %v3039
    %3071 = vmatprep.subr.mxu0 0.0
    %3072 = vmatpush1.xpose.msra.mxu0 %v3036
    %3073 = vmatprep.subr.mxu0 0.0
    %3074 = vmatpush2.xpose.msra.mxu0 0.0
    %3075 = vmatprep.subr.mxu0 0.0
    %3076 = vmatpush2.xpose.msra.mxu0 0.0
    %3077 = vmatprep.subr.mxu0 0.0
    %3078 = vmatpush2.xpose.msra.mxu0 0.0
    %3079 = vmatprep.subr.mxu0 0.0
    %3080 = vmatpush2.xpose.msra.mxu0 0.0
    %3081 = vmatprep.subr.mxu0 0.0
    %3082 = vmatpush2.xpose.msra.mxu0 0.0
    %3083 = vmatprep.subr.mxu0 0.0
    %3084 = vmatpush2.xpose.msra.mxu0 0.0
    %3085 = vmatprep.subr.mxu0 0.0
    %3086 = vmatpush2.xpose.msra.mxu0 0.0
    %3087 = vmatprep.subr.mxu0 0.0
    %3088 = vmatpush2.xpose.msra.mxu0 0.0
    %3089 = vmatprep.subr.mxu0 0.0
    %3090 = vmatpush2.xpose.msra.mxu0 0.0
    %3091 = vmatprep.subr.mxu0 0.0
    %3092 = vmatpush2.xpose.msra.mxu0 0.0
    %3093 = vmatprep.subr.mxu0 0.0
    %3094 = vmatpush2.xpose.msra.mxu0 0.0
    %3095 = vmatprep.subr.mxu0 0.0
    %3096 = vmatpush2.xpose.msra.mxu0 0.0
    %3097 = vmatprep.subr.mxu0 0.0
    %3098 = vmatpush2.xpose.msra.mxu0 0.0
    %3099 = vmatprep.subr.mxu0 0.0
    %3100 = vmatpush2.xpose.msra.mxu0 0.0
    %3101 = vmatprep.subr.mxu0 0.0
    %3102 = vmatpush2.xpose.msra.mxu0 0.0
    %3103 = vmatprep.subr.mxu0 0.0
    %3104 = vmatpush2.xpose.msra.mxu0 0.0
    %3105 = vmatprep.mubr.f32.mxu0 0.0
    %3106 = vmatmul.mubr.f32.gmra.mxu0 %v3030
    %v3107 = vpop.f32.mrf.mxu0
    %v3108 = vadd.f32 0.0, %v3107
    %v3109 = vpop.f32.mrf.mxu0
    %3110 = vmatprep.mubr.f32.mxu0 0.0
    %3111 = vmatmul.mubr.f32.gmra.mxu0 %v3033
    %v3112 = vpop.f32.mrf.mxu0
    %v3113 = vadd.f32 0.0, %v3112
    %v3114 = vpop.f32.mrf.mxu0
    %3115 = vdwg.mxu0
    %v3117 = vsel %vm1984, %v737, 0
    %v3120 = vsel %vm1984, %v740, 0
    %v3123 = vsel %vm1984, %v1321, 0
    %v3126 = vsel %vm1984, %v1324, 0
    %3128 = vmatprep.subr.mxu0 0.0
    %3129 = vmatpush1.xpose.msra.mxu0 0.0
    %3130 = vmatprep.subr.mxu0 0.0
    %3131 = vmatpush1.xpose.msra.mxu0 0.0
    %3132 = vmatprep.subr.mxu0 0.0
    %3133 = vmatpush1.xpose.msra.mxu0 0.0
    %3134 = vmatprep.subr.mxu0 0.0
    %3135 = vmatpush1.xpose.msra.mxu0 0.0
    %3136 = vmatprep.subr.mxu0 0.0
    %3137 = vmatpush1.xpose.msra.mxu0 0.0
    %3138 = vmatprep.subr.mxu0 0.0
    %3139 = vmatpush1.xpose.msra.mxu0 0.0
    %3140 = vmatprep.subr.mxu0 0.0
    %3141 = vmatpush1.xpose.msra.mxu0 0.0
    %3142 = vmatprep.subr.mxu0 0.0
    %3143 = vmatpush1.xpose.msra.mxu0 0.0
    %3144 = vmatprep.subr.mxu0 0.0
    %3145 = vmatpush1.xpose.msra.mxu0 0.0
    %3146 = vmatprep.subr.mxu0 0.0
    %3147 = vmatpush1.xpose.msra.mxu0 0.0
    %3148 = vmatprep.subr.mxu0 0.0
    %3149 = vmatpush1.xpose.msra.mxu0 0.0
    %3150 = vmatprep.subr.mxu0 0.0
    %3151 = vmatpush1.xpose.msra.mxu0 0.0
    %3152 = vmatprep.subr.mxu0 0.0
    %3153 = vmatpush1.xpose.msra.mxu0 0.0
    %3154 = vmatprep.subr.mxu0 0.0
    %3155 = vmatpush1.xpose.msra.mxu0 0.0
    %3156 = vmatprep.subr.mxu0 0.0
    %3157 = vmatpush1.xpose.msra.mxu0 %v3126
    %3158 = vmatprep.subr.mxu0 0.0
    %3159 = vmatpush1.xpose.msra.mxu0 %v3123
    %3160 = vmatprep.subr.mxu0 0.0
    %3161 = vmatpush2.xpose.msra.mxu0 0.0
    %3162 = vmatprep.subr.mxu0 0.0
    %3163 = vmatpush2.xpose.msra.mxu0 0.0
    %3164 = vmatprep.subr.mxu0 0.0
    %3165 = vmatpush2.xpose.msra.mxu0 0.0
    %3166 = vmatprep.subr.mxu0 0.0
    %3167 = vmatpush2.xpose.msra.mxu0 0.0
    %3168 = vmatprep.subr.mxu0 0.0
    %3169 = vmatpush2.xpose.msra.mxu0 0.0
    %3170 = vmatprep.subr.mxu0 0.0
    %3171 = vmatpush2.xpose.msra.mxu0 0.0
    %3172 = vmatprep.subr.mxu0 0.0
    %3173 = vmatpush2.xpose.msra.mxu0 0.0
    %3174 = vmatprep.subr.mxu0 0.0
    %3175 = vmatpush2.xpose.msra.mxu0 0.0
    %3176 = vmatprep.subr.mxu0 0.0
    %3177 = vmatpush2.xpose.msra.mxu0 0.0
    %3178 = vmatprep.subr.mxu0 0.0
    %3179 = vmatpush2.xpose.msra.mxu0 0.0
    %3180 = vmatprep.subr.mxu0 0.0
    %3181 = vmatpush2.xpose.msra.mxu0 0.0
    %3182 = vmatprep.subr.mxu0 0.0
    %3183 = vmatpush2.xpose.msra.mxu0 0.0
    %3184 = vmatprep.subr.mxu0 0.0
    %3185 = vmatpush2.xpose.msra.mxu0 0.0
    %3186 = vmatprep.subr.mxu0 0.0
    %3187 = vmatpush2.xpose.msra.mxu0 0.0
    %3188 = vmatprep.subr.mxu0 0.0
    %3189 = vmatpush2.xpose.msra.mxu0 0.0
    %3190 = vmatprep.subr.mxu0 0.0
    %3191 = vmatpush2.xpose.msra.mxu0 0.0
    %3192 = vmatprep.mubr.f32.mxu0 0.0
    %3193 = vmatmul.mubr.f32.gmra.mxu0 %v3117
    %v3194 = vpop.f32.mrf.mxu0
    %v3195 = vadd.f32 0.0, %v3194
    %v3196 = vpop.f32.mrf.mxu0
    %3197 = vmatprep.mubr.f32.mxu0 0.0
    %3198 = vmatmul.mubr.f32.gmra.mxu0 %v3120
    %v3199 = vpop.f32.mrf.mxu0
    %v3200 = vadd.f32 0.0, %v3199
    %v3201 = vpop.f32.mrf.mxu0
    %3202 = vdwg.mxu0
    %v3204 = vsel %vm1984, %v802, 0
    %v3207 = vsel %vm1984, %v805, 0
    %v3210 = vsel %vm1984, %v1386, 0
    %v3213 = vsel %vm1984, %v1389, 0
    %3215 = vmatprep.subr.mxu0 0.0
    %3216 = vmatpush1.xpose.msra.mxu0 0.0
    %3217 = vmatprep.subr.mxu0 0.0
    %3218 = vmatpush1.xpose.msra.mxu0 0.0
    %3219 = vmatprep.subr.mxu0 0.0
    %3220 = vmatpush1.xpose.msra.mxu0 0.0
    %3221 = vmatprep.subr.mxu0 0.0
    %3222 = vmatpush1.xpose.msra.mxu0 0.0
    %3223 = vmatprep.subr.mxu0 0.0
    %3224 = vmatpush1.xpose.msra.mxu0 0.0
    %3225 = vmatprep.subr.mxu0 0.0
    %3226 = vmatpush1.xpose.msra.mxu0 0.0
    %3227 = vmatprep.subr.mxu0 0.0
    %3228 = vmatpush1.xpose.msra.mxu0 0.0
    %3229 = vmatprep.subr.mxu0 0.0
    %3230 = vmatpush1.xpose.msra.mxu0 0.0
    %3231 = vmatprep.subr.mxu0 0.0
    %3232 = vmatpush1.xpose.msra.mxu0 0.0
    %3233 = vmatprep.subr.mxu0 0.0
    %3234 = vmatpush1.xpose.msra.mxu0 0.0
    %3235 = vmatprep.subr.mxu0 0.0
    %3236 = vmatpush1.xpose.msra.mxu0 0.0
    %3237 = vmatprep.subr.mxu0 0.0
    %3238 = vmatpush1.xpose.msra.mxu0 0.0
    %3239 = vmatprep.subr.mxu0 0.0
    %3240 = vmatpush1.xpose.msra.mxu0 0.0
    %3241 = vmatprep.subr.mxu0 0.0
    %3242 = vmatpush1.xpose.msra.mxu0 0.0
    %3243 = vmatprep.subr.mxu0 0.0
    %3244 = vmatpush1.xpose.msra.mxu0 %v3213
    %3245 = vmatprep.subr.mxu0 0.0
    %3246 = vmatpush1.xpose.msra.mxu0 %v3210
    %3247 = vmatprep.subr.mxu0 0.0
    %3248 = vmatpush2.xpose.msra.mxu0 0.0
    %3249 = vmatprep.subr.mxu0 0.0
    %3250 = vmatpush2.xpose.msra.mxu0 0.0
    %3251 = vmatprep.subr.mxu0 0.0
    %3252 = vmatpush2.xpose.msra.mxu0 0.0
    %3253 = vmatprep.subr.mxu0 0.0
    %3254 = vmatpush2.xpose.msra.mxu0 0.0
    %3255 = vmatprep.subr.mxu0 0.0
    %3256 = vmatpush2.xpose.msra.mxu0 0.0
    %3257 = vmatprep.subr.mxu0 0.0
    %3258 = vmatpush2.xpose.msra.mxu0 0.0
    %3259 = vmatprep.subr.mxu0 0.0
    %3260 = vmatpush2.xpose.msra.mxu0 0.0
    %3261 = vmatprep.subr.mxu0 0.0
    %3262 = vmatpush2.xpose.msra.mxu0 0.0
    %3263 = vmatprep.subr.mxu0 0.0
    %3264 = vmatpush2.xpose.msra.mxu0 0.0
    %3265 = vmatprep.subr.mxu0 0.0
    %3266 = vmatpush2.xpose.msra.mxu0 0.0
    %3267 = vmatprep.subr.mxu0 0.0
    %3268 = vmatpush2.xpose.msra.mxu0 0.0
    %3269 = vmatprep.subr.mxu0 0.0
    %3270 = vmatpush2.xpose.msra.mxu0 0.0
    %3271 = vmatprep.subr.mxu0 0.0
    %3272 = vmatpush2.xpose.msra.mxu0 0.0
    %3273 = vmatprep.subr.mxu0 0.0
    %3274 = vmatpush2.xpose.msra.mxu0 0.0
    %3275 = vmatprep.subr.mxu0 0.0
    %3276 = vmatpush2.xpose.msra.mxu0 0.0
    %3277 = vmatprep.subr.mxu0 0.0
    %3278 = vmatpush2.xpose.msra.mxu0 0.0
    %3279 = vmatprep.mubr.f32.mxu0 0.0
    %3280 = vmatmul.mubr.f32.gmra.mxu0 %v3204
    %v3281 = vpop.f32.mrf.mxu0
    %v3282 = vadd.f32 0.0, %v3281
    %v3283 = vpop.f32.mrf.mxu0
    %3284 = vmatprep.mubr.f32.mxu0 0.0
    %3285 = vmatmul.mubr.f32.gmra.mxu0 %v3207
    %v3286 = vpop.f32.mrf.mxu0
    %v3287 = vadd.f32 0.0, %v3286
    %v3288 = vpop.f32.mrf.mxu0
    %3289 = vdwg.mxu0
    %v3291 = vsel %vm1984, %v810, 0
    %v3294 = vsel %vm1984, %v813, 0
    %v3297 = vsel %vm1984, %v1394, 0
    %v3300 = vsel %vm1984, %v1397, 0
    %3302 = vmatprep.subr.mxu0 0.0
    %3303 = vmatpush1.xpose.msra.mxu0 0.0
    %3304 = vmatprep.subr.mxu0 0.0
    %3305 = vmatpush1.xpose.msra.mxu0 0.0
    %3306 = vmatprep.subr.mxu0 0.0
    %3307 = vmatpush1.xpose.msra.mxu0 0.0
    %3308 = vmatprep.subr.mxu0 0.0
    %3309 = vmatpush1.xpose.msra.mxu0 0.0
    %3310 = vmatprep.subr.mxu0 0.0
    %3311 = vmatpush1.xpose.msra.mxu0 0.0
    %3312 = vmatprep.subr.mxu0 0.0
    %3313 = vmatpush1.xpose.msra.mxu0 0.0
    %3314 = vmatprep.subr.mxu0 0.0
    %3315 = vmatpush1.xpose.msra.mxu0 0.0
    %3316 = vmatprep.subr.mxu0 0.0
    %3317 = vmatpush1.xpose.msra.mxu0 0.0
    %3318 = vmatprep.subr.mxu0 0.0
    %3319 = vmatpush1.xpose.msra.mxu0 0.0
    %3320 = vmatprep.subr.mxu0 0.0
    %3321 = vmatpush1.xpose.msra.mxu0 0.0
    %3322 = vmatprep.subr.mxu0 0.0
    %3323 = vmatpush1.xpose.msra.mxu0 0.0
    %3324 = vmatprep.subr.mxu0 0.0
    %3325 = vmatpush1.xpose.msra.mxu0 0.0
    %3326 = vmatprep.subr.mxu0 0.0
    %3327 = vmatpush1.xpose.msra.mxu0 0.0
    %3328 = vmatprep.subr.mxu0 0.0
    %3329 = vmatpush1.xpose.msra.mxu0 0.0
    %3330 = vmatprep.subr.mxu0 0.0
    %3331 = vmatpush1.xpose.msra.mxu0 %v3300
    %3332 = vmatprep.subr.mxu0 0.0
    %3333 = vmatpush1.xpose.msra.mxu0 %v3297
    %3334 = vmatprep.subr.mxu0 0.0
    %3335 = vmatpush2.xpose.msra.mxu0 0.0
    %3336 = vmatprep.subr.mxu0 0.0
    %3337 = vmatpush2.xpose.msra.mxu0 0.0
    %3338 = vmatprep.subr.mxu0 0.0
    %3339 = vmatpush2.xpose.msra.mxu0 0.0
    %3340 = vmatprep.subr.mxu0 0.0
    %3341 = vmatpush2.xpose.msra.mxu0 0.0
    %3342 = vmatprep.subr.mxu0 0.0
    %3343 = vmatpush2.xpose.msra.mxu0 0.0
    %3344 = vmatprep.subr.mxu0 0.0
    %3345 = vmatpush2.xpose.msra.mxu0 0.0
    %3346 = vmatprep.subr.mxu0 0.0
    %3347 = vmatpush2.xpose.msra.mxu0 0.0
    %3348 = vmatprep.subr.mxu0 0.0
    %3349 = vmatpush2.xpose.msra.mxu0 0.0
    %3350 = vmatprep.subr.mxu0 0.0
    %3351 = vmatpush2.xpose.msra.mxu0 0.0
    %3352 = vmatprep.subr.mxu0 0.0
    %3353 = vmatpush2.xpose.msra.mxu0 0.0
    %3354 = vmatprep.subr.mxu0 0.0
    %3355 = vmatpush2.xpose.msra.mxu0 0.0
    %3356 = vmatprep.subr.mxu0 0.0
    %3357 = vmatpush2.xpose.msra.mxu0 0.0
    %3358 = vmatprep.subr.mxu0 0.0
    %3359 = vmatpush2.xpose.msra.mxu0 0.0
    %3360 = vmatprep.subr.mxu0 0.0
    %3361 = vmatpush2.xpose.msra.mxu0 0.0
    %3362 = vmatprep.subr.mxu0 0.0
    %3363 = vmatpush2.xpose.msra.mxu0 0.0
    %3364 = vmatprep.subr.mxu0 0.0
    %3365 = vmatpush2.xpose.msra.mxu0 0.0
    %3366 = vmatprep.mubr.f32.mxu0 0.0
    %3367 = vmatmul.mubr.f32.gmra.mxu0 %v3291
    %v3368 = vpop.f32.mrf.mxu0
    %v3369 = vadd.f32 0.0, %v3368
    %v3370 = vpop.f32.mrf.mxu0
    %3371 = vmatprep.mubr.f32.mxu0 0.0
    %3372 = vmatmul.mubr.f32.gmra.mxu0 %v3294
    %v3373 = vpop.f32.mrf.mxu0
    %v3374 = vadd.f32 0.0, %v3373
    %v3375 = vpop.f32.mrf.mxu0
    %3376 = vdwg.mxu0
    %vm3377 = vcmask 130048
    %v3378 = vsel %vm3377, %v2064, -inf
    %3379 = vmax.xlane.f32.xlu0 %v3378
    %v3380 = vpop.xlane.xlu0 %3379
    %v3381 = vsel %vm3377, %v2069, -inf
    %3382 = vmax.xlane.f32.xlu0 %v3381
    %v3383 = vpop.xlane.xlu0 %3382
    %v3384 = vsel %vm3377, %v2151, -inf
    %3385 = vmax.xlane.f32.xlu0 %v3384
    %v3386 = vpop.xlane.xlu0 %3385
    %v3387 = vsel %vm3377, %v2156, -inf
    %3388 = vmax.xlane.f32.xlu0 %v3387
    %v3389 = vpop.xlane.xlu0 %3388
    %v3390 = vsel %vm3377, %v2238, -inf
    %3391 = vmax.xlane.f32.xlu0 %v3390
    %v3392 = vpop.xlane.xlu0 %3391
    %v3393 = vsel %vm3377, %v2243, -inf
    %3394 = vmax.xlane.f32.xlu0 %v3393
    %v3395 = vpop.xlane.xlu0 %3394
    %v3396 = vsel %vm3377, %v2325, -inf
    %3397 = vmax.xlane.f32.xlu0 %v3396
    %v3398 = vpop.xlane.xlu0 %3397
    %v3399 = vsel %vm3377, %v2330, -inf
    %3400 = vmax.xlane.f32.xlu0 %v3399
    %v3401 = vpop.xlane.xlu0 %3400
    %v3402 = vsel %vm3377, %v2412, -inf
    %3403 = vmax.xlane.f32.xlu0 %v3402
    %v3404 = vpop.xlane.xlu0 %3403
    %v3405 = vsel %vm3377, %v2417, -inf
    %3406 = vmax.xlane.f32.xlu0 %v3405
    %v3407 = vpop.xlane.xlu0 %3406
    %v3408 = vsel %vm3377, %v2499, -inf
    %3409 = vmax.xlane.f32.xlu0 %v3408
    %v3410 = vpop.xlane.xlu0 %3409
    %v3411 = vsel %vm3377, %v2504, -inf
    %3412 = vmax.xlane.f32.xlu0 %v3411
    %v3413 = vpop.xlane.xlu0 %3412
    %v3414 = vsel %vm3377, %v2586, -inf
    %3415 = vmax.xlane.f32.xlu0 %v3414
    %v3416 = vpop.xlane.xlu0 %3415
    %v3417 = vsel %vm3377, %v2591, -inf
    %3418 = vmax.xlane.f32.xlu0 %v3417
    %v3419 = vpop.xlane.xlu0 %3418
    %v3420 = vsel %vm3377, %v2673, -inf
    %3421 = vmax.xlane.f32.xlu0 %v3420
    %v3422 = vpop.xlane.xlu0 %3421
    %v3423 = vsel %vm3377, %v2678, -inf
    %3424 = vmax.xlane.f32.xlu0 %v3423
    %v3425 = vpop.xlane.xlu0 %3424
    %v3426 = vsel %vm3377, %v2760, -inf
    %3427 = vmax.xlane.f32.xlu0 %v3426
    %v3428 = vpop.xlane.xlu0 %3427
    %v3429 = vsel %vm3377, %v2765, -inf
    %3430 = vmax.xlane.f32.xlu0 %v3429
    %v3431 = vpop.xlane.xlu0 %3430
    %v3432 = vsel %vm3377, %v2847, -inf
    %3433 = vmax.xlane.f32.xlu0 %v3432
    %v3434 = vpop.xlane.xlu0 %3433
    %v3435 = vsel %vm3377, %v2852, -inf
    %3436 = vmax.xlane.f32.xlu0 %v3435
    %v3437 = vpop.xlane.xlu0 %3436
    %v3438 = vsel %vm3377, %v2934, -inf
    %3439 = vmax.xlane.f32.xlu0 %v3438
    %v3440 = vpop.xlane.xlu0 %3439
    %v3441 = vsel %vm3377, %v2939, -inf
    %3442 = vmax.xlane.f32.xlu0 %v3441
    %v3443 = vpop.xlane.xlu0 %3442
    %v3444 = vsel %vm3377, %v3021, -inf
    %3445 = vmax.xlane.f32.xlu0 %v3444
    %v3446 = vpop.xlane.xlu0 %3445
    %v3447 = vsel %vm3377, %v3026, -inf
    %3448 = vmax.xlane.f32.xlu0 %v3447
    %v3449 = vpop.xlane.xlu0 %3448
    %v3450 = vsel %vm3377, %v3108, -inf
    %3451 = vmax.xlane.f32.xlu0 %v3450
    %v3452 = vpop.xlane.xlu0 %3451
    %v3453 = vsel %vm3377, %v3113, -inf
    %3454 = vmax.xlane.f32.xlu0 %v3453
    %v3455 = vpop.xlane.xlu0 %3454
    %v3456 = vsel %vm3377, %v3195, -inf
    %3457 = vmax.xlane.f32.xlu0 %v3456
    %v3458 = vpop.xlane.xlu0 %3457
    %v3459 = vsel %vm3377, %v3200, -inf
    %3460 = vmax.xlane.f32.xlu0 %v3459
    %v3461 = vpop.xlane.xlu0 %3460
    %v3462 = vsel %vm3377, %v3282, -inf
    %3463 = vmax.xlane.f32.xlu0 %v3462
    %v3464 = vpop.xlane.xlu0 %3463
    %v3465 = vsel %vm3377, %v3287, -inf
    %3466 = vmax.xlane.f32.xlu0 %v3465
    %v3467 = vpop.xlane.xlu0 %3466
    %v3468 = vsel %vm3377, %v3369, -inf
    %3469 = vmax.xlane.f32.xlu0 %v3468
    %v3470 = vpop.xlane.xlu0 %3469
    %v3471 = vsel %vm3377, %v3374, -inf
    %3472 = vmax.xlane.f32.xlu0 %v3471
    %v3473 = vpop.xlane.xlu0 %3472
    %v3474 = vsub.f32 %v2064, %v3380
    %v3475 = vsub.f32 %v2069, %v3383
    %v3476 = vsub.f32 %v2151, %v3386
    %v3477 = vsub.f32 %v2156, %v3389
    %v3478 = vsub.f32 %v2238, %v3392
    %v3479 = vsub.f32 %v2243, %v3395
    %v3480 = vsub.f32 %v2325, %v3398
    %v3481 = vsub.f32 %v2330, %v3401
    %v3482 = vsub.f32 %v2412, %v3404
    %v3483 = vsub.f32 %v2417, %v3407
    %v3484 = vsub.f32 %v2499, %v3410
    %v3485 = vsub.f32 %v2504, %v3413
    %v3486 = vsub.f32 %v2586, %v3416
    %v3487 = vsub.f32 %v2591, %v3419
    %v3488 = vsub.f32 %v2673, %v3422
    %v3489 = vsub.f32 %v2678, %v3425
    %v3490 = vsub.f32 %v2760, %v3428
    %v3491 = vsub.f32 %v2765, %v3431
    %v3492 = vsub.f32 %v2847, %v3434
    %v3493 = vsub.f32 %v2852, %v3437
    %v3494 = vsub.f32 %v2934, %v3440
    %v3495 = vsub.f32 %v2939, %v3443
    %v3496 = vsub.f32 %v3021, %v3446
    %v3497 = vsub.f32 %v3026, %v3449
    %v3498 = vsub.f32 %v3108, %v3452
    %v3499 = vsub.f32 %v3113, %v3455
    %v3500 = vsub.f32 %v3195, %v3458
    %v3501 = vsub.f32 %v3200, %v3461
    %v3502 = vsub.f32 %v3282, %v3464
    %v3503 = vsub.f32 %v3287, %v3467
    %v3504 = vsub.f32 %v3369, %v3470
    %v3505 = vsub.f32 %v3374, %v3473
    %v3506 = vmul.f32 %v3474, 1.442695
    %v3507 = vpow.pop %v3506
    %v3508 = vmul.f32 %v3475, 1.442695
    %v3509 = vpow.pop %v3508
    %v3510 = vmul.f32 %v3476, 1.442695
    %v3511 = vpow.pop %v3510
    %v3512 = vmul.f32 %v3477, 1.442695
    %v3513 = vpow.pop %v3512
    %v3514 = vmul.f32 %v3478, 1.442695
    %v3515 = vpow.pop %v3514
    %v3516 = vmul.f32 %v3479, 1.442695
    %v3517 = vpow.pop %v3516
    %v3518 = vmul.f32 %v3480, 1.442695
    %v3519 = vpow.pop %v3518
    %v3520 = vmul.f32 %v3481, 1.442695
    %v3521 = vpow.pop %v3520
    %v3522 = vmul.f32 %v3482, 1.442695
    %v3523 = vpow.pop %v3522
    %v3524 = vmul.f32 %v3483, 1.442695
    %v3525 = vpow.pop %v3524
    %v3526 = vmul.f32 %v3484, 1.442695
    %v3527 = vpow.pop %v3526
    %v3528 = vmul.f32 %v3485, 1.442695
    %v3529 = vpow.pop %v3528
    %v3530 = vmul.f32 %v3486, 1.442695
    %v3531 = vpow.pop %v3530
    %v3532 = vmul.f32 %v3487, 1.442695
    %v3533 = vpow.pop %v3532
    %v3534 = vmul.f32 %v3488, 1.442695
    %v3535 = vpow.pop %v3534
    %v3536 = vmul.f32 %v3489, 1.442695
    %v3537 = vpow.pop %v3536
    %v3538 = vmul.f32 %v3490, 1.442695
    %v3539 = vpow.pop %v3538
    %v3540 = vmul.f32 %v3491, 1.442695
    %v3541 = vpow.pop %v3540
    %v3542 = vmul.f32 %v3492, 1.442695
    %v3543 = vpow.pop %v3542
    %v3544 = vmul.f32 %v3493, 1.442695
    %v3545 = vpow.pop %v3544
    %v3546 = vmul.f32 %v3494, 1.442695
    %v3547 = vpow.pop %v3546
    %v3548 = vmul.f32 %v3495, 1.442695
    %v3549 = vpow.pop %v3548
    %v3550 = vmul.f32 %v3496, 1.442695
    %v3551 = vpow.pop %v3550
    %v3552 = vmul.f32 %v3497, 1.442695
    %v3553 = vpow.pop %v3552
    %v3554 = vmul.f32 %v3498, 1.442695
    %v3555 = vpow.pop %v3554
    %v3556 = vmul.f32 %v3499, 1.442695
    %v3557 = vpow.pop %v3556
    %v3558 = vmul.f32 %v3500, 1.442695
    %v3559 = vpow.pop %v3558
    %v3560 = vmul.f32 %v3501, 1.442695
    %v3561 = vpow.pop %v3560
    %v3562 = vmul.f32 %v3502, 1.442695
    %v3563 = vpow.pop %v3562
    %v3564 = vmul.f32 %v3503, 1.442695
    %v3565 = vpow.pop %v3564
    %v3566 = vmul.f32 %v3504, 1.442695
    %v3567 = vpow.pop %v3566
    %v3568 = vmul.f32 %v3505, 1.442695
    %v3569 = vpow.pop %v3568
    %v3570 = vsel %vm3377, %v3507, 0.0
    %3571 = vadd.xlane.f32.xlu0 %v3570
    %v3572 = vpop.xlane.xlu0 %3571
    %v3573 = vsel %vm3377, %v3509, 0.0
    %3574 = vadd.xlane.f32.xlu0 %v3573
    %v3575 = vpop.xlane.xlu0 %3574
    %v3576 = vsel %vm3377, %v3511, 0.0
    %3577 = vadd.xlane.f32.xlu0 %v3576
    %v3578 = vpop.xlane.xlu0 %3577
    %v3579 = vsel %vm3377, %v3513, 0.0
    %3580 = vadd.xlane.f32.xlu0 %v3579
    %v3581 = vpop.xlane.xlu0 %3580
    %v3582 = vsel %vm3377, %v3515, 0.0
    %3583 = vadd.xlane.f32.xlu0 %v3582
    %v3584 = vpop.xlane.xlu0 %3583
    %v3585 = vsel %vm3377, %v3517, 0.0
    %3586 = vadd.xlane.f32.xlu0 %v3585
    %v3587 = vpop.xlane.xlu0 %3586
    %v3588 = vsel %vm3377, %v3519, 0.0
    %3589 = vadd.xlane.f32.xlu0 %v3588
    %v3590 = vpop.xlane.xlu0 %3589
    %v3591 = vsel %vm3377, %v3521, 0.0
    %3592 = vadd.xlane.f32.xlu0 %v3591
    %v3593 = vpop.xlane.xlu0 %3592
    %v3594 = vsel %vm3377, %v3523, 0.0
    %3595 = vadd.xlane.f32.xlu0 %v3594
    %v3596 = vpop.xlane.xlu0 %3595
    %v3597 = vsel %vm3377, %v3525, 0.0
    %3598 = vadd.xlane.f32.xlu0 %v3597
    %v3599 = vpop.xlane.xlu0 %3598
    %v3600 = vsel %vm3377, %v3527, 0.0
    %3601 = vadd.xlane.f32.xlu0 %v3600
    %v3602 = vpop.xlane.xlu0 %3601
    %v3603 = vsel %vm3377, %v3529, 0.0
    %3604 = vadd.xlane.f32.xlu0 %v3603
    %v3605 = vpop.xlane.xlu0 %3604
    %v3606 = vsel %vm3377, %v3531, 0.0
    %3607 = vadd.xlane.f32.xlu0 %v3606
    %v3608 = vpop.xlane.xlu0 %3607
    %v3609 = vsel %vm3377, %v3533, 0.0
    %3610 = vadd.xlane.f32.xlu0 %v3609
    %v3611 = vpop.xlane.xlu0 %3610
    %v3612 = vsel %vm3377, %v3535, 0.0
    %3613 = vadd.xlane.f32.xlu0 %v3612
    %v3614 = vpop.xlane.xlu0 %3613
    %v3615 = vsel %vm3377, %v3537, 0.0
    %3616 = vadd.xlane.f32.xlu0 %v3615
    %v3617 = vpop.xlane.xlu0 %3616
    %v3618 = vsel %vm3377, %v3539, 0.0
    %3619 = vadd.xlane.f32.xlu0 %v3618
    %v3620 = vpop.xlane.xlu0 %3619
    %v3621 = vsel %vm3377, %v3541, 0.0
    %3622 = vadd.xlane.f32.xlu0 %v3621
    %v3623 = vpop.xlane.xlu0 %3622
    %v3624 = vsel %vm3377, %v3543, 0.0
    %3625 = vadd.xlane.f32.xlu0 %v3624
    %v3626 = vpop.xlane.xlu0 %3625
    %v3627 = vsel %vm3377, %v3545, 0.0
    %3628 = vadd.xlane.f32.xlu0 %v3627
    %v3629 = vpop.xlane.xlu0 %3628
    %v3630 = vsel %vm3377, %v3547, 0.0
    %3631 = vadd.xlane.f32.xlu0 %v3630
    %v3632 = vpop.xlane.xlu0 %3631
    %v3633 = vsel %vm3377, %v3549, 0.0
    %3634 = vadd.xlane.f32.xlu0 %v3633
    %v3635 = vpop.xlane.xlu0 %3634
    %v3636 = vsel %vm3377, %v3551, 0.0
    %3637 = vadd.xlane.f32.xlu0 %v3636
    %v3638 = vpop.xlane.xlu0 %3637
    %v3639 = vsel %vm3377, %v3553, 0.0
    %3640 = vadd.xlane.f32.xlu0 %v3639
    %v3641 = vpop.xlane.xlu0 %3640
    %v3642 = vsel %vm3377, %v3555, 0.0
    %3643 = vadd.xlane.f32.xlu0 %v3642
    %v3644 = vpop.xlane.xlu0 %3643
    %v3645 = vsel %vm3377, %v3557, 0.0
    %3646 = vadd.xlane.f32.xlu0 %v3645
    %v3647 = vpop.xlane.xlu0 %3646
    %v3648 = vsel %vm3377, %v3559, 0.0
    %3649 = vadd.xlane.f32.xlu0 %v3648
    %v3650 = vpop.xlane.xlu0 %3649
    %v3651 = vsel %vm3377, %v3561, 0.0
    %3652 = vadd.xlane.f32.xlu0 %v3651
    %v3653 = vpop.xlane.xlu0 %3652
    %v3654 = vsel %vm3377, %v3563, 0.0
    %3655 = vadd.xlane.f32.xlu0 %v3654
    %v3656 = vpop.xlane.xlu0 %3655
    %v3657 = vsel %vm3377, %v3565, 0.0
    %3658 = vadd.xlane.f32.xlu0 %v3657
    %v3659 = vpop.xlane.xlu0 %3658
    %v3660 = vsel %vm3377, %v3567, 0.0
    %3661 = vadd.xlane.f32.xlu0 %v3660
    %v3662 = vpop.xlane.xlu0 %3661
    %v3663 = vsel %vm3377, %v3569, 0.0
    %3664 = vadd.xlane.f32.xlu0 %v3663
    %v3665 = vpop.xlane.xlu0 %3664
    %v3666 = vrcp.pop %v3572
    %v3667 = vrcp.pop %v3575
    %v3668 = vrcp.pop %v3578
    %v3669 = vrcp.pop %v3581
    %v3670 = vrcp.pop %v3584
    %v3671 = vrcp.pop %v3587
    %v3672 = vrcp.pop %v3590
    %v3673 = vrcp.pop %v3593
    %v3674 = vrcp.pop %v3596
    %v3675 = vrcp.pop %v3599
    %v3676 = vrcp.pop %v3602
    %v3677 = vrcp.pop %v3605
    %v3678 = vrcp.pop %v3608
    %v3679 = vrcp.pop %v3611
    %v3680 = vrcp.pop %v3614
    %v3681 = vrcp.pop %v3617
    %v3682 = vrcp.pop %v3620
    %v3683 = vrcp.pop %v3623
    %v3684 = vrcp.pop %v3626
    %v3685 = vrcp.pop %v3629
    %v3686 = vrcp.pop %v3632
    %v3687 = vrcp.pop %v3635
    %v3688 = vrcp.pop %v3638
    %v3689 = vrcp.pop %v3641
    %v3690 = vrcp.pop %v3644
    %v3691 = vrcp.pop %v3647
    %v3692 = vrcp.pop %v3650
    %v3693 = vrcp.pop %v3653
    %v3694 = vrcp.pop %v3656
    %v3695 = vrcp.pop %v3659
    %v3696 = vrcp.pop %v3662
    %v3697 = vrcp.pop %v3665
    %v3698 = vmul.f32 %v3507, %v3666
    %v3699 = vmul.f32 %v3509, %v3667
    %v3700 = vmul.f32 %v3511, %v3668
    %v3701 = vmul.f32 %v3513, %v3669
    %v3702 = vmul.f32 %v3515, %v3670
    %v3703 = vmul.f32 %v3517, %v3671
    %v3704 = vmul.f32 %v3519, %v3672
    %v3705 = vmul.f32 %v3521, %v3673
    %v3706 = vmul.f32 %v3523, %v3674
    %v3707 = vmul.f32 %v3525, %v3675
    %v3708 = vmul.f32 %v3527, %v3676
    %v3709 = vmul.f32 %v3529, %v3677
    %v3710 = vmul.f32 %v3531, %v3678
    %v3711 = vmul.f32 %v3533, %v3679
    %v3712 = vmul.f32 %v3535, %v3680
    %v3713 = vmul.f32 %v3537, %v3681
    %v3714 = vmul.f32 %v3539, %v3682
    %v3715 = vmul.f32 %v3541, %v3683
    %v3716 = vmul.f32 %v3543, %v3684
    %v3717 = vmul.f32 %v3545, %v3685
    %v3718 = vmul.f32 %v3547, %v3686
    %v3719 = vmul.f32 %v3549, %v3687
    %v3720 = vmul.f32 %v3551, %v3688
    %v3721 = vmul.f32 %v3553, %v3689
    %v3722 = vmul.f32 %v3555, %v3690
    %v3723 = vmul.f32 %v3557, %v3691
    %v3724 = vmul.f32 %v3559, %v3692
    %v3725 = vmul.f32 %v3561, %v3693
    %v3726 = vmul.f32 %v3563, %v3694
    %v3727 = vmul.f32 %v3565, %v3695
    %v3728 = vmul.f32 %v3567, %v3696
    %v3729 = vmul.f32 %v3569, %v3697
    %v3730 = vpack.c.bf16 %v3699, %v3698
    %v3731 = vpack.c.bf16 %v3701, %v3700
    %v3732 = vpack.c.bf16 %v3703, %v3702
    %v3733 = vpack.c.bf16 %v3705, %v3704
    %v3734 = vpack.c.bf16 %v3707, %v3706
    %v3735 = vpack.c.bf16 %v3709, %v3708
    %v3736 = vpack.c.bf16 %v3711, %v3710
    %v3737 = vpack.c.bf16 %v3713, %v3712
    %v3738 = vpack.c.bf16 %v3715, %v3714
    %v3739 = vpack.c.bf16 %v3717, %v3716
    %v3740 = vpack.c.bf16 %v3719, %v3718
    %v3741 = vpack.c.bf16 %v3721, %v3720
    %v3742 = vpack.c.bf16 %v3723, %v3722
    %v3743 = vpack.c.bf16 %v3725, %v3724
    %v3744 = vpack.c.bf16 %v3727, %v3726
    %v3745 = vpack.c.bf16 %v3729, %v3728
    %v3746 = vpack.c.bf16 %v1462, %v1459
    %v3747 = vpack.c.bf16 %v1470, %v1467
    %v3748 = vpack.c.bf16 %v1535, %v1532
    %v3749 = vpack.c.bf16 %v1543, %v1540
    %v3750 = vpack.c.bf16 %v1608, %v1605
    %v3751 = vpack.c.bf16 %v1616, %v1613
    %v3752 = vpack.c.bf16 %v1681, %v1678
    %v3753 = vpack.c.bf16 %v1689, %v1686
    %v3754 = vpack.c.bf16 %v1754, %v1751
    %v3755 = vpack.c.bf16 %v1762, %v1759
    %v3756 = vpack.c.bf16 %v1827, %v1824
    %v3757 = vpack.c.bf16 %v1835, %v1832
    %v3758 = vpack.c.bf16 %v1900, %v1897
    %v3759 = vpack.c.bf16 %v1908, %v1905
    %v3760 = vpack.c.bf16 %v1973, %v1970
    %v3761 = vpack.c.bf16 %v1981, %v1978
    %v3763 = vsel %vm3377, %v3730, 0
    %3765 = vmatprep.subr.bf16.mxu0 0
    %3766 = vmatpush1.bf16.msra.mxu0 0
    %3767 = vmatprep.subr.bf16.mxu0 0
    %3768 = vmatpush1.bf16.msra.mxu0 0
    %3769 = vmatprep.subr.bf16.mxu0 0
    %3770 = vmatpush1.bf16.msra.mxu0 0
    %3771 = vmatprep.subr.bf16.mxu0 0
    %3772 = vmatpush1.bf16.msra.mxu0 0
    %3773 = vmatprep.subr.bf16.mxu0 0
    %3774 = vmatpush1.bf16.msra.mxu0 0
    %3775 = vmatprep.subr.bf16.mxu0 0
    %3776 = vmatpush1.bf16.msra.mxu0 0
    %3777 = vmatprep.subr.bf16.mxu0 0
    %3778 = vmatpush1.bf16.msra.mxu0 0
    %3779 = vmatprep.subr.bf16.mxu0 0
    %3780 = vmatpush1.bf16.msra.mxu0 %v3746
    %3781 = vmatprep.subr.bf16.mxu0 0
    %3782 = vmatpush2.bf16.msra.mxu0 0
    %3783 = vmatprep.subr.bf16.mxu0 0
    %3784 = vmatpush2.bf16.msra.mxu0 0
    %3785 = vmatprep.subr.bf16.mxu0 0
    %3786 = vmatpush2.bf16.msra.mxu0 0
    %3787 = vmatprep.subr.bf16.mxu0 0
    %3788 = vmatpush2.bf16.msra.mxu0 0
    %3789 = vmatprep.subr.bf16.mxu0 0
    %3790 = vmatpush2.bf16.msra.mxu0 0
    %3791 = vmatprep.subr.bf16.mxu0 0
    %3792 = vmatpush2.bf16.msra.mxu0 0
    %3793 = vmatprep.subr.bf16.mxu0 0
    %3794 = vmatpush2.bf16.msra.mxu0 0
    %3795 = vmatprep.subr.bf16.mxu0 0
    %3796 = vmatpush2.bf16.msra.mxu0 0
    %3797 = vmatprep.mubr.bf16.mxu0 0
    %3798 = vmatmul.mubr.bf16.gmra.mxu0 %v3763
    %v3799 = vpop.f32.mrf.mxu0
    %v3800 = vadd.f32 0.0, %v3799
    %v3801 = vpop.f32.mrf.mxu0
    %v3802 = vpop.f32.mrf.mxu0
    %v3803 = vadd.f32 0.0, %v3802
    %v3804 = vpop.f32.mrf.mxu0
    %3805 = vdwg.mxu0
    %v3807 = vsel %vm3377, %v3731, 0
    %3809 = vmatprep.subr.bf16.mxu0 0
    %3810 = vmatpush1.bf16.msra.mxu0 0
    %3811 = vmatprep.subr.bf16.mxu0 0
    %3812 = vmatpush1.bf16.msra.mxu0 0
    %3813 = vmatprep.subr.bf16.mxu0 0
    %3814 = vmatpush1.bf16.msra.mxu0 0
    %3815 = vmatprep.subr.bf16.mxu0 0
    %3816 = vmatpush1.bf16.msra.mxu0 0
    %3817 = vmatprep.subr.bf16.mxu0 0
    %3818 = vmatpush1.bf16.msra.mxu0 0
    %3819 = vmatprep.subr.bf16.mxu0 0
    %3820 = vmatpush1.bf16.msra.mxu0 0
    %3821 = vmatprep.subr.bf16.mxu0 0
    %3822 = vmatpush1.bf16.msra.mxu0 0
    %3823 = vmatprep.subr.bf16.mxu0 0
    %3824 = vmatpush1.bf16.msra.mxu0 %v3747
    %3825 = vmatprep.subr.bf16.mxu0 0
    %3826 = vmatpush2.bf16.msra.mxu0 0
    %3827 = vmatprep.subr.bf16.mxu0 0
    %3828 = vmatpush2.bf16.msra.mxu0 0
    %3829 = vmatprep.subr.bf16.mxu0 0
    %3830 = vmatpush2.bf16.msra.mxu0 0
    %3831 = vmatprep.subr.bf16.mxu0 0
    %3832 = vmatpush2.bf16.msra.mxu0 0
    %3833 = vmatprep.subr.bf16.mxu0 0
    %3834 = vmatpush2.bf16.msra.mxu0 0
    %3835 = vmatprep.subr.bf16.mxu0 0
    %3836 = vmatpush2.bf16.msra.mxu0 0
    %3837 = vmatprep.subr.bf16.mxu0 0
    %3838 = vmatpush2.bf16.msra.mxu0 0
    %3839 = vmatprep.subr.bf16.mxu0 0
    %3840 = vmatpush2.bf16.msra.mxu0 0
    %3841 = vmatprep.mubr.bf16.mxu0 0
    %3842 = vmatmul.mubr.bf16.gmra.mxu0 %v3807
    %v3843 = vpop.f32.mrf.mxu0
    %v3844 = vadd.f32 0.0, %v3843
    %v3845 = vpop.f32.mrf.mxu0
    %v3846 = vpop.f32.mrf.mxu0
    %v3847 = vadd.f32 0.0, %v3846
    %v3848 = vpop.f32.mrf.mxu0
    %3849 = vdwg.mxu0
    %v3851 = vsel %vm3377, %v3732, 0
    %3853 = vmatprep.subr.bf16.mxu0 0
    %3854 = vmatpush1.bf16.msra.mxu0 0
    %3855 = vmatprep.subr.bf16.mxu0 0
    %3856 = vmatpush1.bf16.msra.mxu0 0
    %3857 = vmatprep.subr.bf16.mxu0 0
    %3858 = vmatpush1.bf16.msra.mxu0 0
    %3859 = vmatprep.subr.bf16.mxu0 0
    %3860 = vmatpush1.bf16.msra.mxu0 0
    %3861 = vmatprep.subr.bf16.mxu0 0
    %3862 = vmatpush1.bf16.msra.mxu0 0
    %3863 = vmatprep.subr.bf16.mxu0 0
    %3864 = vmatpush1.bf16.msra.mxu0 0
    %3865 = vmatprep.subr.bf16.mxu0 0
    %3866 = vmatpush1.bf16.msra.mxu0 0
    %3867 = vmatprep.subr.bf16.mxu0 0
    %3868 = vmatpush1.bf16.msra.mxu0 %v3748
    %3869 = vmatprep.subr.bf16.mxu0 0
    %3870 = vmatpush2.bf16.msra.mxu0 0
    %3871 = vmatprep.subr.bf16.mxu0 0
    %3872 = vmatpush2.bf16.msra.mxu0 0
    %3873 = vmatprep.subr.bf16.mxu0 0
    %3874 = vmatpush2.bf16.msra.mxu0 0
    %3875 = vmatprep.subr.bf16.mxu0 0
    %3876 = vmatpush2.bf16.msra.mxu0 0
    %3877 = vmatprep.subr.bf16.mxu0 0
    %3878 = vmatpush2.bf16.msra.mxu0 0
    %3879 = vmatprep.subr.bf16.mxu0 0
    %3880 = vmatpush2.bf16.msra.mxu0 0
    %3881 = vmatprep.subr.bf16.mxu0 0
    %3882 = vmatpush2.bf16.msra.mxu0 0
    %3883 = vmatprep.subr.bf16.mxu0 0
    %3884 = vmatpush2.bf16.msra.mxu0 0
    %3885 = vmatprep.mubr.bf16.mxu0 0
    %3886 = vmatmul.mubr.bf16.gmra.mxu0 %v3851
    %v3887 = vpop.f32.mrf.mxu0
    %v3888 = vadd.f32 0.0, %v3887
    %v3889 = vpop.f32.mrf.mxu0
    %v3890 = vpop.f32.mrf.mxu0
    %v3891 = vadd.f32 0.0, %v3890
    %v3892 = vpop.f32.mrf.mxu0
    %3893 = vdwg.mxu0
    %v3895 = vsel %vm3377, %v3733, 0
    %3897 = vmatprep.subr.bf16.mxu0 0
    %3898 = vmatpush1.bf16.msra.mxu0 0
    %3899 = vmatprep.subr.bf16.mxu0 0
    %3900 = vmatpush1.bf16.msra.mxu0 0
    %3901 = vmatprep.subr.bf16.mxu0 0
    %3902 = vmatpush1.bf16.msra.mxu0 0
    %3903 = vmatprep.subr.bf16.mxu0 0
    %3904 = vmatpush1.bf16.msra.mxu0 0
    %3905 = vmatprep.subr.bf16.mxu0 0
    %3906 = vmatpush1.bf16.msra.mxu0 0
    %3907 = vmatprep.subr.bf16.mxu0 0
    %3908 = vmatpush1.bf16.msra.mxu0 0
    %3909 = vmatprep.subr.bf16.mxu0 0
    %3910 = vmatpush1.bf16.msra.mxu0 0
    %3911 = vmatprep.subr.bf16.mxu0 0
    %3912 = vmatpush1.bf16.msra.mxu0 %v3749
    %3913 = vmatprep.subr.bf16.mxu0 0
    %3914 = vmatpush2.bf16.msra.mxu0 0
    %3915 = vmatprep.subr.bf16.mxu0 0
    %3916 = vmatpush2.bf16.msra.mxu0 0
    %3917 = vmatprep.subr.bf16.mxu0 0
    %3918 = vmatpush2.bf16.msra.mxu0 0
    %3919 = vmatprep.subr.bf16.mxu0 0
    %3920 = vmatpush2.bf16.msra.mxu0 0
    %3921 = vmatprep.subr.bf16.mxu0 0
    %3922 = vmatpush2.bf16.msra.mxu0 0
    %3923 = vmatprep.subr.bf16.mxu0 0
    %3924 = vmatpush2.bf16.msra.mxu0 0
    %3925 = vmatprep.subr.bf16.mxu0 0
    %3926 = vmatpush2.bf16.msra.mxu0 0
    %3927 = vmatprep.subr.bf16.mxu0 0
    %3928 = vmatpush2.bf16.msra.mxu0 0
    %3929 = vmatprep.mubr.bf16.mxu0 0
    %3930 = vmatmul.mubr.bf16.gmra.mxu0 %v3895
    %v3931 = vpop.f32.mrf.mxu0
    %v3932 = vadd.f32 0.0, %v3931
    %v3933 = vpop.f32.mrf.mxu0
    %v3934 = vpop.f32.mrf.mxu0
    %v3935 = vadd.f32 0.0, %v3934
    %v3936 = vpop.f32.mrf.mxu0
    %3937 = vdwg.mxu0
    %v3939 = vsel %vm3377, %v3734, 0
    %3941 = vmatprep.subr.bf16.mxu0 0
    %3942 = vmatpush1.bf16.msra.mxu0 0
    %3943 = vmatprep.subr.bf16.mxu0 0
    %3944 = vmatpush1.bf16.msra.mxu0 0
    %3945 = vmatprep.subr.bf16.mxu0 0
    %3946 = vmatpush1.bf16.msra.mxu0 0
    %3947 = vmatprep.subr.bf16.mxu0 0
    %3948 = vmatpush1.bf16.msra.mxu0 0
    %3949 = vmatprep.subr.bf16.mxu0 0
    %3950 = vmatpush1.bf16.msra.mxu0 0
    %3951 = vmatprep.subr.bf16.mxu0 0
    %3952 = vmatpush1.bf16.msra.mxu0 0
    %3953 = vmatprep.subr.bf16.mxu0 0
    %3954 = vmatpush1.bf16.msra.mxu0 0
    %3955 = vmatprep.subr.bf16.mxu0 0
    %3956 = vmatpush1.bf16.msra.mxu0 %v3750
    %3957 = vmatprep.subr.bf16.mxu0 0
    %3958 = vmatpush2.bf16.msra.mxu0 0
    %3959 = vmatprep.subr.bf16.mxu0 0
    %3960 = vmatpush2.bf16.msra.mxu0 0
    %3961 = vmatprep.subr.bf16.mxu0 0
    %3962 = vmatpush2.bf16.msra.mxu0 0
    %3963 = vmatprep.subr.bf16.mxu0 0
    %3964 = vmatpush2.bf16.msra.mxu0 0
    %3965 = vmatprep.subr.bf16.mxu0 0
    %3966 = vmatpush2.bf16.msra.mxu0 0
    %3967 = vmatprep.subr.bf16.mxu0 0
    %3968 = vmatpush2.bf16.msra.mxu0 0
    %3969 = vmatprep.subr.bf16.mxu0 0
    %3970 = vmatpush2.bf16.msra.mxu0 0
    %3971 = vmatprep.subr.bf16.mxu0 0
    %3972 = vmatpush2.bf16.msra.mxu0 0
    %3973 = vmatprep.mubr.bf16.mxu0 0
    %3974 = vmatmul.mubr.bf16.gmra.mxu0 %v3939
    %v3975 = vpop.f32.mrf.mxu0
    %v3976 = vadd.f32 0.0, %v3975
    %v3977 = vpop.f32.mrf.mxu0
    %v3978 = vpop.f32.mrf.mxu0
    %v3979 = vadd.f32 0.0, %v3978
    %v3980 = vpop.f32.mrf.mxu0
    %3981 = vdwg.mxu0
    %v3983 = vsel %vm3377, %v3735, 0
    %3985 = vmatprep.subr.bf16.mxu0 0
    %3986 = vmatpush1.bf16.msra.mxu0 0
    %3987 = vmatprep.subr.bf16.mxu0 0
    %3988 = vmatpush1.bf16.msra.mxu0 0
    %3989 = vmatprep.subr.bf16.mxu0 0
    %3990 = vmatpush1.bf16.msra.mxu0 0
    %3991 = vmatprep.subr.bf16.mxu0 0
    %3992 = vmatpush1.bf16.msra.mxu0 0
    %3993 = vmatprep.subr.bf16.mxu0 0
    %3994 = vmatpush1.bf16.msra.mxu0 0
    %3995 = vmatprep.subr.bf16.mxu0 0
    %3996 = vmatpush1.bf16.msra.mxu0 0
    %3997 = vmatprep.subr.bf16.mxu0 0
    %3998 = vmatpush1.bf16.msra.mxu0 0
    %3999 = vmatprep.subr.bf16.mxu0 0
    %4000 = vmatpush1.bf16.msra.mxu0 %v3751
    %4001 = vmatprep.subr.bf16.mxu0 0
    %4002 = vmatpush2.bf16.msra.mxu0 0
    %4003 = vmatprep.subr.bf16.mxu0 0
    %4004 = vmatpush2.bf16.msra.mxu0 0
    %4005 = vmatprep.subr.bf16.mxu0 0
    %4006 = vmatpush2.bf16.msra.mxu0 0
    %4007 = vmatprep.subr.bf16.mxu0 0
    %4008 = vmatpush2.bf16.msra.mxu0 0
    %4009 = vmatprep.subr.bf16.mxu0 0
    %4010 = vmatpush2.bf16.msra.mxu0 0
    %4011 = vmatprep.subr.bf16.mxu0 0
    %4012 = vmatpush2.bf16.msra.mxu0 0
    %4013 = vmatprep.subr.bf16.mxu0 0
    %4014 = vmatpush2.bf16.msra.mxu0 0
    %4015 = vmatprep.subr.bf16.mxu0 0
    %4016 = vmatpush2.bf16.msra.mxu0 0
    %4017 = vmatprep.mubr.bf16.mxu0 0
    %4018 = vmatmul.mubr.bf16.gmra.mxu0 %v3983
    %v4019 = vpop.f32.mrf.mxu0
    %v4020 = vadd.f32 0.0, %v4019
    %v4021 = vpop.f32.mrf.mxu0
    %v4022 = vpop.f32.mrf.mxu0
    %v4023 = vadd.f32 0.0, %v4022
    %v4024 = vpop.f32.mrf.mxu0
    %4025 = vdwg.mxu0
    %v4027 = vsel %vm3377, %v3736, 0
    %4029 = vmatprep.subr.bf16.mxu0 0
    %4030 = vmatpush1.bf16.msra.mxu0 0
    %4031 = vmatprep.subr.bf16.mxu0 0
    %4032 = vmatpush1.bf16.msra.mxu0 0
    %4033 = vmatprep.subr.bf16.mxu0 0
    %4034 = vmatpush1.bf16.msra.mxu0 0
    %4035 = vmatprep.subr.bf16.mxu0 0
    %4036 = vmatpush1.bf16.msra.mxu0 0
    %4037 = vmatprep.subr.bf16.mxu0 0
    %4038 = vmatpush1.bf16.msra.mxu0 0
    %4039 = vmatprep.subr.bf16.mxu0 0
    %4040 = vmatpush1.bf16.msra.mxu0 0
    %4041 = vmatprep.subr.bf16.mxu0 0
    %4042 = vmatpush1.bf16.msra.mxu0 0
    %4043 = vmatprep.subr.bf16.mxu0 0
    %4044 = vmatpush1.bf16.msra.mxu0 %v3752
    %4045 = vmatprep.subr.bf16.mxu0 0
    %4046 = vmatpush2.bf16.msra.mxu0 0
    %4047 = vmatprep.subr.bf16.mxu0 0
    %4048 = vmatpush2.bf16.msra.mxu0 0
    %4049 = vmatprep.subr.bf16.mxu0 0
    %4050 = vmatpush2.bf16.msra.mxu0 0
    %4051 = vmatprep.subr.bf16.mxu0 0
    %4052 = vmatpush2.bf16.msra.mxu0 0
    %4053 = vmatprep.subr.bf16.mxu0 0
    %4054 = vmatpush2.bf16.msra.mxu0 0
    %4055 = vmatprep.subr.bf16.mxu0 0
    %4056 = vmatpush2.bf16.msra.mxu0 0
    %4057 = vmatprep.subr.bf16.mxu0 0
    %4058 = vmatpush2.bf16.msra.mxu0 0
    %4059 = vmatprep.subr.bf16.mxu0 0
    %4060 = vmatpush2.bf16.msra.mxu0 0
    %4061 = vmatprep.mubr.bf16.mxu0 0
    %4062 = vmatmul.mubr.bf16.gmra.mxu0 %v4027
    %v4063 = vpop.f32.mrf.mxu0
    %v4064 = vadd.f32 0.0, %v4063
    %v4065 = vpop.f32.mrf.mxu0
    %v4066 = vpop.f32.mrf.mxu0
    %v4067 = vadd.f32 0.0, %v4066
    %v4068 = vpop.f32.mrf.mxu0
    %4069 = vdwg.mxu0
    %v4071 = vsel %vm3377, %v3737, 0
    %4073 = vmatprep.subr.bf16.mxu0 0
    %4074 = vmatpush1.bf16.msra.mxu0 0
    %4075 = vmatprep.subr.bf16.mxu0 0
    %4076 = vmatpush1.bf16.msra.mxu0 0
    %4077 = vmatprep.subr.bf16.mxu0 0
    %4078 = vmatpush1.bf16.msra.mxu0 0
    %4079 = vmatprep.subr.bf16.mxu0 0
    %4080 = vmatpush1.bf16.msra.mxu0 0
    %4081 = vmatprep.subr.bf16.mxu0 0
    %4082 = vmatpush1.bf16.msra.mxu0 0
    %4083 = vmatprep.subr.bf16.mxu0 0
    %4084 = vmatpush1.bf16.msra.mxu0 0
    %4085 = vmatprep.subr.bf16.mxu0 0
    %4086 = vmatpush1.bf16.msra.mxu0 0
    %4087 = vmatprep.subr.bf16.mxu0 0
    %4088 = vmatpush1.bf16.msra.mxu0 %v3753
    %4089 = vmatprep.subr.bf16.mxu0 0
    %4090 = vmatpush2.bf16.msra.mxu0 0
    %4091 = vmatprep.subr.bf16.mxu0 0
    %4092 = vmatpush2.bf16.msra.mxu0 0
    %4093 = vmatprep.subr.bf16.mxu0 0
    %4094 = vmatpush2.bf16.msra.mxu0 0
    %4095 = vmatprep.subr.bf16.mxu0 0
    %4096 = vmatpush2.bf16.msra.mxu0 0
    %4097 = vmatprep.subr.bf16.mxu0 0
    %4098 = vmatpush2.bf16.msra.mxu0 0
    %4099 = vmatprep.subr.bf16.mxu0 0
    %4100 = vmatpush2.bf16.msra.mxu0 0
    %4101 = vmatprep.subr.bf16.mxu0 0
    %4102 = vmatpush2.bf16.msra.mxu0 0
    %4103 = vmatprep.subr.bf16.mxu0 0
    %4104 = vmatpush2.bf16.msra.mxu0 0
    %4105 = vmatprep.mubr.bf16.mxu0 0
    %4106 = vmatmul.mubr.bf16.gmra.mxu0 %v4071
    %v4107 = vpop.f32.mrf.mxu0
    %v4108 = vadd.f32 0.0, %v4107
    %v4109 = vpop.f32.mrf.mxu0
    %v4110 = vpop.f32.mrf.mxu0
    %v4111 = vadd.f32 0.0, %v4110
    %v4112 = vpop.f32.mrf.mxu0
    %4113 = vdwg.mxu0
    %v4115 = vsel %vm3377, %v3738, 0
    %4117 = vmatprep.subr.bf16.mxu0 0
    %4118 = vmatpush1.bf16.msra.mxu0 0
    %4119 = vmatprep.subr.bf16.mxu0 0
    %4120 = vmatpush1.bf16.msra.mxu0 0
    %4121 = vmatprep.subr.bf16.mxu0 0
    %4122 = vmatpush1.bf16.msra.mxu0 0
    %4123 = vmatprep.subr.bf16.mxu0 0
    %4124 = vmatpush1.bf16.msra.mxu0 0
    %4125 = vmatprep.subr.bf16.mxu0 0
    %4126 = vmatpush1.bf16.msra.mxu0 0
    %4127 = vmatprep.subr.bf16.mxu0 0
    %4128 = vmatpush1.bf16.msra.mxu0 0
    %4129 = vmatprep.subr.bf16.mxu0 0
    %4130 = vmatpush1.bf16.msra.mxu0 0
    %4131 = vmatprep.subr.bf16.mxu0 0
    %4132 = vmatpush1.bf16.msra.mxu0 %v3754
    %4133 = vmatprep.subr.bf16.mxu0 0
    %4134 = vmatpush2.bf16.msra.mxu0 0
    %4135 = vmatprep.subr.bf16.mxu0 0
    %4136 = vmatpush2.bf16.msra.mxu0 0
    %4137 = vmatprep.subr.bf16.mxu0 0
    %4138 = vmatpush2.bf16.msra.mxu0 0
    %4139 = vmatprep.subr.bf16.mxu0 0
    %4140 = vmatpush2.bf16.msra.mxu0 0
    %4141 = vmatprep.subr.bf16.mxu0 0
    %4142 = vmatpush2.bf16.msra.mxu0 0
    %4143 = vmatprep.subr.bf16.mxu0 0
    %4144 = vmatpush2.bf16.msra.mxu0 0
    %4145 = vmatprep.subr.bf16.mxu0 0
    %4146 = vmatpush2.bf16.msra.mxu0 0
    %4147 = vmatprep.subr.bf16.mxu0 0
    %4148 = vmatpush2.bf16.msra.mxu0 0
    %4149 = vmatprep.mubr.bf16.mxu0 0
    %4150 = vmatmul.mubr.bf16.gmra.mxu0 %v4115
    %v4151 = vpop.f32.mrf.mxu0
    %v4152 = vadd.f32 0.0, %v4151
    %v4153 = vpop.f32.mrf.mxu0
    %v4154 = vpop.f32.mrf.mxu0
    %v4155 = vadd.f32 0.0, %v4154
    %v4156 = vpop.f32.mrf.mxu0
    %4157 = vdwg.mxu0
    %v4159 = vsel %vm3377, %v3739, 0
    %4161 = vmatprep.subr.bf16.mxu0 0
    %4162 = vmatpush1.bf16.msra.mxu0 0
    %4163 = vmatprep.subr.bf16.mxu0 0
    %4164 = vmatpush1.bf16.msra.mxu0 0
    %4165 = vmatprep.subr.bf16.mxu0 0
    %4166 = vmatpush1.bf16.msra.mxu0 0
    %4167 = vmatprep.subr.bf16.mxu0 0
    %4168 = vmatpush1.bf16.msra.mxu0 0
    %4169 = vmatprep.subr.bf16.mxu0 0
    %4170 = vmatpush1.bf16.msra.mxu0 0
    %4171 = vmatprep.subr.bf16.mxu0 0
    %4172 = vmatpush1.bf16.msra.mxu0 0
    %4173 = vmatprep.subr.bf16.mxu0 0
    %4174 = vmatpush1.bf16.msra.mxu0 0
    %4175 = vmatprep.subr.bf16.mxu0 0
    %4176 = vmatpush1.bf16.msra.mxu0 %v3755
    %4177 = vmatprep.subr.bf16.mxu0 0
    %4178 = vmatpush2.bf16.msra.mxu0 0
    %4179 = vmatprep.subr.bf16.mxu0 0
    %4180 = vmatpush2.bf16.msra.mxu0 0
    %4181 = vmatprep.subr.bf16.mxu0 0
    %4182 = vmatpush2.bf16.msra.mxu0 0
    %4183 = vmatprep.subr.bf16.mxu0 0
    %4184 = vmatpush2.bf16.msra.mxu0 0
    %4185 = vmatprep.subr.bf16.mxu0 0
    %4186 = vmatpush2.bf16.msra.mxu0 0
    %4187 = vmatprep.subr.bf16.mxu0 0
    %4188 = vmatpush2.bf16.msra.mxu0 0
    %4189 = vmatprep.subr.bf16.mxu0 0
    %4190 = vmatpush2.bf16.msra.mxu0 0
    %4191 = vmatprep.subr.bf16.mxu0 0
    %4192 = vmatpush2.bf16.msra.mxu0 0
    %4193 = vmatprep.mubr.bf16.mxu0 0
    %4194 = vmatmul.mubr.bf16.gmra.mxu0 %v4159
    %v4195 = vpop.f32.mrf.mxu0
    %v4196 = vadd.f32 0.0, %v4195
    %v4197 = vpop.f32.mrf.mxu0
    %v4198 = vpop.f32.mrf.mxu0
    %v4199 = vadd.f32 0.0, %v4198
    %v4200 = vpop.f32.mrf.mxu0
    %4201 = vdwg.mxu0
    %v4203 = vsel %vm3377, %v3740, 0
    %4205 = vmatprep.subr.bf16.mxu0 0
    %4206 = vmatpush1.bf16.msra.mxu0 0
    %4207 = vmatprep.subr.bf16.mxu0 0
    %4208 = vmatpush1.bf16.msra.mxu0 0
    %4209 = vmatprep.subr.bf16.mxu0 0
    %4210 = vmatpush1.bf16.msra.mxu0 0
    %4211 = vmatprep.subr.bf16.mxu0 0
    %4212 = vmatpush1.bf16.msra.mxu0 0
    %4213 = vmatprep.subr.bf16.mxu0 0
    %4214 = vmatpush1.bf16.msra.mxu0 0
    %4215 = vmatprep.subr.bf16.mxu0 0
    %4216 = vmatpush1.bf16.msra.mxu0 0
    %4217 = vmatprep.subr.bf16.mxu0 0
    %4218 = vmatpush1.bf16.msra.mxu0 0
    %4219 = vmatprep.subr.bf16.mxu0 0
    %4220 = vmatpush1.bf16.msra.mxu0 %v3756
    %4221 = vmatprep.subr.bf16.mxu0 0
    %4222 = vmatpush2.bf16.msra.mxu0 0
    %4223 = vmatprep.subr.bf16.mxu0 0
    %4224 = vmatpush2.bf16.msra.mxu0 0
    %4225 = vmatprep.subr.bf16.mxu0 0
    %4226 = vmatpush2.bf16.msra.mxu0 0
    %4227 = vmatprep.subr.bf16.mxu0 0
    %4228 = vmatpush2.bf16.msra.mxu0 0
    %4229 = vmatprep.subr.bf16.mxu0 0
    %4230 = vmatpush2.bf16.msra.mxu0 0
    %4231 = vmatprep.subr.bf16.mxu0 0
    %4232 = vmatpush2.bf16.msra.mxu0 0
    %4233 = vmatprep.subr.bf16.mxu0 0
    %4234 = vmatpush2.bf16.msra.mxu0 0
    %4235 = vmatprep.subr.bf16.mxu0 0
    %4236 = vmatpush2.bf16.msra.mxu0 0
    %4237 = vmatprep.mubr.bf16.mxu0 0
    %4238 = vmatmul.mubr.bf16.gmra.mxu0 %v4203
    %v4239 = vpop.f32.mrf.mxu0
    %v4240 = vadd.f32 0.0, %v4239
    %v4241 = vpop.f32.mrf.mxu0
    %v4242 = vpop.f32.mrf.mxu0
    %v4243 = vadd.f32 0.0, %v4242
    %v4244 = vpop.f32.mrf.mxu0
    %4245 = vdwg.mxu0
    %v4247 = vsel %vm3377, %v3741, 0
    %4249 = vmatprep.subr.bf16.mxu0 0
    %4250 = vmatpush1.bf16.msra.mxu0 0
    %4251 = vmatprep.subr.bf16.mxu0 0
    %4252 = vmatpush1.bf16.msra.mxu0 0
    %4253 = vmatprep.subr.bf16.mxu0 0
    %4254 = vmatpush1.bf16.msra.mxu0 0
    %4255 = vmatprep.subr.bf16.mxu0 0
    %4256 = vmatpush1.bf16.msra.mxu0 0
    %4257 = vmatprep.subr.bf16.mxu0 0
    %4258 = vmatpush1.bf16.msra.mxu0 0
    %4259 = vmatprep.subr.bf16.mxu0 0
    %4260 = vmatpush1.bf16.msra.mxu0 0
    %4261 = vmatprep.subr.bf16.mxu0 0
    %4262 = vmatpush1.bf16.msra.mxu0 0
    %4263 = vmatprep.subr.bf16.mxu0 0
    %4264 = vmatpush1.bf16.msra.mxu0 %v3757
    %4265 = vmatprep.subr.bf16.mxu0 0
    %4266 = vmatpush2.bf16.msra.mxu0 0
    %4267 = vmatprep.subr.bf16.mxu0 0
    %4268 = vmatpush2.bf16.msra.mxu0 0
    %4269 = vmatprep.subr.bf16.mxu0 0
    %4270 = vmatpush2.bf16.msra.mxu0 0
    %4271 = vmatprep.subr.bf16.mxu0 0
    %4272 = vmatpush2.bf16.msra.mxu0 0
    %4273 = vmatprep.subr.bf16.mxu0 0
    %4274 = vmatpush2.bf16.msra.mxu0 0
    %4275 = vmatprep.subr.bf16.mxu0 0
    %4276 = vmatpush2.bf16.msra.mxu0 0
    %4277 = vmatprep.subr.bf16.mxu0 0
    %4278 = vmatpush2.bf16.msra.mxu0 0
    %4279 = vmatprep.subr.bf16.mxu0 0
    %4280 = vmatpush2.bf16.msra.mxu0 0
    %4281 = vmatprep.mubr.bf16.mxu0 0
    %4282 = vmatmul.mubr.bf16.gmra.mxu0 %v4247
    %v4283 = vpop.f32.mrf.mxu0
    %v4284 = vadd.f32 0.0, %v4283
    %v4285 = vpop.f32.mrf.mxu0
    %v4286 = vpop.f32.mrf.mxu0
    %v4287 = vadd.f32 0.0, %v4286
    %v4288 = vpop.f32.mrf.mxu0
    %4289 = vdwg.mxu0
    %v4291 = vsel %vm3377, %v3742, 0
    %4293 = vmatprep.subr.bf16.mxu0 0
    %4294 = vmatpush1.bf16.msra.mxu0 0
    %4295 = vmatprep.subr.bf16.mxu0 0
    %4296 = vmatpush1.bf16.msra.mxu0 0
    %4297 = vmatprep.subr.bf16.mxu0 0
    %4298 = vmatpush1.bf16.msra.mxu0 0
    %4299 = vmatprep.subr.bf16.mxu0 0
    %4300 = vmatpush1.bf16.msra.mxu0 0
    %4301 = vmatprep.subr.bf16.mxu0 0
    %4302 = vmatpush1.bf16.msra.mxu0 0
    %4303 = vmatprep.subr.bf16.mxu0 0
    %4304 = vmatpush1.bf16.msra.mxu0 0
    %4305 = vmatprep.subr.bf16.mxu0 0
    %4306 = vmatpush1.bf16.msra.mxu0 0
    %4307 = vmatprep.subr.bf16.mxu0 0
    %4308 = vmatpush1.bf16.msra.mxu0 %v3758
    %4309 = vmatprep.subr.bf16.mxu0 0
    %4310 = vmatpush2.bf16.msra.mxu0 0
    %4311 = vmatprep.subr.bf16.mxu0 0
    %4312 = vmatpush2.bf16.msra.mxu0 0
    %4313 = vmatprep.subr.bf16.mxu0 0
    %4314 = vmatpush2.bf16.msra.mxu0 0
    %4315 = vmatprep.subr.bf16.mxu0 0
    %4316 = vmatpush2.bf16.msra.mxu0 0
    %4317 = vmatprep.subr.bf16.mxu0 0
    %4318 = vmatpush2.bf16.msra.mxu0 0
    %4319 = vmatprep.subr.bf16.mxu0 0
    %4320 = vmatpush2.bf16.msra.mxu0 0
    %4321 = vmatprep.subr.bf16.mxu0 0
    %4322 = vmatpush2.bf16.msra.mxu0 0
    %4323 = vmatprep.subr.bf16.mxu0 0
    %4324 = vmatpush2.bf16.msra.mxu0 0
    %4325 = vmatprep.mubr.bf16.mxu0 0
    %4326 = vmatmul.mubr.bf16.gmra.mxu0 %v4291
    %v4327 = vpop.f32.mrf.mxu0
    %v4328 = vadd.f32 0.0, %v4327
    %v4329 = vpop.f32.mrf.mxu0
    %v4330 = vpop.f32.mrf.mxu0
    %v4331 = vadd.f32 0.0, %v4330
    %v4332 = vpop.f32.mrf.mxu0
    %4333 = vdwg.mxu0
    %v4335 = vsel %vm3377, %v3743, 0
    %4337 = vmatprep.subr.bf16.mxu0 0
    %4338 = vmatpush1.bf16.msra.mxu0 0
    %4339 = vmatprep.subr.bf16.mxu0 0
    %4340 = vmatpush1.bf16.msra.mxu0 0
    %4341 = vmatprep.subr.bf16.mxu0 0
    %4342 = vmatpush1.bf16.msra.mxu0 0
    %4343 = vmatprep.subr.bf16.mxu0 0
    %4344 = vmatpush1.bf16.msra.mxu0 0
    %4345 = vmatprep.subr.bf16.mxu0 0
    %4346 = vmatpush1.bf16.msra.mxu0 0
    %4347 = vmatprep.subr.bf16.mxu0 0
    %4348 = vmatpush1.bf16.msra.mxu0 0
    %4349 = vmatprep.subr.bf16.mxu0 0
    %4350 = vmatpush1.bf16.msra.mxu0 0
    %4351 = vmatprep.subr.bf16.mxu0 0
    %4352 = vmatpush1.bf16.msra.mxu0 %v3759
    %4353 = vmatprep.subr.bf16.mxu0 0
    %4354 = vmatpush2.bf16.msra.mxu0 0
    %4355 = vmatprep.subr.bf16.mxu0 0
    %4356 = vmatpush2.bf16.msra.mxu0 0
    %4357 = vmatprep.subr.bf16.mxu0 0
    %4358 = vmatpush2.bf16.msra.mxu0 0
    %4359 = vmatprep.subr.bf16.mxu0 0
    %4360 = vmatpush2.bf16.msra.mxu0 0
    %4361 = vmatprep.subr.bf16.mxu0 0
    %4362 = vmatpush2.bf16.msra.mxu0 0
    %4363 = vmatprep.subr.bf16.mxu0 0
    %4364 = vmatpush2.bf16.msra.mxu0 0
    %4365 = vmatprep.subr.bf16.mxu0 0
    %4366 = vmatpush2.bf16.msra.mxu0 0
    %4367 = vmatprep.subr.bf16.mxu0 0
    %4368 = vmatpush2.bf16.msra.mxu0 0
    %4369 = vmatprep.mubr.bf16.mxu0 0
    %4370 = vmatmul.mubr.bf16.gmra.mxu0 %v4335
    %v4371 = vpop.f32.mrf.mxu0
    %v4372 = vadd.f32 0.0, %v4371
    %v4373 = vpop.f32.mrf.mxu0
    %v4374 = vpop.f32.mrf.mxu0
    %v4375 = vadd.f32 0.0, %v4374
    %v4376 = vpop.f32.mrf.mxu0
    %4377 = vdwg.mxu0
    %v4379 = vsel %vm3377, %v3744, 0
    %4381 = vmatprep.subr.bf16.mxu0 0
    %4382 = vmatpush1.bf16.msra.mxu0 0
    %4383 = vmatprep.subr.bf16.mxu0 0
    %4384 = vmatpush1.bf16.msra.mxu0 0
    %4385 = vmatprep.subr.bf16.mxu0 0
    %4386 = vmatpush1.bf16.msra.mxu0 0
    %4387 = vmatprep.subr.bf16.mxu0 0
    %4388 = vmatpush1.bf16.msra.mxu0 0
    %4389 = vmatprep.subr.bf16.mxu0 0
    %4390 = vmatpush1.bf16.msra.mxu0 0
    %4391 = vmatprep.subr.bf16.mxu0 0
    %4392 = vmatpush1.bf16.msra.mxu0 0
    %4393 = vmatprep.subr.bf16.mxu0 0
    %4394 = vmatpush1.bf16.msra.mxu0 0
    %4395 = vmatprep.subr.bf16.mxu0 0
    %4396 = vmatpush1.bf16.msra.mxu0 %v3760
    %4397 = vmatprep.subr.bf16.mxu0 0
    %4398 = vmatpush2.bf16.msra.mxu0 0
    %4399 = vmatprep.subr.bf16.mxu0 0
    %4400 = vmatpush2.bf16.msra.mxu0 0
    %4401 = vmatprep.subr.bf16.mxu0 0
    %4402 = vmatpush2.bf16.msra.mxu0 0
    %4403 = vmatprep.subr.bf16.mxu0 0
    %4404 = vmatpush2.bf16.msra.mxu0 0
    %4405 = vmatprep.subr.bf16.mxu0 0
    %4406 = vmatpush2.bf16.msra.mxu0 0
    %4407 = vmatprep.subr.bf16.mxu0 0
    %4408 = vmatpush2.bf16.msra.mxu0 0
    %4409 = vmatprep.subr.bf16.mxu0 0
    %4410 = vmatpush2.bf16.msra.mxu0 0
    %4411 = vmatprep.subr.bf16.mxu0 0
    %4412 = vmatpush2.bf16.msra.mxu0 0
    %4413 = vmatprep.mubr.bf16.mxu0 0
    %4414 = vmatmul.mubr.bf16.gmra.mxu0 %v4379
    %v4415 = vpop.f32.mrf.mxu0
    %v4416 = vadd.f32 0.0, %v4415
    %v4417 = vpop.f32.mrf.mxu0
    %v4418 = vpop.f32.mrf.mxu0
    %v4419 = vadd.f32 0.0, %v4418
    %v4420 = vpop.f32.mrf.mxu0
    %4421 = vdwg.mxu0
    %v4423 = vsel %vm3377, %v3745, 0
    %4425 = vmatprep.subr.bf16.mxu0 0
    %4426 = vmatpush1.bf16.msra.mxu0 0
    %4427 = vmatprep.subr.bf16.mxu0 0
    %4428 = vmatpush1.bf16.msra.mxu0 0
    %4429 = vmatprep.subr.bf16.mxu0 0
    %4430 = vmatpush1.bf16.msra.mxu0 0
    %4431 = vmatprep.subr.bf16.mxu0 0
    %4432 = vmatpush1.bf16.msra.mxu0 0
    %4433 = vmatprep.subr.bf16.mxu0 0
    %4434 = vmatpush1.bf16.msra.mxu0 0
    %4435 = vmatprep.subr.bf16.mxu0 0
    %4436 = vmatpush1.bf16.msra.mxu0 0
    %4437 = vmatprep.subr.bf16.mxu0 0
    %4438 = vmatpush1.bf16.msra.mxu0 0
    %4439 = vmatprep.subr.bf16.mxu0 0
    %4440 = vmatpush1.bf16.msra.mxu0 %v3761
    %4441 = vmatprep.subr.bf16.mxu0 0
    %4442 = vmatpush2.bf16.msra.mxu0 0
    %4443 = vmatprep.subr.bf16.mxu0 0
    %4444 = vmatpush2.bf16.msra.mxu0 0
    %4445 = vmatprep.subr.bf16.mxu0 0
    %4446 = vmatpush2.bf16.msra.mxu0 0
    %4447 = vmatprep.subr.bf16.mxu0 0
    %4448 = vmatpush2.bf16.msra.mxu0 0
    %4449 = vmatprep.subr.bf16.mxu0 0
    %4450 = vmatpush2.bf16.msra.mxu0 0
    %4451 = vmatprep.subr.bf16.mxu0 0
    %4452 = vmatpush2.bf16.msra.mxu0 0
    %4453 = vmatprep.subr.bf16.mxu0 0
    %4454 = vmatpush2.bf16.msra.mxu0 0
    %4455 = vmatprep.subr.bf16.mxu0 0
    %4456 = vmatpush2.bf16.msra.mxu0 0
    %4457 = vmatprep.mubr.bf16.mxu0 0
    %4458 = vmatmul.mubr.bf16.gmra.mxu0 %v4423
    %v4459 = vpop.f32.mrf.mxu0
    %v4460 = vadd.f32 0.0, %v4459
    %v4461 = vpop.f32.mrf.mxu0
    %v4462 = vpop.f32.mrf.mxu0
    %v4463 = vadd.f32 0.0, %v4462
    %v4464 = vpop.f32.mrf.mxu0
    %4465 = vdwg.mxu0
    %v4466 = vpack.c.bf16 %v3803, %v3800
    %v4467 = vpack.c.bf16 %v3847, %v3844
    %v4468 = vpack.c.bf16 %v3891, %v3888
    %v4469 = vpack.c.bf16 %v3935, %v3932
    %v4470 = vpack.c.bf16 %v3979, %v3976
    %v4471 = vpack.c.bf16 %v4023, %v4020
    %v4472 = vpack.c.bf16 %v4067, %v4064
    %v4473 = vpack.c.bf16 %v4111, %v4108
    %v4474 = vpack.c.bf16 %v4155, %v4152
    %v4475 = vpack.c.bf16 %v4199, %v4196
    %v4476 = vpack.c.bf16 %v4243, %v4240
    %v4477 = vpack.c.bf16 %v4287, %v4284
    %v4478 = vpack.c.bf16 %v4331, %v4328
    %v4479 = vpack.c.bf16 %v4375, %v4372
    %v4480 = vpack.c.bf16 %v4419, %v4416
    %v4481 = vpack.c.bf16 %v4463, %v4460
    %v4482 = vld [vmem:[%s2] sm:$0xf]
    %v4483 = vld [vmem:[%s2 + $0x4] sm:$0xf]
    %v4484 = vld [vmem:[%s2 + $0x8] sm:$0xf]
    %v4485 = vld [vmem:[%s2 + $0xc] sm:$0xf]
    %v4486 = vld [vmem:[%s2 + $0x10] sm:$0xf]
    %v4487 = vld [vmem:[%s2 + $0x14] sm:$0xf]
    %v4488 = vld [vmem:[%s2 + $0x18] sm:$0xf]
    %v4489 = vld [vmem:[%s2 + $0x1c] sm:$0xf]
    %v4491 = vsel %vm1984, %v4466, 0
    %v4494 = vsel %vm1984, %v4467, 0
    %vm4496 = vcmask 1043456
    %v4498 = vsel %vm4496, %v4482, 0
    %4500 = vmatprep.subr.bf16.mxu0 0
    %4501 = vmatpush1.bf16.msra.mxu0 0
    %4502 = vmatprep.subr.bf16.mxu0 0
    %4503 = vmatpush1.bf16.msra.mxu0 0
    %4504 = vmatprep.subr.bf16.mxu0 0
    %4505 = vmatpush1.bf16.msra.mxu0 0
    %4506 = vmatprep.subr.bf16.mxu0 0
    %4507 = vmatpush1.bf16.msra.mxu0 0
    %4508 = vmatprep.subr.bf16.mxu0 0
    %4509 = vmatpush1.bf16.msra.mxu0 0
    %4510 = vmatprep.subr.bf16.mxu0 0
    %4511 = vmatpush1.bf16.msra.mxu0 0
    %4512 = vmatprep.subr.bf16.mxu0 0
    %4513 = vmatpush1.bf16.msra.mxu0 0
    %4514 = vmatprep.subr.bf16.mxu0 0
    %4515 = vmatpush1.bf16.msra.mxu0 %v4498
    %4516 = vmatprep.subr.bf16.mxu0 0
    %4517 = vmatpush2.bf16.msra.mxu0 0
    %4518 = vmatprep.subr.bf16.mxu0 0
    %4519 = vmatpush2.bf16.msra.mxu0 0
    %4520 = vmatprep.subr.bf16.mxu0 0
    %4521 = vmatpush2.bf16.msra.mxu0 0
    %4522 = vmatprep.subr.bf16.mxu0 0
    %4523 = vmatpush2.bf16.msra.mxu0 0
    %4524 = vmatprep.subr.bf16.mxu0 0
    %4525 = vmatpush2.bf16.msra.mxu0 0
    %4526 = vmatprep.subr.bf16.mxu0 0
    %4527 = vmatpush2.bf16.msra.mxu0 0
    %4528 = vmatprep.subr.bf16.mxu0 0
    %4529 = vmatpush2.bf16.msra.mxu0 0
    %4530 = vmatprep.subr.bf16.mxu0 0
    %4531 = vmatpush2.bf16.msra.mxu0 0
    %4532 = vmatprep.mubr.bf16.mxu0 0
    %4533 = vmatmul.mubr.bf16.gmra.mxu0 %v4491
    %v4534 = vpop.f32.mrf.mxu0
    %v4535 = vadd.f32 0.0, %v4534
    %v4536 = vpop.f32.mrf.mxu0
    %v4537 = vpop.f32.mrf.mxu0
    %v4538 = vadd.f32 0.0, %v4537
    %v4539 = vpop.f32.mrf.mxu0
    %4540 = vmatprep.mubr.bf16.mxu0 0
    %4541 = vmatmul.mubr.bf16.gmra.mxu0 %v4494
    %v4542 = vpop.f32.mrf.mxu0
    %v4543 = vadd.f32 0.0, %v4542
    %v4544 = vpop.f32.mrf.mxu0
    %v4545 = vpop.f32.mrf.mxu0
    %v4546 = vadd.f32 0.0, %v4545
    %v4547 = vpop.f32.mrf.mxu0
    %4548 = vdwg.mxu0
    %v4550 = vsel %vm1984, %v4468, 0
    %v4553 = vsel %vm1984, %v4469, 0
    %v4556 = vsel %vm4496, %v4483, 0
    %4558 = vmatprep.subr.bf16.mxu0 0
    %4559 = vmatpush1.bf16.msra.mxu0 0
    %4560 = vmatprep.subr.bf16.mxu0 0
    %4561 = vmatpush1.bf16.msra.mxu0 0
    %4562 = vmatprep.subr.bf16.mxu0 0
    %4563 = vmatpush1.bf16.msra.mxu0 0
    %4564 = vmatprep.subr.bf16.mxu0 0
    %4565 = vmatpush1.bf16.msra.mxu0 0
    %4566 = vmatprep.subr.bf16.mxu0 0
    %4567 = vmatpush1.bf16.msra.mxu0 0
    %4568 = vmatprep.subr.bf16.mxu0 0
    %4569 = vmatpush1.bf16.msra.mxu0 0
    %4570 = vmatprep.subr.bf16.mxu0 0
    %4571 = vmatpush1.bf16.msra.mxu0 0
    %4572 = vmatprep.subr.bf16.mxu0 0
    %4573 = vmatpush1.bf16.msra.mxu0 %v4556
    %4574 = vmatprep.subr.bf16.mxu0 0
    %4575 = vmatpush2.bf16.msra.mxu0 0
    %4576 = vmatprep.subr.bf16.mxu0 0
    %4577 = vmatpush2.bf16.msra.mxu0 0
    %4578 = vmatprep.subr.bf16.mxu0 0
    %4579 = vmatpush2.bf16.msra.mxu0 0
    %4580 = vmatprep.subr.bf16.mxu0 0
    %4581 = vmatpush2.bf16.msra.mxu0 0
    %4582 = vmatprep.subr.bf16.mxu0 0
    %4583 = vmatpush2.bf16.msra.mxu0 0
    %4584 = vmatprep.subr.bf16.mxu0 0
    %4585 = vmatpush2.bf16.msra.mxu0 0
    %4586 = vmatprep.subr.bf16.mxu0 0
    %4587 = vmatpush2.bf16.msra.mxu0 0
    %4588 = vmatprep.subr.bf16.mxu0 0
    %4589 = vmatpush2.bf16.msra.mxu0 0
    %4590 = vmatprep.mubr.bf16.mxu0 0
    %4591 = vmatmul.mubr.bf16.gmra.mxu0 %v4550
    %v4592 = vpop.f32.mrf.mxu0
    %v4593 = vadd.f32 0.0, %v4592
    %v4594 = vpop.f32.mrf.mxu0
    %v4595 = vpop.f32.mrf.mxu0
    %v4596 = vadd.f32 0.0, %v4595
    %v4597 = vpop.f32.mrf.mxu0
    %4598 = vmatprep.mubr.bf16.mxu0 0
    %4599 = vmatmul.mubr.bf16.gmra.mxu0 %v4553
    %v4600 = vpop.f32.mrf.mxu0
    %v4601 = vadd.f32 0.0, %v4600
    %v4602 = vpop.f32.mrf.mxu0
    %v4603 = vpop.f32.mrf.mxu0
    %v4604 = vadd.f32 0.0, %v4603
    %v4605 = vpop.f32.mrf.mxu0
    %4606 = vdwg.mxu0
    %v4608 = vsel %vm1984, %v4470, 0
    %v4611 = vsel %vm1984, %v4471, 0
    %v4614 = vsel %vm4496, %v4484, 0
    %4616 = vmatprep.subr.bf16.mxu0 0
    %4617 = vmatpush1.bf16.msra.mxu0 0
    %4618 = vmatprep.subr.bf16.mxu0 0
    %4619 = vmatpush1.bf16.msra.mxu0 0
    %4620 = vmatprep.subr.bf16.mxu0 0
    %4621 = vmatpush1.bf16.msra.mxu0 0
    %4622 = vmatprep.subr.bf16.mxu0 0
    %4623 = vmatpush1.bf16.msra.mxu0 0
    %4624 = vmatprep.subr.bf16.mxu0 0
    %4625 = vmatpush1.bf16.msra.mxu0 0
    %4626 = vmatprep.subr.bf16.mxu0 0
    %4627 = vmatpush1.bf16.msra.mxu0 0
    %4628 = vmatprep.subr.bf16.mxu0 0
    %4629 = vmatpush1.bf16.msra.mxu0 0
    %4630 = vmatprep.subr.bf16.mxu0 0
    %4631 = vmatpush1.bf16.msra.mxu0 %v4614
    %4632 = vmatprep.subr.bf16.mxu0 0
    %4633 = vmatpush2.bf16.msra.mxu0 0
    %4634 = vmatprep.subr.bf16.mxu0 0
    %4635 = vmatpush2.bf16.msra.mxu0 0
    %4636 = vmatprep.subr.bf16.mxu0 0
    %4637 = vmatpush2.bf16.msra.mxu0 0
    %4638 = vmatprep.subr.bf16.mxu0 0
    %4639 = vmatpush2.bf16.msra.mxu0 0
    %4640 = vmatprep.subr.bf16.mxu0 0
    %4641 = vmatpush2.bf16.msra.mxu0 0
    %4642 = vmatprep.subr.bf16.mxu0 0
    %4643 = vmatpush2.bf16.msra.mxu0 0
    %4644 = vmatprep.subr.bf16.mxu0 0
    %4645 = vmatpush2.bf16.msra.mxu0 0
    %4646 = vmatprep.subr.bf16.mxu0 0
    %4647 = vmatpush2.bf16.msra.mxu0 0
    %4648 = vmatprep.mubr.bf16.mxu0 0
    %4649 = vmatmul.mubr.bf16.gmra.mxu0 %v4608
    %v4650 = vpop.f32.mrf.mxu0
    %v4651 = vadd.f32 0.0, %v4650
    %v4652 = vpop.f32.mrf.mxu0
    %v4653 = vpop.f32.mrf.mxu0
    %v4654 = vadd.f32 0.0, %v4653
    %v4655 = vpop.f32.mrf.mxu0
    %4656 = vmatprep.mubr.bf16.mxu0 0
    %4657 = vmatmul.mubr.bf16.gmra.mxu0 %v4611
    %v4658 = vpop.f32.mrf.mxu0
    %v4659 = vadd.f32 0.0, %v4658
    %v4660 = vpop.f32.mrf.mxu0
    %v4661 = vpop.f32.mrf.mxu0
    %v4662 = vadd.f32 0.0, %v4661
    %v4663 = vpop.f32.mrf.mxu0
    %4664 = vdwg.mxu0
    %v4666 = vsel %vm1984, %v4472, 0
    %v4669 = vsel %vm1984, %v4473, 0
    %v4672 = vsel %vm4496, %v4485, 0
    %4674 = vmatprep.subr.bf16.mxu0 0
    %4675 = vmatpush1.bf16.msra.mxu0 0
    %4676 = vmatprep.subr.bf16.mxu0 0
    %4677 = vmatpush1.bf16.msra.mxu0 0
    %4678 = vmatprep.subr.bf16.mxu0 0
    %4679 = vmatpush1.bf16.msra.mxu0 0
    %4680 = vmatprep.subr.bf16.mxu0 0
    %4681 = vmatpush1.bf16.msra.mxu0 0
    %4682 = vmatprep.subr.bf16.mxu0 0
    %4683 = vmatpush1.bf16.msra.mxu0 0
    %4684 = vmatprep.subr.bf16.mxu0 0
    %4685 = vmatpush1.bf16.msra.mxu0 0
    %4686 = vmatprep.subr.bf16.mxu0 0
    %4687 = vmatpush1.bf16.msra.mxu0 0
    %4688 = vmatprep.subr.bf16.mxu0 0
    %4689 = vmatpush1.bf16.msra.mxu0 %v4672
    %4690 = vmatprep.subr.bf16.mxu0 0
    %4691 = vmatpush2.bf16.msra.mxu0 0
    %4692 = vmatprep.subr.bf16.mxu0 0
    %4693 = vmatpush2.bf16.msra.mxu0 0
    %4694 = vmatprep.subr.bf16.mxu0 0
    %4695 = vmatpush2.bf16.msra.mxu0 0
    %4696 = vmatprep.subr.bf16.mxu0 0
    %4697 = vmatpush2.bf16.msra.mxu0 0
    %4698 = vmatprep.subr.bf16.mxu0 0
    %4699 = vmatpush2.bf16.msra.mxu0 0
    %4700 = vmatprep.subr.bf16.mxu0 0
    %4701 = vmatpush2.bf16.msra.mxu0 0
    %4702 = vmatprep.subr.bf16.mxu0 0
    %4703 = vmatpush2.bf16.msra.mxu0 0
    %4704 = vmatprep.subr.bf16.mxu0 0
    %4705 = vmatpush2.bf16.msra.mxu0 0
    %4706 = vmatprep.mubr.bf16.mxu0 0
    %4707 = vmatmul.mubr.bf16.gmra.mxu0 %v4666
    %v4708 = vpop.f32.mrf.mxu0
    %v4709 = vadd.f32 0.0, %v4708
    %v4710 = vpop.f32.mrf.mxu0
    %v4711 = vpop.f32.mrf.mxu0
    %v4712 = vadd.f32 0.0, %v4711
    %v4713 = vpop.f32.mrf.mxu0
    %4714 = vmatprep.mubr.bf16.mxu0 0
    %4715 = vmatmul.mubr.bf16.gmra.mxu0 %v4669
    %v4716 = vpop.f32.mrf.mxu0
    %v4717 = vadd.f32 0.0, %v4716
    %v4718 = vpop.f32.mrf.mxu0
    %v4719 = vpop.f32.mrf.mxu0
    %v4720 = vadd.f32 0.0, %v4719
    %v4721 = vpop.f32.mrf.mxu0
    %4722 = vdwg.mxu0
    %v4724 = vsel %vm1984, %v4474, 0
    %v4727 = vsel %vm1984, %v4475, 0
    %v4730 = vsel %vm4496, %v4486, 0
    %4732 = vmatprep.subr.bf16.mxu0 0
    %4733 = vmatpush1.bf16.msra.mxu0 0
    %4734 = vmatprep.subr.bf16.mxu0 0
    %4735 = vmatpush1.bf16.msra.mxu0 0
    %4736 = vmatprep.subr.bf16.mxu0 0
    %4737 = vmatpush1.bf16.msra.mxu0 0
    %4738 = vmatprep.subr.bf16.mxu0 0
    %4739 = vmatpush1.bf16.msra.mxu0 0
    %4740 = vmatprep.subr.bf16.mxu0 0
    %4741 = vmatpush1.bf16.msra.mxu0 0
    %4742 = vmatprep.subr.bf16.mxu0 0
    %4743 = vmatpush1.bf16.msra.mxu0 0
    %4744 = vmatprep.subr.bf16.mxu0 0
    %4745 = vmatpush1.bf16.msra.mxu0 0
    %4746 = vmatprep.subr.bf16.mxu0 0
    %4747 = vmatpush1.bf16.msra.mxu0 %v4730
    %4748 = vmatprep.subr.bf16.mxu0 0
    %4749 = vmatpush2.bf16.msra.mxu0 0
    %4750 = vmatprep.subr.bf16.mxu0 0
    %4751 = vmatpush2.bf16.msra.mxu0 0
    %4752 = vmatprep.subr.bf16.mxu0 0
    %4753 = vmatpush2.bf16.msra.mxu0 0
    %4754 = vmatprep.subr.bf16.mxu0 0
    %4755 = vmatpush2.bf16.msra.mxu0 0
    %4756 = vmatprep.subr.bf16.mxu0 0
    %4757 = vmatpush2.bf16.msra.mxu0 0
    %4758 = vmatprep.subr.bf16.mxu0 0
    %4759 = vmatpush2.bf16.msra.mxu0 0
    %4760 = vmatprep.subr.bf16.mxu0 0
    %4761 = vmatpush2.bf16.msra.mxu0 0
    %4762 = vmatprep.subr.bf16.mxu0 0
    %4763 = vmatpush2.bf16.msra.mxu0 0
    %4764 = vmatprep.mubr.bf16.mxu0 0
    %4765 = vmatmul.mubr.bf16.gmra.mxu0 %v4724
    %v4766 = vpop.f32.mrf.mxu0
    %v4767 = vadd.f32 0.0, %v4766
    %v4768 = vpop.f32.mrf.mxu0
    %v4769 = vpop.f32.mrf.mxu0
    %v4770 = vadd.f32 0.0, %v4769
    %v4771 = vpop.f32.mrf.mxu0
    %4772 = vmatprep.mubr.bf16.mxu0 0
    %4773 = vmatmul.mubr.bf16.gmra.mxu0 %v4727
    %v4774 = vpop.f32.mrf.mxu0
    %v4775 = vadd.f32 0.0, %v4774
    %v4776 = vpop.f32.mrf.mxu0
    %v4777 = vpop.f32.mrf.mxu0
    %v4778 = vadd.f32 0.0, %v4777
    %v4779 = vpop.f32.mrf.mxu0
    %4780 = vdwg.mxu0
    %v4782 = vsel %vm1984, %v4476, 0
    %v4785 = vsel %vm1984, %v4477, 0
    %v4788 = vsel %vm4496, %v4487, 0
    %4790 = vmatprep.subr.bf16.mxu0 0
    %4791 = vmatpush1.bf16.msra.mxu0 0
    %4792 = vmatprep.subr.bf16.mxu0 0
    %4793 = vmatpush1.bf16.msra.mxu0 0
    %4794 = vmatprep.subr.bf16.mxu0 0
    %4795 = vmatpush1.bf16.msra.mxu0 0
    %4796 = vmatprep.subr.bf16.mxu0 0
    %4797 = vmatpush1.bf16.msra.mxu0 0
    %4798 = vmatprep.subr.bf16.mxu0 0
    %4799 = vmatpush1.bf16.msra.mxu0 0
    %4800 = vmatprep.subr.bf16.mxu0 0
    %4801 = vmatpush1.bf16.msra.mxu0 0
    %4802 = vmatprep.subr.bf16.mxu0 0
    %4803 = vmatpush1.bf16.msra.mxu0 0
    %4804 = vmatprep.subr.bf16.mxu0 0
    %4805 = vmatpush1.bf16.msra.mxu0 %v4788
    %4806 = vmatprep.subr.bf16.mxu0 0
    %4807 = vmatpush2.bf16.msra.mxu0 0
    %4808 = vmatprep.subr.bf16.mxu0 0
    %4809 = vmatpush2.bf16.msra.mxu0 0
    %4810 = vmatprep.subr.bf16.mxu0 0
    %4811 = vmatpush2.bf16.msra.mxu0 0
    %4812 = vmatprep.subr.bf16.mxu0 0
    %4813 = vmatpush2.bf16.msra.mxu0 0
    %4814 = vmatprep.subr.bf16.mxu0 0
    %4815 = vmatpush2.bf16.msra.mxu0 0
    %4816 = vmatprep.subr.bf16.mxu0 0
    %4817 = vmatpush2.bf16.msra.mxu0 0
    %4818 = vmatprep.subr.bf16.mxu0 0
    %4819 = vmatpush2.bf16.msra.mxu0 0
    %4820 = vmatprep.subr.bf16.mxu0 0
    %4821 = vmatpush2.bf16.msra.mxu0 0
    %4822 = vmatprep.mubr.bf16.mxu0 0
    %4823 = vmatmul.mubr.bf16.gmra.mxu0 %v4782
    %v4824 = vpop.f32.mrf.mxu0
    %v4825 = vadd.f32 0.0, %v4824
    %v4826 = vpop.f32.mrf.mxu0
    %v4827 = vpop.f32.mrf.mxu0
    %v4828 = vadd.f32 0.0, %v4827
    %v4829 = vpop.f32.mrf.mxu0
    %4830 = vmatprep.mubr.bf16.mxu0 0
    %4831 = vmatmul.mubr.bf16.gmra.mxu0 %v4785
    %v4832 = vpop.f32.mrf.mxu0
    %v4833 = vadd.f32 0.0, %v4832
    %v4834 = vpop.f32.mrf.mxu0
    %v4835 = vpop.f32.mrf.mxu0
    %v4836 = vadd.f32 0.0, %v4835
    %v4837 = vpop.f32.mrf.mxu0
    %4838 = vdwg.mxu0
    %v4840 = vsel %vm1984, %v4478, 0
    %v4843 = vsel %vm1984, %v4479, 0
    %v4846 = vsel %vm4496, %v4488, 0
    %4848 = vmatprep.subr.bf16.mxu0 0
    %4849 = vmatpush1.bf16.msra.mxu0 0
    %4850 = vmatprep.subr.bf16.mxu0 0
    %4851 = vmatpush1.bf16.msra.mxu0 0
    %4852 = vmatprep.subr.bf16.mxu0 0
    %4853 = vmatpush1.bf16.msra.mxu0 0
    %4854 = vmatprep.subr.bf16.mxu0 0
    %4855 = vmatpush1.bf16.msra.mxu0 0
    %4856 = vmatprep.subr.bf16.mxu0 0
    %4857 = vmatpush1.bf16.msra.mxu0 0
    %4858 = vmatprep.subr.bf16.mxu0 0
    %4859 = vmatpush1.bf16.msra.mxu0 0
    %4860 = vmatprep.subr.bf16.mxu0 0
    %4861 = vmatpush1.bf16.msra.mxu0 0
    %4862 = vmatprep.subr.bf16.mxu0 0
    %4863 = vmatpush1.bf16.msra.mxu0 %v4846
    %4864 = vmatprep.subr.bf16.mxu0 0
    %4865 = vmatpush2.bf16.msra.mxu0 0
    %4866 = vmatprep.subr.bf16.mxu0 0
    %4867 = vmatpush2.bf16.msra.mxu0 0
    %4868 = vmatprep.subr.bf16.mxu0 0
    %4869 = vmatpush2.bf16.msra.mxu0 0
    %4870 = vmatprep.subr.bf16.mxu0 0
    %4871 = vmatpush2.bf16.msra.mxu0 0
    %4872 = vmatprep.subr.bf16.mxu0 0
    %4873 = vmatpush2.bf16.msra.mxu0 0
    %4874 = vmatprep.subr.bf16.mxu0 0
    %4875 = vmatpush2.bf16.msra.mxu0 0
    %4876 = vmatprep.subr.bf16.mxu0 0
    %4877 = vmatpush2.bf16.msra.mxu0 0
    %4878 = vmatprep.subr.bf16.mxu0 0
    %4879 = vmatpush2.bf16.msra.mxu0 0
    %4880 = vmatprep.mubr.bf16.mxu0 0
    %4881 = vmatmul.mubr.bf16.gmra.mxu0 %v4840
    %v4882 = vpop.f32.mrf.mxu0
    %v4883 = vadd.f32 0.0, %v4882
    %v4884 = vpop.f32.mrf.mxu0
    %v4885 = vpop.f32.mrf.mxu0
    %v4886 = vadd.f32 0.0, %v4885
    %v4887 = vpop.f32.mrf.mxu0
    %4888 = vmatprep.mubr.bf16.mxu0 0
    %4889 = vmatmul.mubr.bf16.gmra.mxu0 %v4843
    %v4890 = vpop.f32.mrf.mxu0
    %v4891 = vadd.f32 0.0, %v4890
    %v4892 = vpop.f32.mrf.mxu0
    %v4893 = vpop.f32.mrf.mxu0
    %v4894 = vadd.f32 0.0, %v4893
    %v4895 = vpop.f32.mrf.mxu0
    %4896 = vdwg.mxu0
    %v4898 = vsel %vm1984, %v4480, 0
    %v4901 = vsel %vm1984, %v4481, 0
    %v4904 = vsel %vm4496, %v4489, 0
    %4906 = vmatprep.subr.bf16.mxu0 0
    %4907 = vmatpush1.bf16.msra.mxu0 0
    %4908 = vmatprep.subr.bf16.mxu0 0
    %4909 = vmatpush1.bf16.msra.mxu0 0
    %4910 = vmatprep.subr.bf16.mxu0 0
    %4911 = vmatpush1.bf16.msra.mxu0 0
    %4912 = vmatprep.subr.bf16.mxu0 0
    %4913 = vmatpush1.bf16.msra.mxu0 0
    %4914 = vmatprep.subr.bf16.mxu0 0
    %4915 = vmatpush1.bf16.msra.mxu0 0
    %4916 = vmatprep.subr.bf16.mxu0 0
    %4917 = vmatpush1.bf16.msra.mxu0 0
    %4918 = vmatprep.subr.bf16.mxu0 0
    %4919 = vmatpush1.bf16.msra.mxu0 0
    %4920 = vmatprep.subr.bf16.mxu0 0
    %4921 = vmatpush1.bf16.msra.mxu0 %v4904
    %4922 = vmatprep.subr.bf16.mxu0 0
    %4923 = vmatpush2.bf16.msra.mxu0 0
    %4924 = vmatprep.subr.bf16.mxu0 0
    %4925 = vmatpush2.bf16.msra.mxu0 0
    %4926 = vmatprep.subr.bf16.mxu0 0
    %4927 = vmatpush2.bf16.msra.mxu0 0
    %4928 = vmatprep.subr.bf16.mxu0 0
    %4929 = vmatpush2.bf16.msra.mxu0 0
    %4930 = vmatprep.subr.bf16.mxu0 0
    %4931 = vmatpush2.bf16.msra.mxu0 0
    %4932 = vmatprep.subr.bf16.mxu0 0
    %4933 = vmatpush2.bf16.msra.mxu0 0
    %4934 = vmatprep.subr.bf16.mxu0 0
    %4935 = vmatpush2.bf16.msra.mxu0 0
    %4936 = vmatprep.subr.bf16.mxu0 0
    %4937 = vmatpush2.bf16.msra.mxu0 0
    %4938 = vmatprep.mubr.bf16.mxu0 0
    %4939 = vmatmul.mubr.bf16.gmra.mxu0 %v4898
    %v4940 = vpop.f32.mrf.mxu0
    %v4941 = vadd.f32 0.0, %v4940
    %v4942 = vpop.f32.mrf.mxu0
    %v4943 = vpop.f32.mrf.mxu0
    %v4944 = vadd.f32 0.0, %v4943
    %v4945 = vpop.f32.mrf.mxu0
    %4946 = vmatprep.mubr.bf16.mxu0 0
    %4947 = vmatmul.mubr.bf16.gmra.mxu0 %v4901
    %v4948 = vpop.f32.mrf.mxu0
    %v4949 = vadd.f32 0.0, %v4948
    %v4950 = vpop.f32.mrf.mxu0
    %v4951 = vpop.f32.mrf.mxu0
    %v4952 = vadd.f32 0.0, %v4951
    %v4953 = vpop.f32.mrf.mxu0
    %4954 = vdwg.mxu0
    %v4955 = vsel %vm249, %v4535, 0.0
    %v4956 = vsel %vm249, %v4593, 0.0
    %v4957 = vadd.f32 %v4955, %v4956
    %v4958 = vsel %vm249, %v4651, 0.0
    %v4959 = vadd.f32 %v4957, %v4958
    %v4960 = vsel %vm249, %v4709, 0.0
    %v4961 = vadd.f32 %v4959, %v4960
    %v4962 = vsel %vm249, %v4767, 0.0
    %v4963 = vadd.f32 %v4961, %v4962
    %v4964 = vsel %vm249, %v4825, 0.0
    %v4965 = vadd.f32 %v4963, %v4964
    %v4966 = vsel %vm249, %v4883, 0.0
    %v4967 = vadd.f32 %v4965, %v4966
    %v4968 = vsel %vm249, %v4941, 0.0
    %v4969 = vadd.f32 %v4967, %v4968
    %v4970 = vsel %vm249, %v4538, 0.0
    %v4971 = vsel %vm249, %v4596, 0.0
    %v4972 = vadd.f32 %v4970, %v4971
    %v4973 = vsel %vm249, %v4654, 0.0
    %v4974 = vadd.f32 %v4972, %v4973
    %v4975 = vsel %vm249, %v4712, 0.0
    %v4976 = vadd.f32 %v4974, %v4975
    %v4977 = vsel %vm249, %v4770, 0.0
    %v4978 = vadd.f32 %v4976, %v4977
    %v4979 = vsel %vm249, %v4828, 0.0
    %v4980 = vadd.f32 %v4978, %v4979
    %v4981 = vsel %vm249, %v4886, 0.0
    %v4982 = vadd.f32 %v4980, %v4981
    %v4983 = vsel %vm249, %v4944, 0.0
    %v4984 = vadd.f32 %v4982, %v4983
    %v4985 = vsel %vm249, %v4543, 0.0
    %v4986 = vsel %vm249, %v4601, 0.0
    %v4987 = vadd.f32 %v4985, %v4986
    %v4988 = vsel %vm249, %v4659, 0.0
    %v4989 = vadd.f32 %v4987, %v4988
    %v4990 = vsel %vm249, %v4717, 0.0
    %v4991 = vadd.f32 %v4989, %v4990
    %v4992 = vsel %vm249, %v4775, 0.0
    %v4993 = vadd.f32 %v4991, %v4992
    %v4994 = vsel %vm249, %v4833, 0.0
    %v4995 = vadd.f32 %v4993, %v4994
    %v4996 = vsel %vm249, %v4891, 0.0
    %v4997 = vadd.f32 %v4995, %v4996
    %v4998 = vsel %vm249, %v4949, 0.0
    %v4999 = vadd.f32 %v4997, %v4998
    %v5000 = vsel %vm249, %v4546, 0.0
    %v5001 = vsel %vm249, %v4604, 0.0
    %v5002 = vadd.f32 %v5000, %v5001
    %v5003 = vsel %vm249, %v4662, 0.0
    %v5004 = vadd.f32 %v5002, %v5003
    %v5005 = vsel %vm249, %v4720, 0.0
    %v5006 = vadd.f32 %v5004, %v5005
    %v5007 = vsel %vm249, %v4778, 0.0
    %v5008 = vadd.f32 %v5006, %v5007
    %v5009 = vsel %vm249, %v4836, 0.0
    %v5010 = vadd.f32 %v5008, %v5009
    %v5011 = vsel %vm249, %v4894, 0.0
    %v5012 = vadd.f32 %v5010, %v5011
    %v5013 = vsel %vm249, %v4952, 0.0
    %v5014 = vadd.f32 %v5012, %v5013
    %v5015 = vld [vmem:[%s3] sm:$0x1]
    %v5017 = vlaneseq
    %v5018 = vshrl.u32 %v5017, 7
    %v5019 = vsub.s32 0, %v5018
    %v5020 = vrot.slane %v5015, %v5019
    %v5022 = vadd.f32 %v4969, %v5020
    %v5023 = vadd.f32 %v4984, %v5020
    %v5024 = vadd.f32 %v4999, %v5020
    %v5025 = vadd.f32 %v5014, %v5020
    %5026 = vst.msk [vmem:[#allocation2] sm:$0xff] %vm249, %v5022
    %5027 = vst.msk [vmem:[#allocation2 + $0x8] sm:$0xff] %vm249, %v5023
    %5028 = vst.msk [vmem:[#allocation2 + $0x10] sm:$0xff] %vm249, %v5024
    %5029 = vst.msk [vmem:[#allocation2 + $0x18] sm:$0xff] %vm249, %v5025
    // Predicated region
    $region18: #{tpu_custom_call.1} parent=1 // pred_check
      _
    $region19: #{tpu_custom_call.1} parent=1 // pred_check_branch
      %5031 = sbr.rel (0) target = $region21
    $region20: #{tpu_custom_call.1} parent=1 // pred_region
      %s5033 = ssub.s32 512, 512
      %5034 = vsyncadd [#allocation3], %s5033
      %s5035 = sshll.u32 [#allocation2], 4
      %s5036 = int_to_ptr.vmem [resolvable:$true] %s5035
      %5041 = dma.vmem_to_hbm [thread:$0]  %s5036, 512, %s4, [#allocation3], 128, 128, 8
    $region21: #{tpu_custom_call.1} parent=1 // pred_fallthru
      _
    // Predicated region
    $region22: #{tpu_custom_call.1} parent=1 // pred_check
      _
    $region23: #{tpu_custom_call.1} parent=1 // pred_check_branch
      %5043 = sbr.rel (0) target = $region25
    $region24: #{tpu_custom_call.1} parent=1 // pred_region
      %5044 = dma.done [#allocation3], 512
    $region25: #{tpu_custom_call.1} parent=1 // pred_fallthru
      _
    %5045 = vsyncpa [#allocation3], 1

</llo_original>
